<compile_context>
chip_gen: v7x
topology: tpu7x:2x2x1
jax: 0.10.0
libtpu: 0.0.40
codegen_flags: <defaults>
</compile_context>

<pallas_src>
import functools

import jax
import jax.numpy as jnp
from jax.experimental import pallas as pl
from jax.experimental.pallas import tpu as pltpu


def _round_up(v, m):
    return ((v + m - 1) // m) * m


def _conv3x3_s2_kernel(xq_ref, w_ref, b_ref, o_ref, *, H_out, W_out, Cin):
    """One grid step = 3x3/stride-2 conv of N_blk frames (space-to-depth form).

    xq_ref: (N_blk, H_out+1, W_out+1, 4*Cin)  space-to-depth padded frames
    w_ref : (9*Cin, Cout_p)                   restacked weights (VMEM resident)
    b_ref : (1, Cout_p)                       f32 bias
    o_ref : (N_blk*H_out*W_out, Cout_p)       output slab
    """
    C = Cin
    M = o_ref.shape[0]

    def dot(patch, w):
        # (N_blk, H_out, W_out, K) x (K, Cout_p) -> (M, Cout_p), f32 accumulate.
        return jnp.dot(patch.reshape(M, patch.shape[-1]), w,
                       preferred_element_type=jnp.float32)

    # The 5 dots form one summed dataflow chain so Mosaic can keep the partials
    # in the MXU result buffer (MRB on v7x) instead of popping to VMEM.
    # cell (i, j): taps (0,0),(0,1),(1,0),(1,1) -- all 4*Cin channels at once.
    acc = dot(xq_ref[:, 0:H_out, 0:W_out, :], w_ref[0:4 * C])
    # cell (i, j+1): tap (0,2) on ee-channels, tap (1,2) on oe-channels.
    q01 = xq_ref[:, 0:H_out, 1:W_out + 1, :]
    acc += dot(q01[..., 0:C], w_ref[4 * C:5 * C])
    acc += dot(q01[..., 2 * C:3 * C], w_ref[5 * C:6 * C])
    # cell (i+1, j): taps (2,0),(2,1) on the contiguous ee+eo channel range.
    acc += dot(xq_ref[:, 1:H_out + 1, 0:W_out, 0:2 * C], w_ref[6 * C:8 * C])
    # cell (i+1, j+1): tap (2,2) on ee-channels.
    acc += dot(xq_ref[:, 1:H_out + 1, 1:W_out + 1, 0:C], w_ref[8 * C:9 * C])

    o_ref[...] = (acc + b_ref[...]).astype(o_ref.dtype)


def _conv2d_3x3_s2(x, weight, bias):
    """Per-frame `F.pad(x, (0,1,0,1)); Conv2d(k=3, s=2, p=0)` of the module.

    x: (B, Cin, T, H, W); weight: (Cout, Cin, 3, 3); bias: (Cout,).
    Returns (B, Cout, T, H_out, W_out).
    """
    B, Cin, T, H, W = x.shape
    Cout = weight.shape[0]
    Hp, Wp = H + 1, W + 1                       # the module's (0,1,0,1) zero pad
    H_out = (Hp - 3) // 2 + 1
    W_out = (Wp - 3) // 2 + 1
    N = B * T
    HWo = H_out * W_out
    Hq, Wq = H_out + 1, W_out + 1               # == ceil(Hp/2), ceil(Wp/2)

    # ---- layout plumbing: ONE pad + ONE transpose (single extra HBM pass) ----
    # Pad H,W to 2Hq,2Wq in native NCDHW (the extra row/col beyond the module's
    # pad is never read by any conv tap), then split even/odd and go
    # channel-last in one transpose.
    xp = jnp.pad(x, ((0, 0), (0, 0), (0, 0), (0, 2 * Hq - H), (0, 2 * Wq - W)))
    xq = xp.reshape(B, Cin, T, Hq, 2, Wq, 2)
    xq = jnp.transpose(xq, (0, 2, 3, 5, 4, 6, 1)).reshape(N, Hq, Wq, 4 * Cin)

    # Restack weights to match the kernel's 5 matmul groups.
    wt = jnp.transpose(weight, (2, 3, 1, 0))    # (KH, KW, Cin, Cout)
    w_stack = jnp.concatenate([
        wt[0, 0], wt[0, 1], wt[1, 0], wt[1, 1],   # cell (i,   j)  : ee,eo,oe,oo
        wt[0, 2],                                 # cell (i,   j+1): ee
        wt[1, 2],                                 # cell (i,   j+1): oe
        wt[2, 0], wt[2, 1],                       # cell (i+1, j)  : ee,eo
        wt[2, 2],                                 # cell (i+1, j+1): ee
    ], axis=0)                                    # (9*Cin, Cout)

    # Lane handling for Cout: pad to a multiple of 128 only when the inflation
    # is modest (lane-dense unmasked stores); tiny Cout stays unpadded so HBM
    # writeback isn't inflated 128/Cout x.
    if Cout % 128 == 0:
        Cout_p = Cout
    elif Cout >= 96:
        Cout_p = _round_up(Cout, 128)
    else:
        Cout_p = Cout
    if Cout_p != Cout:
        w_stack = jnp.pad(w_stack, ((0, 0), (0, Cout_p - Cout)))
        b_p = jnp.pad(bias, (0, Cout_p - Cout))
    else:
        b_p = bias
    w_stack = w_stack.astype(x.dtype)
    b2 = b_p.reshape(1, Cout_p).astype(jnp.float32)

    # ---- VMEM budget (per generation) and frames-per-block selection ----
    itemsize = jnp.dtype(x.dtype).itemsize
    sub_mult = 8 if itemsize == 4 else (16 if itemsize == 2 else 32)
    lane_in = _round_up(4 * Cin, 128)
    lane_out = _round_up(Cout_p, 128)
    in_frame = Hq * _round_up(Wq, sub_mult) * lane_in * itemsize
    out_frame = HWo * lane_out * itemsize
    acc_frame = HWo * lane_out * 4              # f32 accumulator / temporaries
    w_bytes = _round_up(9 * Cin, sub_mult) * lane_out * itemsize
    b_bytes = 8 * 128 * 4

    try:
        vmem_cap = int(pltpu.get_tpu_info().vmem_capacity_bytes)
    except Exception:
        vmem_cap = 64 << 20                     # conservative (v7x per-core)
    vmem_cap = min(max(vmem_cap, 32 << 20), 128 << 20)
    vmem_limit = min((vmem_cap * 3) // 4, 100 << 20)
    # Budget the weight slab as if double-buffered (worst case if Buffered(1)
    # is unavailable), plus slack for pipeline bookkeeping.
    blk_budget = max(vmem_limit - 2 * (w_bytes + b_bytes) - (4 << 20), 4 << 20)

    def fits(d):
        return 2 * d * in_frame + 2 * d * out_frame + d * acc_frame <= blk_budget

    # Largest frames-per-block such that (a) the output block's row count stays
    # sublane-aligned, (b) rows <= 4096 (past that the op is HBM-roofline bound
    # and bigger blocks only cost VMEM), (c) everything fits the budget,
    # (d) the grid has >= 2 steps whenever N >= 2 (v7x megacore + pipelining).
    d_cap = N if N == 1 else N - 1
    N_blk = 1
    for d in range(1, d_cap + 1):
        rows = d * HWo
        if rows > 4096 and d > 1:
            break
        if rows % sub_mult != 0:
            continue
        if fits(d):
            N_blk = d
    # Rebalance: keep the same number of grid steps but make blocks even-sized
    # (avoids a tiny tail block doing almost no work).
    steps = -(-N // N_blk)
    d_bal = -(-N // steps)
    if (d_bal != N_blk and (d_bal * HWo) % sub_mult == 0 and fits(d_bal)
            and (steps == 1 or d_bal < N)):
        N_blk = d_bal
    if (N_blk * HWo) % sub_mult != 0 and N_blk != N:
        N_blk = N   # single full block (block dims == array dims, always legal)
    # TODO(synk): frames so large that even N_blk=1 overflows the budget would
    # additionally need a halo-tiled H_out grid axis (overlapping row blocks);
    # not needed at these shapes.
    # TODO(synk): when 4*Cin < 128 the lane dim under-fills the MXU/vregs;
    # folding W_out cells into the lane dim would fix that for tiny channels.

    M_blk = N_blk * HWo
    grid = (-(-N // N_blk),)
    kern = functools.partial(_conv3x3_s2_kernel,
                             H_out=H_out, W_out=W_out, Cin=Cin)

    def call(single_buffer_consts):
        def const_spec(shape):
            # Constant index_map blocks (weights / bias): single-buffer them so
            # they don't waste VMEM on a second buffer that never changes.
            if single_buffer_consts and hasattr(pl, "Buffered"):
                try:
                    return pl.BlockSpec(shape, lambda n: (0,) * len(shape),
                                        pipeline_mode=pl.Buffered(1))
                except TypeError:
                    pass
            return pl.BlockSpec(shape, lambda n: (0,) * len(shape))

        return pl.pallas_call(
            kern,
            out_shape=jax.ShapeDtypeStruct((N * HWo, Cout_p), x.dtype),
            grid=grid,
            in_specs=[
                pl.BlockSpec((N_blk, Hq, Wq, 4 * Cin), lambda n: (n, 0, 0, 0)),
                const_spec((9 * Cin, Cout_p)),
                const_spec((1, Cout_p)),
            ],
            out_specs=pl.BlockSpec((M_blk, Cout_p), lambda n: (n, 0)),
            compiler_params=pltpu.CompilerParams(
                dimension_semantics=("parallel",),
                vmem_limit_bytes=int(vmem_limit)),
        )(xq, w_stack, b2)

    try:
        out = call(True)
    except Exception:       # pipeline_mode/Buffered(1) unsupported -> plain spec
        out = call(False)

    if Cout_p != Cout:
        out = out[:, :Cout]
    out = out.reshape(B, T, H_out, W_out, Cout)
    return jnp.transpose(out, (0, 4, 1, 2, 3))   # (B, Cout, T, H_out, W_out)


def downsample3d(x, weight=None, bias=None, *, with_conv=True,
                 compress_time=False):
    """Forward pass of DownSample3D.  x: (B, C, T, H, W)."""
    B, C, T, H, W = x.shape

    if compress_time:
        # Frame 0 kept as-is; remaining frames avg_pool1d(k=2, s=2) along T.
        # TODO(synk): this temporal pooling (and the with_conv=False spatial
        # pooling below) is trivial memory-bound glue left in plain jnp.
        x_first = x[:, :, :1]
        x_rest = x[:, :, 1:]
        if x_rest.shape[2] > 0:
            Lp = (x_rest.shape[2] // 2) * 2
            pooled = 0.5 * (x_rest[:, :, 0:Lp:2] + x_rest[:, :, 1:Lp:2])
            x = jnp.concatenate([x_first, pooled], axis=2)
        else:
            x = x_first
        T = x.shape[2]

    if not with_conv:
        Hc, Wc = (H // 2) * 2, (W // 2) * 2
        xc = x[..., :Hc, :Wc].reshape(B, C, T, Hc // 2, 2, Wc // 2, 2)
        return xc.mean(axis=(4, 6))

    return _conv2d_3x3_s2(x, weight, bias)


def _ref_forward(x, weight, bias, *, with_conv, compress_time):
    """Pure-JAX (XLA) reference of DownSample3D.forward."""
    B, C, T, H, W = x.shape
    if compress_time:
        xf, xr = x[:, :, :1], x[:, :, 1:]
        if xr.shape[2] > 0:
            Lp = (xr.shape[2] // 2) * 2
            xr = xr[:, :, :Lp].reshape(B, C, Lp // 2, 2, H, W).mean(axis=3)
            x = jnp.concatenate([xf, xr], axis=2)
        else:
            x = xf
        T = x.shape[2]
    xt = jnp.transpose(x, (0, 2, 1, 3, 4)).reshape(B * T, C, H, W)
    if with_conv:
        xt = jnp.pad(xt, ((0, 0), (0, 0), (0, 1), (0, 1)))
        y = jax.lax.conv_general_dilated(
            xt, weight, window_strides=(2, 2), padding="VALID",
            dimension_numbers=("NCHW", "OIHW", "NCHW"))
        y = y + bias[None, :, None, None]
    else:
        Hc, Wc = (H // 2) * 2, (W // 2) * 2
        y = xt[:, :, :Hc, :Wc].reshape(B * T, C, Hc // 2, 2, Wc // 2, 2)
        y = y.mean(axis=(3, 5))
    Co, Ho, Wo = y.shape[1], y.shape[2], y.shape[3]
    return jnp.transpose(y.reshape(B, T, Co, Ho, Wo), (0, 2, 1, 3, 4))


if __name__ == "__main__":
    key = jax.random.PRNGKey(0)
    kx, kw, kb, kw2, kb2 = jax.random.split(key, 5)

    B, Cin, Cout, T, H, W = 2, 4, 8, 8, 16, 16
    x = jax.random.normal(kx, (B, Cin, T, H, W), jnp.float32)

    # Conv2d-style init (uniform +- 1/sqrt(fan_in)).
    bound = 1.0 / ((Cin * 3 * 3) ** 0.5)
    weight = jax.random.uniform(kw, (Cout, Cin, 3, 3), jnp.float32, -bound, bound)
    bias = jax.random.uniform(kb, (Cout,), jnp.float32, -bound, bound)

    # Main path: with_conv=True, compress_time=True.
    out = jax.block_until_ready(
        downsample3d(x, weight, bias, with_conv=True, compress_time=True))
    ref = _ref_forward(x, weight, bias, with_conv=True, compress_time=True)
    T_out = 1 + (T - 1) // 2
    assert out.shape == ref.shape == (B, Cout, T_out, H // 2, W // 2), out.shape
    err = float(jnp.abs(out - ref).max())
    assert jnp.allclose(out, ref, atol=1e-4, rtol=1e-4), err

    # with_conv=True, compress_time=False, out_channels == in_channels.
    w_sq = jax.random.uniform(kw2, (Cin, Cin, 3, 3), jnp.float32, -bound, bound)
    b_sq = jax.random.uniform(kb2, (Cin,), jnp.float32, -bound, bound)
    out2 = jax.block_until_ready(
        downsample3d(x, w_sq, b_sq, with_conv=True, compress_time=False))
    ref2 = _ref_forward(x, w_sq, b_sq, with_conv=True, compress_time=False)
    assert out2.shape == ref2.shape == (B, Cin, T, H // 2, W // 2), out2.shape
    err2 = float(jnp.abs(out2 - ref2).max())
    assert jnp.allclose(out2, ref2, atol=1e-4, rtol=1e-4), err2

    # with_conv=False (pooling-only) path.
    out3 = jax.block_until_ready(
        downsample3d(x, with_conv=False, compress_time=True))
    ref3 = _ref_forward(x, None, None, with_conv=False, compress_time=True)
    assert jnp.allclose(out3, ref3, atol=1e-5, rtol=1e-5)

    print("KERNEL_OK")
</pallas_src>

<mosaic_0001>
module attributes {stable_mosaic.version = 11 : i64} {
  func.func @_conv3x3_s2_kernel(%arg0: i32, %arg1: memref<4x9x9x16xf32, #tpu.memory_space<vmem>>, %arg2: memref<36x8xf32, #tpu.memory_space<vmem>>, %arg3: memref<1x8xf32, #tpu.memory_space<vmem>>, %arg4: memref<256x8xf32, #tpu.memory_space<vmem>>) attributes {dimension_semantics = [#tpu.dimension_semantics<parallel>], iteration_bounds = array<i64: 2>, scalar_prefetch = 0 : i64, scratch_operands = 0 : i64, tpu.core_type = #tpu.core_type<tc>, window_params = [{transform_indices = @transform_0, window_bounds = array<i64: 4, 9, 9, 16>}, {pipeline_mode = #tpu.pipeline_mode<synchronous>, transform_indices = @transform_1, window_bounds = array<i64: 36, 8>}, {pipeline_mode = #tpu.pipeline_mode<synchronous>, transform_indices = @transform_2, window_bounds = array<i64: 1, 8>}, {transform_indices = @transform_3, window_bounds = array<i64: 256, 8>}]} {
    %c0 = arith.constant 0 : index
    %c0_0 = arith.constant 0 : index
    %c0_1 = arith.constant 0 : index
    %c0_2 = arith.constant 0 : index
    %0 = vector.load %arg1[%c0, %c0_0, %c0_1, %c0_2] : memref<4x9x9x16xf32, #tpu.memory_space<vmem>>, vector<4x8x8x16xf32>
    %c0_3 = arith.constant 0 : index
    %c0_4 = arith.constant 0 : index
    %1 = vector.load %arg2[%c0_3, %c0_4] : memref<36x8xf32, #tpu.memory_space<vmem>>, vector<16x8xf32>
    %2 = vector.shape_cast %0 : vector<4x8x8x16xf32> to vector<256x16xf32>
    %cst = arith.constant dense<0.000000e+00> : vector<256x8xf32>
    %3 = tpu.matmul %2, %1, %cst {dimension_numbers = #tpu.dot_dimension_numbers<[1], [0], [0], [1], [0, 0, 1, 1], [], []>} : vector<256x16xf32>, vector<16x8xf32>, vector<256x8xf32> -> vector<256x8xf32>
    %c0_5 = arith.constant 0 : index
    %c0_6 = arith.constant 0 : index
    %c1 = arith.constant 1 : index
    %c0_7 = arith.constant 0 : index
    %4 = vector.load %arg1[%c0_5, %c0_6, %c1, %c0_7] : memref<4x9x9x16xf32, #tpu.memory_space<vmem>>, vector<4x8x8x16xf32>
    %5 = vector.extract_strided_slice %4 {offsets = [0, 0, 0, 0], sizes = [4, 8, 8, 4], strides = [1, 1, 1, 1]} : vector<4x8x8x16xf32> to vector<4x8x8x4xf32>
    %c16 = arith.constant 16 : index
    %c0_8 = arith.constant 0 : index
    %6 = vector.load %arg2[%c16, %c0_8] : memref<36x8xf32, #tpu.memory_space<vmem>>, vector<4x8xf32>
    %7 = vector.shape_cast %5 : vector<4x8x8x4xf32> to vector<256x4xf32>
    %cst_9 = arith.constant dense<0.000000e+00> : vector<256x8xf32>
    %8 = tpu.matmul %7, %6, %cst_9 {dimension_numbers = #tpu.dot_dimension_numbers<[1], [0], [0], [1], [0, 0, 1, 1], [], []>} : vector<256x4xf32>, vector<4x8xf32>, vector<256x8xf32> -> vector<256x8xf32>
    %9 = arith.addf %3, %8 : vector<256x8xf32>
    %10 = vector.extract_strided_slice %4 {offsets = [0, 0, 0, 8], sizes = [4, 8, 8, 4], strides = [1, 1, 1, 1]} : vector<4x8x8x16xf32> to vector<4x8x8x4xf32>
    %c20 = arith.constant 20 : index
    %c0_10 = arith.constant 0 : index
    %11 = vector.load %arg2[%c20, %c0_10] : memref<36x8xf32, #tpu.memory_space<vmem>>, vector<4x8xf32>
    %12 = vector.shape_cast %10 : vector<4x8x8x4xf32> to vector<256x4xf32>
    %cst_11 = arith.constant dense<0.000000e+00> : vector<256x8xf32>
    %13 = tpu.matmul %12, %11, %cst_11 {dimension_numbers = #tpu.dot_dimension_numbers<[1], [0], [0], [1], [0, 0, 1, 1], [], []>} : vector<256x4xf32>, vector<4x8xf32>, vector<256x8xf32> -> vector<256x8xf32>
    %14 = arith.addf %9, %13 : vector<256x8xf32>
    %c0_12 = arith.constant 0 : index
    %c1_13 = arith.constant 1 : index
    %c0_14 = arith.constant 0 : index
    %c0_15 = arith.constant 0 : index
    %15 = vector.load %arg1[%c0_12, %c1_13, %c0_14, %c0_15] : memref<4x9x9x16xf32, #tpu.memory_space<vmem>>, vector<4x8x8x8xf32>
    %c24 = arith.constant 24 : index
    %c0_16 = arith.constant 0 : index
    %16 = vector.load %arg2[%c24, %c0_16] : memref<36x8xf32, #tpu.memory_space<vmem>>, vector<8x8xf32>
    %17 = vector.shape_cast %15 : vector<4x8x8x8xf32> to vector<256x8xf32>
    %cst_17 = arith.constant dense<0.000000e+00> : vector<256x8xf32>
    %18 = tpu.matmul %17, %16, %cst_17 {dimension_numbers = #tpu.dot_dimension_numbers<[1], [0], [0], [1], [0, 0, 1, 1], [], []>} : vector<256x8xf32>, vector<8x8xf32>, vector<256x8xf32> -> vector<256x8xf32>
    %19 = arith.addf %14, %18 : vector<256x8xf32>
    %c0_18 = arith.constant 0 : index
    %c1_19 = arith.constant 1 : index
    %c1_20 = arith.constant 1 : index
    %c0_21 = arith.constant 0 : index
    %20 = vector.load %arg1[%c0_18, %c1_19, %c1_20, %c0_21] : memref<4x9x9x16xf32, #tpu.memory_space<vmem>>, vector<4x8x8x4xf32>
    %c32 = arith.constant 32 : index
    %c0_22 = arith.constant 0 : index
    %21 = vector.load %arg2[%c32, %c0_22] : memref<36x8xf32, #tpu.memory_space<vmem>>, vector<4x8xf32>
    %22 = vector.shape_cast %20 : vector<4x8x8x4xf32> to vector<256x4xf32>
    %cst_23 = arith.constant dense<0.000000e+00> : vector<256x8xf32>
    %23 = tpu.matmul %22, %21, %cst_23 {dimension_numbers = #tpu.dot_dimension_numbers<[1], [0], [0], [1], [0, 0, 1, 1], [], []>} : vector<256x4xf32>, vector<4x8xf32>, vector<256x8xf32> -> vector<256x8xf32>
    %24 = arith.addf %19, %23 : vector<256x8xf32>
    %c0_24 = arith.constant 0 : index
    %c0_25 = arith.constant 0 : index
    %25 = vector.load %arg3[%c0_24, %c0_25] : memref<1x8xf32, #tpu.memory_space<vmem>>, vector<1x8xf32>
    %26 = vector.broadcast %25 : vector<1x8xf32> to vector<256x8xf32>
    %27 = arith.addf %24, %26 : vector<256x8xf32>
    %c0_26 = arith.constant 0 : index
    %c0_27 = arith.constant 0 : index
    %28 = vector.load %arg4[%c0_26, %c0_27] : memref<256x8xf32, #tpu.memory_space<vmem>>, vector<256x8xf32>
    tpu.vector_store %arg4[%c0_26, %c0_27], %27 {strides = array<i32>} : memref<256x8xf32, #tpu.memory_space<vmem>>, vector<256x8xf32>,
    return
  }
  func.func @transform_0(%arg0: i32) -> (i32, i32, i32, i32) {
    %c0_i32 = arith.constant 0 : i32
    %c0_i32_0 = arith.constant 0 : i32
    %c0_i32_1 = arith.constant 0 : i32
    %c0_i32_2 = arith.constant 0 : i32
    return %arg0, %c0_i32, %c0_i32_0, %c0_i32_1 : i32, i32, i32, i32
  }
  func.func @transform_1(%arg0: i32) -> (i32, i32) {
    %c0_i32 = arith.constant 0 : i32
    %c0_i32_0 = arith.constant 0 : i32
    %c0_i32_1 = arith.constant 0 : i32
    return %c0_i32, %c0_i32_0 : i32, i32
  }
  func.func @transform_2(%arg0: i32) -> (i32, i32) {
    %c0_i32 = arith.constant 0 : i32
    %c0_i32_0 = arith.constant 0 : i32
    %c0_i32_1 = arith.constant 0 : i32
    return %c0_i32, %c0_i32_0 : i32, i32
  }
  func.func @transform_3(%arg0: i32) -> (i32, i32) {
    %c0_i32 = arith.constant 0 : i32
    %c0_i32_0 = arith.constant 0 : i32
    return %arg0, %c0_i32 : i32, i32
  }
}

module attributes {stable_mosaic.version = 11 : i64} {
  func.func @_conv3x3_s2_kernel(%arg0: i32, %arg1: memref<4x9x9x16xf32, #tpu.memory_space<vmem>>, %arg2: memref<36x8xf32, #tpu.memory_space<vmem>>, %arg3: memref<1x8xf32, #tpu.memory_space<vmem>>, %arg4: memref<256x8xf32, #tpu.memory_space<vmem>>) attributes {dimension_semantics = [#tpu.dimension_semantics<parallel>], iteration_bounds = array<i64: 2>, scalar_prefetch = 0 : i64, scratch_operands = 0 : i64, tpu.core_type = #tpu.core_type<tc>, window_params = [{transform_indices = @transform_0, window_bounds = array<i64: 4, 9, 9, 16>}, {pipeline_mode = #tpu.pipeline_mode<synchronous>, transform_indices = @transform_1, window_bounds = array<i64: 36, 8>}, {pipeline_mode = #tpu.pipeline_mode<synchronous>, transform_indices = @transform_2, window_bounds = array<i64: 1, 8>}, {transform_indices = @transform_3, window_bounds = array<i64: 256, 8>}]} {
    %c0 = arith.constant 0 : index
    %c0_0 = arith.constant 0 : index
    %c0_1 = arith.constant 0 : index
    %c0_2 = arith.constant 0 : index
    %0 = vector.load %arg1[%c0, %c0_0, %c0_1, %c0_2] : memref<4x9x9x16xf32, #tpu.memory_space<vmem>>, vector<4x8x8x16xf32>
    %c0_3 = arith.constant 0 : index
    %c0_4 = arith.constant 0 : index
    %1 = vector.load %arg2[%c0_3, %c0_4] : memref<36x8xf32, #tpu.memory_space<vmem>>, vector<16x8xf32>
    %2 = vector.shape_cast %0 : vector<4x8x8x16xf32> to vector<256x16xf32>
    %cst = arith.constant dense<0.000000e+00> : vector<256x8xf32>
    %3 = tpu.matmul %2, %1, %cst {dimension_numbers = #tpu.dot_dimension_numbers<[1], [0], [0], [1], [0, 0, 1, 1], [], []>} : vector<256x16xf32>, vector<16x8xf32>, vector<256x8xf32> -> vector<256x8xf32>
    %c0_5 = arith.constant 0 : index
    %c0_6 = arith.constant 0 : index
    %c1 = arith.constant 1 : index
    %c0_7 = arith.constant 0 : index
    %4 = vector.load %arg1[%c0_5, %c0_6, %c1, %c0_7] : memref<4x9x9x16xf32, #tpu.memory_space<vmem>>, vector<4x8x8x16xf32>
    %5 = vector.extract_strided_slice %4 {offsets = [0, 0, 0, 0], sizes = [4, 8, 8, 4], strides = [1, 1, 1, 1]} : vector<4x8x8x16xf32> to vector<4x8x8x4xf32>
    %c16 = arith.constant 16 : index
    %c0_8 = arith.constant 0 : index
    %6 = vector.load %arg2[%c16, %c0_8] : memref<36x8xf32, #tpu.memory_space<vmem>>, vector<4x8xf32>
    %7 = vector.shape_cast %5 : vector<4x8x8x4xf32> to vector<256x4xf32>
    %cst_9 = arith.constant dense<0.000000e+00> : vector<256x8xf32>
    %8 = tpu.matmul %7, %6, %cst_9 {dimension_numbers = #tpu.dot_dimension_numbers<[1], [0], [0], [1], [0, 0, 1, 1], [], []>} : vector<256x4xf32>, vector<4x8xf32>, vector<256x8xf32> -> vector<256x8xf32>
    %9 = arith.addf %3, %8 : vector<256x8xf32>
    %10 = vector.extract_strided_slice %4 {offsets = [0, 0, 0, 8], sizes = [4, 8, 8, 4], strides = [1, 1, 1, 1]} : vector<4x8x8x16xf32> to vector<4x8x8x4xf32>
    %c20 = arith.constant 20 : index
    %c0_10 = arith.constant 0 : index
    %11 = vector.load %arg2[%c20, %c0_10] : memref<36x8xf32, #tpu.memory_space<vmem>>, vector<4x8xf32>
    %12 = vector.shape_cast %10 : vector<4x8x8x4xf32> to vector<256x4xf32>
    %cst_11 = arith.constant dense<0.000000e+00> : vector<256x8xf32>
    %13 = tpu.matmul %12, %11, %cst_11 {dimension_numbers = #tpu.dot_dimension_numbers<[1], [0], [0], [1], [0, 0, 1, 1], [], []>} : vector<256x4xf32>, vector<4x8xf32>, vector<256x8xf32> -> vector<256x8xf32>
    %14 = arith.addf %9, %13 : vector<256x8xf32>
    %c0_12 = arith.constant 0 : index
    %c1_13 = arith.constant 1 : index
    %c0_14 = arith.constant 0 : index
    %c0_15 = arith.constant 0 : index
    %15 = vector.load %arg1[%c0_12, %c1_13, %c0_14, %c0_15] : memref<4x9x9x16xf32, #tpu.memory_space<vmem>>, vector<4x8x8x8xf32>
    %c24 = arith.constant 24 : index
    %c0_16 = arith.constant 0 : index
    %16 = vector.load %arg2[%c24, %c0_16] : memref<36x8xf32, #tpu.memory_space<vmem>>, vector<8x8xf32>
    %17 = vector.shape_cast %15 : vector<4x8x8x8xf32> to vector<256x8xf32>
    %cst_17 = arith.constant dense<0.000000e+00> : vector<256x8xf32>
    %18 = tpu.matmul %17, %16, %cst_17 {dimension_numbers = #tpu.dot_dimension_numbers<[1], [0], [0], [1], [0, 0, 1, 1], [], []>} : vector<256x8xf32>, vector<8x8xf32>, vector<256x8xf32> -> vector<256x8xf32>
    %19 = arith.addf %14, %18 : vector<256x8xf32>
    %c0_18 = arith.constant 0 : index
    %c1_19 = arith.constant 1 : index
    %c1_20 = arith.constant 1 : index
    %c0_21 = arith.constant 0 : index
    %20 = vector.load %arg1[%c0_18, %c1_19, %c1_20, %c0_21] : memref<4x9x9x16xf32, #tpu.memory_space<vmem>>, vector<4x8x8x4xf32>
    %c32 = arith.constant 32 : index
    %c0_22 = arith.constant 0 : index
    %21 = vector.load %arg2[%c32, %c0_22] : memref<36x8xf32, #tpu.memory_space<vmem>>, vector<4x8xf32>
    %22 = vector.shape_cast %20 : vector<4x8x8x4xf32> to vector<256x4xf32>
    %cst_23 = arith.constant dense<0.000000e+00> : vector<256x8xf32>
    %23 = tpu.matmul %22, %21, %cst_23 {dimension_numbers = #tpu.dot_dimension_numbers<[1], [0], [0], [1], [0, 0, 1, 1], [], []>} : vector<256x4xf32>, vector<4x8xf32>, vector<256x8xf32> -> vector<256x8xf32>
    %24 = arith.addf %19, %23 : vector<256x8xf32>
    %c0_24 = arith.constant 0 : index
    %c0_25 = arith.constant 0 : index
    %25 = vector.load %arg3[%c0_24, %c0_25] : memref<1x8xf32, #tpu.memory_space<vmem>>, vector<1x8xf32>
    %26 = vector.broadcast %25 : vector<1x8xf32> to vector<256x8xf32>
    %27 = arith.addf %24, %26 : vector<256x8xf32>
    %c0_26 = arith.constant 0 : index
    %c0_27 = arith.constant 0 : index
    %28 = vector.load %arg4[%c0_26, %c0_27] : memref<256x8xf32, #tpu.memory_space<vmem>>, vector<256x8xf32>
    tpu.vector_store %arg4[%c0_26, %c0_27], %27 {strides = array<i32>} : memref<256x8xf32, #tpu.memory_space<vmem>>, vector<256x8xf32>,
    return
  }
  func.func @transform_0(%arg0: i32) -> (i32, i32, i32, i32) {
    %c0_i32 = arith.constant 0 : i32
    %c0_i32_0 = arith.constant 0 : i32
    %c0_i32_1 = arith.constant 0 : i32
    %c0_i32_2 = arith.constant 0 : i32
    return %arg0, %c0_i32, %c0_i32_0, %c0_i32_1 : i32, i32, i32, i32
  }
  func.func @transform_1(%arg0: i32) -> (i32, i32) {
    %c0_i32 = arith.constant 0 : i32
    %c0_i32_0 = arith.constant 0 : i32
    %c0_i32_1 = arith.constant 0 : i32
    return %c0_i32, %c0_i32_0 : i32, i32
  }
  func.func @transform_2(%arg0: i32) -> (i32, i32) {
    %c0_i32 = arith.constant 0 : i32
    %c0_i32_0 = arith.constant 0 : i32
    %c0_i32_1 = arith.constant 0 : i32
    return %c0_i32, %c0_i32_0 : i32, i32
  }
  func.func @transform_3(%arg0: i32) -> (i32, i32) {
    %c0_i32 = arith.constant 0 : i32
    %c0_i32_0 = arith.constant 0 : i32
    return %arg0, %c0_i32 : i32, i32
  }
}

</mosaic_0001>

<llo_original>
// kernel: tpu_custom_call.1
$region0: #{tpu_custom_call.1}
  #allocation0 [shape = 'u32[]', space=smem, size = 0x4, offset = 0x4, fixed_abs, tag = 'smem constant byte address 0x4 - core index']
  #allocation1 [shape = 'u32[144,128]{1,0:T(1,128)}', space=vmem, size = 0x12000, scoped, tag = 'internal scratch']
  %s0 = inlined_call_operand.vmem [shape: f32[8,9,9,16], index: 0, kind: input, shape index: {}]
  %s1 = inlined_call_operand.vmem [shape: f32[36,8], index: 1, kind: input, shape index: {}]
  %s2 = inlined_call_operand.vmem [shape: f32[1,8], index: 2, kind: input, shape index: {}]
  %s3 = inlined_call_operand.vmem [shape: f32[512,8], index: 3, kind: output, shape index: {}]
  %s4 = sld [smem:[#allocation0]]
  $region45: #{tpu_custom_call.1} parent=0
    _
  %s6 = ssub.s32 1, %s4
  %s7 = scalar_select 0, %s6, %s4
  loop: start=0, step=1, limit=4
  $region2: #{tpu_custom_call.1} parent=0 // loop_pre_header
    _
  $region3: #{tpu_custom_call.1} parent=0 // loop_header
    %s9 = sphi 0, %s13
    %p10 = scmp.ge.s32.totalorder %s9, 4
    %s19 = sphi 0, %s21
    %s22 = sphi 0, %s19
    %s23 = sphi 0, %s22
    %s39 = sphi 0, %s23
    %s43 = sphi 0, %s43
    %s45 = sphi 0, %s43
    %s46 = sphi 0, %s45
    %s60 = sphi 0, %s46
    %s64 = sphi 0, %s64
    %s66 = sphi 0, %s64
    %s67 = sphi 0, %s66
    %s81 = sphi 0, %s67
    %s87 = sphi 0, %s89
    %s90 = sphi 0, %s87
    %s91 = sphi 0, %s90
    %s107 = sphi 0, %s91
  $region4: #{tpu_custom_call.1} parent=0 // loop_header_branch
    %12 = sbr.rel (%p10) target = $region8
  $region5: #{tpu_custom_call.1} parent=0 // loop_body
    %s14 = ssub.s32 %s9, 1
    %s15 = ssub.s32 %s9, 2
    %s16 = sadd.s32 %s9, 1
    %s17 = ssub.s32 %s9, %s16
    %p18 = scmp.eq.s32.totalorder %s17, 0
    %s20 = sadd.s32 %s19, 1
    %s21 = scalar_select %p18, %s19, %s20
    %p24 = pneg %p18
    %p25 = scmp.eq.s32.totalorder %s9, 1
    %p26 = por %p24, %p25
    %p27 = scmp.ne.s32.totalorder %s19, %s22
    %p28 = scmp.eq.s32.totalorder %s9, 0
    %p29 = por %p27, %p28
    %p30 = scmp.ne.s32.totalorder %s19, %s22
    %p31 = scmp.eq.s32.totalorder %s14, 1
    %p32 = por %p30, %p31
    %p33 = scmp.ne.s32.totalorder %s22, %s23
    %p34 = scmp.eq.s32.totalorder %s14, 0
    %p35 = por %p33, %p34
    %p36 = scmp.ne.s32.totalorder %s22, %s23
    %p37 = scmp.eq.s32.totalorder %s15, 1
    %p38 = por %p36, %p37
    %p40 = scmp.ne.s32.totalorder %s23, %s39
    %p41 = scmp.eq.s32.totalorder %s15, 0
    %p42 = por %p40, %p41
    %s44 = sadd.s32 %s43, 1
    %p47 = scmp.eq.s32.totalorder %s9, 1
    %p48 = scmp.ne.s32.totalorder %s43, %s45
    %p49 = scmp.eq.s32.totalorder %s9, 0
    %p50 = por %p48, %p49
    %p51 = scmp.ne.s32.totalorder %s43, %s45
    %p52 = scmp.eq.s32.totalorder %s14, 1
    %p53 = por %p51, %p52
    %p54 = scmp.ne.s32.totalorder %s45, %s46
    %p55 = scmp.eq.s32.totalorder %s14, 0
    %p56 = por %p54, %p55
    %p57 = scmp.ne.s32.totalorder %s45, %s46
    %p58 = scmp.eq.s32.totalorder %s15, 1
    %p59 = por %p57, %p58
    %p61 = scmp.ne.s32.totalorder %s46, %s60
    %p62 = scmp.eq.s32.totalorder %s15, 0
    %p63 = por %p61, %p62
    %s65 = sadd.s32 %s64, 1
    %p68 = scmp.eq.s32.totalorder %s9, 1
    %p69 = scmp.ne.s32.totalorder %s64, %s66
    %p70 = scmp.eq.s32.totalorder %s9, 0
    %p71 = por %p69, %p70
    %p72 = scmp.ne.s32.totalorder %s64, %s66
    %p73 = scmp.eq.s32.totalorder %s14, 1
    %p74 = por %p72, %p73
    %p75 = scmp.ne.s32.totalorder %s66, %s67
    %p76 = scmp.eq.s32.totalorder %s14, 0
    %p77 = por %p75, %p76
    %p78 = scmp.ne.s32.totalorder %s66, %s67
    %p79 = scmp.eq.s32.totalorder %s15, 1
    %p80 = por %p78, %p79
    %p82 = scmp.ne.s32.totalorder %s67, %s81
    %p83 = scmp.eq.s32.totalorder %s15, 0
    %p84 = por %p82, %p83
    %s85 = ssub.s32 %s9, %s16
    %p86 = scmp.eq.s32.totalorder %s85, 0
    %s88 = sadd.s32 %s87, 1
    %s89 = scalar_select %p86, %s87, %s88
    %p92 = pneg %p86
    %p93 = scmp.eq.s32.totalorder %s9, 1
    %p94 = por %p92, %p93
    %p95 = scmp.ne.s32.totalorder %s87, %s90
    %p96 = scmp.eq.s32.totalorder %s9, 0
    %p97 = por %p95, %p96
    %p98 = scmp.ne.s32.totalorder %s87, %s90
    %p99 = scmp.eq.s32.totalorder %s14, 1
    %p100 = por %p98, %p99
    %p101 = scmp.ne.s32.totalorder %s90, %s91
    %p102 = scmp.eq.s32.totalorder %s14, 0
    %p103 = por %p101, %p102
    %p104 = scmp.ne.s32.totalorder %s90, %s91
    %p105 = scmp.eq.s32.totalorder %s15, 1
    %p106 = por %p104, %p105
    %p108 = scmp.ne.s32.totalorder %s91, %s107
    %p109 = scmp.eq.s32.totalorder %s15, 0
    %p110 = por %p108, %p109
    %p111 = scmp.le.s32.totalorder 1, %s9
    %p112 = scmp.lt.s32.totalorder %s9, 3
    %p113 = pnand %p111, %p112
    %p114 = pneg %p113
    // Predicated region
    $region9: #{tpu_custom_call.1} parent=5 // pred_check
      _
    $region10: #{tpu_custom_call.1} parent=5 // pred_check_branch
      %116 = sbr.rel (%p113) target = $region12
    $region11: #{tpu_custom_call.1} parent=5 // pred_region
      %s117 = ssub.s32 %s9, 1
      // Predicated region
      $region13: #{tpu_custom_call.1} parent=11 // pred_check
        %p118 = pneg %p56
      $region14: #{tpu_custom_call.1} parent=11 // pred_check_branch
        %120 = sbr.rel (%p118) target = $region16
      $region15: #{tpu_custom_call.1} parent=11 // pred_region
        _
      $region16: #{tpu_custom_call.1} parent=11 // pred_fallthru
        _
      // Predicated region
      $region17: #{tpu_custom_call.1} parent=11 // pred_check
        %p121 = pneg %p77
      $region18: #{tpu_custom_call.1} parent=11 // pred_check_branch
        %123 = sbr.rel (%p121) target = $region20
      $region19: #{tpu_custom_call.1} parent=11 // pred_region
        _
      $region20: #{tpu_custom_call.1} parent=11 // pred_fallthru
        _
    $region12: #{tpu_custom_call.1} parent=5 // pred_fallthru
      _
    %p124 = scmp.lt.s32.totalorder %s9, 2
    // Predicated region
    $region21: #{tpu_custom_call.1} parent=5 // pred_check
      %p125 = pneg %p124
    $region22: #{tpu_custom_call.1} parent=5 // pred_check_branch
      %127 = sbr.rel (%p125) target = $region24
    $region23: #{tpu_custom_call.1} parent=5 // pred_region
      // Predicated region
      $region25: #{tpu_custom_call.1} parent=23 // pred_check
        %p128 = pneg %p29
      $region26: #{tpu_custom_call.1} parent=23 // pred_check_branch
        %130 = sbr.rel (%p128) target = $region28
      $region27: #{tpu_custom_call.1} parent=23 // pred_region
        %s131 = smul.u32 4, %s9
        %p132 = scmp.lt.s32.totalorder %s131, 7
        %s133 = scalar_select %p132, %s131, 7
        %s134 = smul.addr %s133, 18
        %s135 = smul.addr %s134, 8
        %s136 = scalar_lea.vmem %s0, %s135
        %s137 = smul.u32 4, %s9
      $region28: #{tpu_custom_call.1} parent=23 // pred_fallthru
        _
    $region24: #{tpu_custom_call.1} parent=5 // pred_fallthru
      _
    %p138 = scmp.le.s32.totalorder 1, %s9
    %p139 = scmp.lt.s32.totalorder %s9, 3
    %p140 = pnand %p138, %p139
    %p141 = pneg %p140
    // Predicated region
    $region29: #{tpu_custom_call.1} parent=5 // pred_check
      _
    $region30: #{tpu_custom_call.1} parent=5 // pred_check_branch
      %143 = sbr.rel (%p140) target = $region32
    $region31: #{tpu_custom_call.1} parent=5 // pred_region
      %s144 = ssub.s32 %s9, 1
      %s145 = smul.u32 4, %s14
      %p146 = scmp.lt.s32.totalorder %s145, 7
      %s147 = scalar_select %p146, %s145, 7
      %s148 = smul.addr %s147, 18
      %s149 = smul.addr %s148, 8
      %s150 = scalar_lea.vmem %s0, %s149
      %p151 = pneg %p35
      %p152 = pneg %p32
      %p153 = pneg %p56
      %p154 = pneg %p53
      %p155 = pneg %p77
      %p156 = pneg %p74
      %p157 = pneg %p103
      %p158 = pneg %p100
      %s159 = smul.u32 32, %s14
      %p160 = scmp.lt.s32.totalorder %s159, 63
      %s161 = scalar_select %p160, %s159, 63
      %s162 = smul.addr %s161, 8
      %s163 = scalar_lea.vmem %s3, %s162
      %s164 = smul.u32 4, %s14
      %p165 = scmp.lt.s32.totalorder %s164, 7
      %s166 = scalar_select %p165, %s164, 7
      %s167 = smul.addr %s166, 18
      %s168 = smul.addr %s167, 8
      %s169 = scalar_lea.vmem %s0, %s168
      %s170 = smul.u32 4, %s14
      %s171 = smul.u32 32, %s14
      %p172 = scmp.lt.s32.totalorder %s171, 63
      %s173 = scalar_select %p172, %s171, 63
      %s174 = smul.addr %s173, 8
      %s175 = scalar_lea.vmem %s3, %s174
      %s176 = smul.u32 32, %s14
      %v177 = vld [vmem:[%s169] sm:$0xff]
      %v178 = vld [vmem:[%s169 + $0x10] sm:$0xff]
      %v179 = vld [vmem:[%s169 + $0x20] sm:$0xff]
      %v180 = vld [vmem:[%s169 + $0x30] sm:$0xff]
      %v181 = vld [vmem:[%s169 + $0x40] sm:$0xff]
      %v182 = vld [vmem:[%s169 + $0x50] sm:$0xff]
      %v183 = vld [vmem:[%s169 + $0x60] sm:$0xff]
      %v184 = vld [vmem:[%s169 + $0x70] sm:$0xff]
      %v185 = vld [vmem:[%s169 + $0x90] sm:$0xff]
      %v186 = vld [vmem:[%s169 + $0xa0] sm:$0xff]
      %v187 = vld [vmem:[%s169 + $0xb0] sm:$0xff]
      %v188 = vld [vmem:[%s169 + $0xc0] sm:$0xff]
      %v189 = vld [vmem:[%s169 + $0xd0] sm:$0xff]
      %v190 = vld [vmem:[%s169 + $0xe0] sm:$0xff]
      %v191 = vld [vmem:[%s169 + $0xf0] sm:$0xff]
      %v192 = vld [vmem:[%s169 + $0x100] sm:$0xff]
      %v193 = vld [vmem:[%s169 + $0x120] sm:$0xff]
      %v194 = vld [vmem:[%s169 + $0x130] sm:$0xff]
      %v195 = vld [vmem:[%s169 + $0x140] sm:$0xff]
      %v196 = vld [vmem:[%s169 + $0x150] sm:$0xff]
      %v197 = vld [vmem:[%s169 + $0x160] sm:$0xff]
      %v198 = vld [vmem:[%s169 + $0x170] sm:$0xff]
      %v199 = vld [vmem:[%s169 + $0x180] sm:$0xff]
      %v200 = vld [vmem:[%s169 + $0x190] sm:$0xff]
      %v201 = vld [vmem:[%s169 + $0x1b0] sm:$0xff]
      %v202 = vld [vmem:[%s169 + $0x1c0] sm:$0xff]
      %v203 = vld [vmem:[%s169 + $0x1d0] sm:$0xff]
      %v204 = vld [vmem:[%s169 + $0x1e0] sm:$0xff]
      %v205 = vld [vmem:[%s169 + $0x1f0] sm:$0xff]
      %v206 = vld [vmem:[%s169 + $0x200] sm:$0xff]
      %v207 = vld [vmem:[%s169 + $0x210] sm:$0xff]
      %v208 = vld [vmem:[%s169 + $0x220] sm:$0xff]
      %v209 = vld [vmem:[%s1] sm:$0xff]
      %v210 = vld [vmem:[%s1 + $0x8] sm:$0xff]
      %v211 = vld [vmem:[%s169 + $0x1] sm:$0xff]
      %v212 = vld [vmem:[%s169 + $0x11] sm:$0xff]
      %v213 = vld [vmem:[%s169 + $0x21] sm:$0xff]
      %v214 = vld [vmem:[%s169 + $0x31] sm:$0xff]
      %v215 = vld [vmem:[%s169 + $0x41] sm:$0xff]
      %v216 = vld [vmem:[%s169 + $0x51] sm:$0xff]
      %v217 = vld [vmem:[%s169 + $0x61] sm:$0xff]
      %v218 = vld [vmem:[%s169 + $0x71] sm:$0xff]
      %v219 = vld [vmem:[%s169 + $0x91] sm:$0xff]
      %v220 = vld [vmem:[%s169 + $0xa1] sm:$0xff]
      %v221 = vld [vmem:[%s169 + $0xb1] sm:$0xff]
      %v222 = vld [vmem:[%s169 + $0xc1] sm:$0xff]
      %v223 = vld [vmem:[%s169 + $0xd1] sm:$0xff]
      %v224 = vld [vmem:[%s169 + $0xe1] sm:$0xff]
      %v225 = vld [vmem:[%s169 + $0xf1] sm:$0xff]
      %v226 = vld [vmem:[%s169 + $0x101] sm:$0xff]
      %v227 = vld [vmem:[%s169 + $0x121] sm:$0xff]
      %v228 = vld [vmem:[%s169 + $0x131] sm:$0xff]
      %v229 = vld [vmem:[%s169 + $0x141] sm:$0xff]
      %v230 = vld [vmem:[%s169 + $0x151] sm:$0xff]
      %v231 = vld [vmem:[%s169 + $0x161] sm:$0xff]
      %v232 = vld [vmem:[%s169 + $0x171] sm:$0xff]
      %v233 = vld [vmem:[%s169 + $0x181] sm:$0xff]
      %v234 = vld [vmem:[%s169 + $0x191] sm:$0xff]
      %v235 = vld [vmem:[%s169 + $0x1b1] sm:$0xff]
      %v236 = vld [vmem:[%s169 + $0x1c1] sm:$0xff]
      %v237 = vld [vmem:[%s169 + $0x1d1] sm:$0xff]
      %v238 = vld [vmem:[%s169 + $0x1e1] sm:$0xff]
      %v239 = vld [vmem:[%s169 + $0x1f1] sm:$0xff]
      %v240 = vld [vmem:[%s169 + $0x201] sm:$0xff]
      %v241 = vld [vmem:[%s169 + $0x211] sm:$0xff]
      %v242 = vld [vmem:[%s169 + $0x221] sm:$0xff]
      %v243 = vld [vmem:[%s1 + $0x10] sm:$0xf]
      %vm244 = vcmask 31744
      %v246 = vsel %vm244, %v211, 0
      %v249 = vsel %vm244, %v212, 0
      %v252 = vsel %vm244, %v213, 0
      %v255 = vsel %vm244, %v214, 0
      %v258 = vsel %vm244, %v215, 0
      %v261 = vsel %vm244, %v216, 0
      %v264 = vsel %vm244, %v217, 0
      %v267 = vsel %vm244, %v218, 0
      %v270 = vsel %vm244, %v219, 0
      %v273 = vsel %vm244, %v220, 0
      %v276 = vsel %vm244, %v221, 0
      %v279 = vsel %vm244, %v222, 0
      %v282 = vsel %vm244, %v223, 0
      %v285 = vsel %vm244, %v224, 0
      %v288 = vsel %vm244, %v225, 0
      %v291 = vsel %vm244, %v226, 0
      %v294 = vsel %vm244, %v227, 0
      %v297 = vsel %vm244, %v228, 0
      %v300 = vsel %vm244, %v229, 0
      %v303 = vsel %vm244, %v230, 0
      %v306 = vsel %vm244, %v231, 0
      %v309 = vsel %vm244, %v232, 0
      %v312 = vsel %vm244, %v233, 0
      %v315 = vsel %vm244, %v234, 0
      %v318 = vsel %vm244, %v235, 0
      %v321 = vsel %vm244, %v236, 0
      %v324 = vsel %vm244, %v237, 0
      %v327 = vsel %vm244, %v238, 0
      %v330 = vsel %vm244, %v239, 0
      %v333 = vsel %vm244, %v240, 0
      %v336 = vsel %vm244, %v241, 0
      %v339 = vsel %vm244, %v242, 0
      %vm341 = vcmask 1043456
      %v343 = vsel %vm341, %v243, 0
      %345 = vmatprep.subr.mxu0 0.0
      %346 = vmatpush1.msra.mxu0 %v343
      %347 = vmatprep.subr.mxu0 0.0
      %348 = vmatpush1.msra.mxu0 0.0
      %349 = vmatprep.subr.mxu0 0.0
      %350 = vmatpush1.msra.mxu0 0.0
      %351 = vmatprep.subr.mxu0 0.0
      %352 = vmatpush1.msra.mxu0 0.0
      %353 = vmatprep.subr.mxu0 0.0
      %354 = vmatpush1.msra.mxu0 0.0
      %355 = vmatprep.subr.mxu0 0.0
      %356 = vmatpush1.msra.mxu0 0.0
      %357 = vmatprep.subr.mxu0 0.0
      %358 = vmatpush1.msra.mxu0 0.0
      %359 = vmatprep.subr.mxu0 0.0
      %360 = vmatpush1.msra.mxu0 0.0
      %361 = vmatprep.subr.mxu0 0.0
      %362 = vmatpush1.msra.mxu0 0.0
      %363 = vmatprep.subr.mxu0 0.0
      %364 = vmatpush1.msra.mxu0 0.0
      %365 = vmatprep.subr.mxu0 0.0
      %366 = vmatpush1.msra.mxu0 0.0
      %367 = vmatprep.subr.mxu0 0.0
      %368 = vmatpush1.msra.mxu0 0.0
      %369 = vmatprep.subr.mxu0 0.0
      %370 = vmatpush1.msra.mxu0 0.0
      %371 = vmatprep.subr.mxu0 0.0
      %372 = vmatpush1.msra.mxu0 0.0
      %373 = vmatprep.subr.mxu0 0.0
      %374 = vmatpush1.msra.mxu0 0.0
      %375 = vmatprep.subr.mxu0 0.0
      %376 = vmatpush1.msra.mxu0 0.0
      %377 = vmatprep.subr.mxu0 0.0
      %378 = vmatpush1.msra.mxu0 0.0
      %379 = vmatprep.subr.mxu0 0.0
      %380 = vmatpush1.msra.mxu0 0.0
      %381 = vmatprep.subr.mxu0 0.0
      %382 = vmatpush1.msra.mxu0 0.0
      %383 = vmatprep.subr.mxu0 0.0
      %384 = vmatpush1.msra.mxu0 0.0
      %385 = vmatprep.subr.mxu0 0.0
      %386 = vmatpush1.msra.mxu0 0.0
      %387 = vmatprep.subr.mxu0 0.0
      %388 = vmatpush1.msra.mxu0 0.0
      %389 = vmatprep.subr.mxu0 0.0
      %390 = vmatpush1.msra.mxu0 0.0
      %391 = vmatprep.subr.mxu0 0.0
      %392 = vmatpush1.msra.mxu0 0.0
      %393 = vmatprep.subr.mxu0 0.0
      %394 = vmatpush1.msra.mxu0 0.0
      %395 = vmatprep.subr.mxu0 0.0
      %396 = vmatpush1.msra.mxu0 0.0
      %397 = vmatprep.subr.mxu0 0.0
      %398 = vmatpush1.msra.mxu0 0.0
      %399 = vmatprep.subr.mxu0 0.0
      %400 = vmatpush1.msra.mxu0 0.0
      %401 = vmatprep.subr.mxu0 0.0
      %402 = vmatpush1.msra.mxu0 0.0
      %403 = vmatprep.subr.mxu0 0.0
      %404 = vmatpush1.msra.mxu0 0.0
      %405 = vmatprep.subr.mxu0 0.0
      %406 = vmatpush1.msra.mxu0 0.0
      %407 = vmatprep.subr.mxu0 0.0
      %408 = vmatpush1.msra.mxu0 0.0
      %409 = vmatprep.mubr.f32.mxu0 0.0
      %410 = vmatmul.mubr.f32.gmra.mrb[0].mxu0 %v246
      %v411 = vpop.f32.mrb[0].mxu0
      %v412 = vadd.f32 0.0, %v411
      %v413 = vpop.f32.mrb[0].mxu0
      %414 = vmatprep.mubr.f32.mxu0 0.0
      %415 = vmatmul.mubr.f32.gmra.mrb[0].mxu0 %v249
      %v416 = vpop.f32.mrb[0].mxu0
      %v417 = vadd.f32 0.0, %v416
      %v418 = vpop.f32.mrb[0].mxu0
      %419 = vmatprep.mubr.f32.mxu0 0.0
      %420 = vmatmul.mubr.f32.gmra.mrb[0].mxu0 %v252
      %v421 = vpop.f32.mrb[0].mxu0
      %v422 = vadd.f32 0.0, %v421
      %v423 = vpop.f32.mrb[0].mxu0
      %424 = vmatprep.mubr.f32.mxu0 0.0
      %425 = vmatmul.mubr.f32.gmra.mrb[0].mxu0 %v255
      %v426 = vpop.f32.mrb[0].mxu0
      %v427 = vadd.f32 0.0, %v426
      %v428 = vpop.f32.mrb[0].mxu0
      %429 = vmatprep.mubr.f32.mxu0 0.0
      %430 = vmatmul.mubr.f32.gmra.mrb[0].mxu0 %v258
      %v431 = vpop.f32.mrb[0].mxu0
      %v432 = vadd.f32 0.0, %v431
      %v433 = vpop.f32.mrb[0].mxu0
      %434 = vmatprep.mubr.f32.mxu0 0.0
      %435 = vmatmul.mubr.f32.gmra.mrb[0].mxu0 %v261
      %v436 = vpop.f32.mrb[0].mxu0
      %v437 = vadd.f32 0.0, %v436
      %v438 = vpop.f32.mrb[0].mxu0
      %439 = vmatprep.mubr.f32.mxu0 0.0
      %440 = vmatmul.mubr.f32.gmra.mrb[0].mxu0 %v264
      %v441 = vpop.f32.mrb[0].mxu0
      %v442 = vadd.f32 0.0, %v441
      %v443 = vpop.f32.mrb[0].mxu0
      %444 = vmatprep.mubr.f32.mxu0 0.0
      %445 = vmatmul.mubr.f32.gmra.mrb[0].mxu0 %v267
      %v446 = vpop.f32.mrb[0].mxu0
      %v447 = vadd.f32 0.0, %v446
      %v448 = vpop.f32.mrb[0].mxu0
      %449 = vmatprep.mubr.f32.mxu0 0.0
      %450 = vmatmul.mubr.f32.gmra.mrb[0].mxu0 %v270
      %v451 = vpop.f32.mrb[0].mxu0
      %v452 = vadd.f32 0.0, %v451
      %v453 = vpop.f32.mrb[0].mxu0
      %454 = vmatprep.mubr.f32.mxu0 0.0
      %455 = vmatmul.mubr.f32.gmra.mrb[0].mxu0 %v273
      %v456 = vpop.f32.mrb[0].mxu0
      %v457 = vadd.f32 0.0, %v456
      %v458 = vpop.f32.mrb[0].mxu0
      %459 = vmatprep.mubr.f32.mxu0 0.0
      %460 = vmatmul.mubr.f32.gmra.mrb[0].mxu0 %v276
      %v461 = vpop.f32.mrb[0].mxu0
      %v462 = vadd.f32 0.0, %v461
      %v463 = vpop.f32.mrb[0].mxu0
      %464 = vmatprep.mubr.f32.mxu0 0.0
      %465 = vmatmul.mubr.f32.gmra.mrb[0].mxu0 %v279
      %v466 = vpop.f32.mrb[0].mxu0
      %v467 = vadd.f32 0.0, %v466
      %v468 = vpop.f32.mrb[0].mxu0
      %469 = vmatprep.mubr.f32.mxu0 0.0
      %470 = vmatmul.mubr.f32.gmra.mrb[0].mxu0 %v282
      %v471 = vpop.f32.mrb[0].mxu0
      %v472 = vadd.f32 0.0, %v471
      %v473 = vpop.f32.mrb[0].mxu0
      %474 = vmatprep.mubr.f32.mxu0 0.0
      %475 = vmatmul.mubr.f32.gmra.mrb[0].mxu0 %v285
      %v476 = vpop.f32.mrb[0].mxu0
      %v477 = vadd.f32 0.0, %v476
      %v478 = vpop.f32.mrb[0].mxu0
      %479 = vmatprep.mubr.f32.mxu0 0.0
      %480 = vmatmul.mubr.f32.gmra.mrb[0].mxu0 %v288
      %v481 = vpop.f32.mrb[0].mxu0
      %v482 = vadd.f32 0.0, %v481
      %v483 = vpop.f32.mrb[0].mxu0
      %484 = vmatprep.mubr.f32.mxu0 0.0
      %485 = vmatmul.mubr.f32.gmra.mrb[0].mxu0 %v291
      %v486 = vpop.f32.mrb[0].mxu0
      %v487 = vadd.f32 0.0, %v486
      %v488 = vpop.f32.mrb[0].mxu0
      %489 = vmatprep.mubr.f32.mxu0 0.0
      %490 = vmatmul.mubr.f32.gmra.mrb[0].mxu0 %v294
      %v491 = vpop.f32.mrb[0].mxu0
      %v492 = vadd.f32 0.0, %v491
      %v493 = vpop.f32.mrb[0].mxu0
      %494 = vmatprep.mubr.f32.mxu0 0.0
      %495 = vmatmul.mubr.f32.gmra.mrb[0].mxu0 %v297
      %v496 = vpop.f32.mrb[0].mxu0
      %v497 = vadd.f32 0.0, %v496
      %v498 = vpop.f32.mrb[0].mxu0
      %499 = vmatprep.mubr.f32.mxu0 0.0
      %500 = vmatmul.mubr.f32.gmra.mrb[0].mxu0 %v300
      %v501 = vpop.f32.mrb[0].mxu0
      %v502 = vadd.f32 0.0, %v501
      %v503 = vpop.f32.mrb[0].mxu0
      %504 = vmatprep.mubr.f32.mxu0 0.0
      %505 = vmatmul.mubr.f32.gmra.mrb[0].mxu0 %v303
      %v506 = vpop.f32.mrb[0].mxu0
      %v507 = vadd.f32 0.0, %v506
      %v508 = vpop.f32.mrb[0].mxu0
      %509 = vmatprep.mubr.f32.mxu0 0.0
      %510 = vmatmul.mubr.f32.gmra.mrb[0].mxu0 %v306
      %v511 = vpop.f32.mrb[0].mxu0
      %v512 = vadd.f32 0.0, %v511
      %v513 = vpop.f32.mrb[0].mxu0
      %514 = vmatprep.mubr.f32.mxu0 0.0
      %515 = vmatmul.mubr.f32.gmra.mrb[0].mxu0 %v309
      %v516 = vpop.f32.mrb[0].mxu0
      %v517 = vadd.f32 0.0, %v516
      %v518 = vpop.f32.mrb[0].mxu0
      %519 = vmatprep.mubr.f32.mxu0 0.0
      %520 = vmatmul.mubr.f32.gmra.mrb[0].mxu0 %v312
      %v521 = vpop.f32.mrb[0].mxu0
      %v522 = vadd.f32 0.0, %v521
      %v523 = vpop.f32.mrb[0].mxu0
      %524 = vmatprep.mubr.f32.mxu0 0.0
      %525 = vmatmul.mubr.f32.gmra.mrb[0].mxu0 %v315
      %v526 = vpop.f32.mrb[0].mxu0
      %v527 = vadd.f32 0.0, %v526
      %v528 = vpop.f32.mrb[0].mxu0
      %529 = vmatprep.mubr.f32.mxu0 0.0
      %530 = vmatmul.mubr.f32.gmra.mrb[0].mxu0 %v318
      %v531 = vpop.f32.mrb[0].mxu0
      %v532 = vadd.f32 0.0, %v531
      %v533 = vpop.f32.mrb[0].mxu0
      %534 = vmatprep.mubr.f32.mxu0 0.0
      %535 = vmatmul.mubr.f32.gmra.mrb[0].mxu0 %v321
      %v536 = vpop.f32.mrb[0].mxu0
      %v537 = vadd.f32 0.0, %v536
      %v538 = vpop.f32.mrb[0].mxu0
      %539 = vmatprep.mubr.f32.mxu0 0.0
      %540 = vmatmul.mubr.f32.gmra.mrb[0].mxu0 %v324
      %v541 = vpop.f32.mrb[0].mxu0
      %v542 = vadd.f32 0.0, %v541
      %v543 = vpop.f32.mrb[0].mxu0
      %544 = vmatprep.mubr.f32.mxu0 0.0
      %545 = vmatmul.mubr.f32.gmra.mrb[0].mxu0 %v327
      %v546 = vpop.f32.mrb[0].mxu0
      %v547 = vadd.f32 0.0, %v546
      %v548 = vpop.f32.mrb[0].mxu0
      %549 = vmatprep.mubr.f32.mxu0 0.0
      %550 = vmatmul.mubr.f32.gmra.mrb[0].mxu0 %v330
      %v551 = vpop.f32.mrb[0].mxu0
      %v552 = vadd.f32 0.0, %v551
      %v553 = vpop.f32.mrb[0].mxu0
      %554 = vmatprep.mubr.f32.mxu0 0.0
      %555 = vmatmul.mubr.f32.gmra.mrb[0].mxu0 %v333
      %v556 = vpop.f32.mrb[0].mxu0
      %v557 = vadd.f32 0.0, %v556
      %v558 = vpop.f32.mrb[0].mxu0
      %559 = vmatprep.mubr.f32.mxu0 0.0
      %560 = vmatmul.mubr.f32.gmra.mrb[0].mxu0 %v336
      %v561 = vpop.f32.mrb[0].mxu0
      %v562 = vadd.f32 0.0, %v561
      %v563 = vpop.f32.mrb[0].mxu0
      %564 = vmatprep.mubr.f32.mxu0 0.0
      %565 = vmatmul.mubr.f32.gmra.mrb[0].mxu0 %v339
      %v566 = vpop.f32.mrb[0].mxu0
      %v567 = vadd.f32 0.0, %v566
      %v568 = vpop.f32.mrb[0].mxu0
      %569 = vdwg.mxu0
      %vm570 = vcmask 130048
      %v572 = vsel %vm570, %v177, 0
      %v575 = vsel %vm570, %v178, 0
      %v578 = vsel %vm570, %v179, 0
      %v581 = vsel %vm570, %v180, 0
      %v584 = vsel %vm570, %v181, 0
      %v587 = vsel %vm570, %v182, 0
      %v590 = vsel %vm570, %v183, 0
      %v593 = vsel %vm570, %v184, 0
      %v596 = vsel %vm570, %v185, 0
      %v599 = vsel %vm570, %v186, 0
      %v602 = vsel %vm570, %v187, 0
      %v605 = vsel %vm570, %v188, 0
      %v608 = vsel %vm570, %v189, 0
      %v611 = vsel %vm570, %v190, 0
      %v614 = vsel %vm570, %v191, 0
      %v617 = vsel %vm570, %v192, 0
      %v620 = vsel %vm570, %v193, 0
      %v623 = vsel %vm570, %v194, 0
      %v626 = vsel %vm570, %v195, 0
      %v629 = vsel %vm570, %v196, 0
      %v632 = vsel %vm570, %v197, 0
      %v635 = vsel %vm570, %v198, 0
      %v638 = vsel %vm570, %v199, 0
      %v641 = vsel %vm570, %v200, 0
      %v644 = vsel %vm570, %v201, 0
      %v647 = vsel %vm570, %v202, 0
      %v650 = vsel %vm570, %v203, 0
      %v653 = vsel %vm570, %v204, 0
      %v656 = vsel %vm570, %v205, 0
      %v659 = vsel %vm570, %v206, 0
      %v662 = vsel %vm570, %v207, 0
      %v665 = vsel %vm570, %v208, 0
      %667 = vmatprep.subr.mxu0 0.0
      %668 = vmatpush1.msra.mxu0 %v209
      %669 = vmatprep.subr.mxu0 0.0
      %670 = vmatpush1.msra.mxu0 %v210
      %671 = vmatprep.subr.mxu0 0.0
      %672 = vmatpush1.msra.mxu0 0.0
      %673 = vmatprep.subr.mxu0 0.0
      %674 = vmatpush1.msra.mxu0 0.0
      %675 = vmatprep.subr.mxu0 0.0
      %676 = vmatpush1.msra.mxu0 0.0
      %677 = vmatprep.subr.mxu0 0.0
      %678 = vmatpush1.msra.mxu0 0.0
      %679 = vmatprep.subr.mxu0 0.0
      %680 = vmatpush1.msra.mxu0 0.0
      %681 = vmatprep.subr.mxu0 0.0
      %682 = vmatpush1.msra.mxu0 0.0
      %683 = vmatprep.subr.mxu0 0.0
      %684 = vmatpush1.msra.mxu0 0.0
      %685 = vmatprep.subr.mxu0 0.0
      %686 = vmatpush1.msra.mxu0 0.0
      %687 = vmatprep.subr.mxu0 0.0
      %688 = vmatpush1.msra.mxu0 0.0
      %689 = vmatprep.subr.mxu0 0.0
      %690 = vmatpush1.msra.mxu0 0.0
      %691 = vmatprep.subr.mxu0 0.0
      %692 = vmatpush1.msra.mxu0 0.0
      %693 = vmatprep.subr.mxu0 0.0
      %694 = vmatpush1.msra.mxu0 0.0
      %695 = vmatprep.subr.mxu0 0.0
      %696 = vmatpush1.msra.mxu0 0.0
      %697 = vmatprep.subr.mxu0 0.0
      %698 = vmatpush1.msra.mxu0 0.0
      %699 = vmatprep.subr.mxu0 0.0
      %700 = vmatpush1.msra.mxu0 0.0
      %701 = vmatprep.subr.mxu0 0.0
      %702 = vmatpush1.msra.mxu0 0.0
      %703 = vmatprep.subr.mxu0 0.0
      %704 = vmatpush1.msra.mxu0 0.0
      %705 = vmatprep.subr.mxu0 0.0
      %706 = vmatpush1.msra.mxu0 0.0
      %707 = vmatprep.subr.mxu0 0.0
      %708 = vmatpush1.msra.mxu0 0.0
      %709 = vmatprep.subr.mxu0 0.0
      %710 = vmatpush1.msra.mxu0 0.0
      %711 = vmatprep.subr.mxu0 0.0
      %712 = vmatpush1.msra.mxu0 0.0
      %713 = vmatprep.subr.mxu0 0.0
      %714 = vmatpush1.msra.mxu0 0.0
      %715 = vmatprep.subr.mxu0 0.0
      %716 = vmatpush1.msra.mxu0 0.0
      %717 = vmatprep.subr.mxu0 0.0
      %718 = vmatpush1.msra.mxu0 0.0
      %719 = vmatprep.subr.mxu0 0.0
      %720 = vmatpush1.msra.mxu0 0.0
      %721 = vmatprep.subr.mxu0 0.0
      %722 = vmatpush1.msra.mxu0 0.0
      %723 = vmatprep.subr.mxu0 0.0
      %724 = vmatpush1.msra.mxu0 0.0
      %725 = vmatprep.subr.mxu0 0.0
      %726 = vmatpush1.msra.mxu0 0.0
      %727 = vmatprep.subr.mxu0 0.0
      %728 = vmatpush1.msra.mxu0 0.0
      %729 = vmatprep.subr.mxu0 0.0
      %730 = vmatpush1.msra.mxu0 0.0
      %731 = vmatprep.mubr.f32.mxu0 0.0
      %732 = vmatmul.mubr.f32.gmra.mrb[0].mxu0 %v572
      %v733 = vpop.f32.mrb[0].mxu0
      %v734 = vadd.f32 %v412, %v733
      %v735 = vpop.f32.mrb[0].mxu0
      %736 = vmatprep.mubr.f32.mxu0 0.0
      %737 = vmatmul.mubr.f32.gmra.mrb[0].mxu0 %v575
      %v738 = vpop.f32.mrb[0].mxu0
      %v739 = vadd.f32 %v417, %v738
      %v740 = vpop.f32.mrb[0].mxu0
      %741 = vmatprep.mubr.f32.mxu0 0.0
      %742 = vmatmul.mubr.f32.gmra.mrb[0].mxu0 %v578
      %v743 = vpop.f32.mrb[0].mxu0
      %v744 = vadd.f32 %v422, %v743
      %v745 = vpop.f32.mrb[0].mxu0
      %746 = vmatprep.mubr.f32.mxu0 0.0
      %747 = vmatmul.mubr.f32.gmra.mrb[0].mxu0 %v581
      %v748 = vpop.f32.mrb[0].mxu0
      %v749 = vadd.f32 %v427, %v748
      %v750 = vpop.f32.mrb[0].mxu0
      %751 = vmatprep.mubr.f32.mxu0 0.0
      %752 = vmatmul.mubr.f32.gmra.mrb[0].mxu0 %v584
      %v753 = vpop.f32.mrb[0].mxu0
      %v754 = vadd.f32 %v432, %v753
      %v755 = vpop.f32.mrb[0].mxu0
      %756 = vmatprep.mubr.f32.mxu0 0.0
      %757 = vmatmul.mubr.f32.gmra.mrb[0].mxu0 %v587
      %v758 = vpop.f32.mrb[0].mxu0
      %v759 = vadd.f32 %v437, %v758
      %v760 = vpop.f32.mrb[0].mxu0
      %761 = vmatprep.mubr.f32.mxu0 0.0
      %762 = vmatmul.mubr.f32.gmra.mrb[0].mxu0 %v590
      %v763 = vpop.f32.mrb[0].mxu0
      %v764 = vadd.f32 %v442, %v763
      %v765 = vpop.f32.mrb[0].mxu0
      %766 = vmatprep.mubr.f32.mxu0 0.0
      %767 = vmatmul.mubr.f32.gmra.mrb[0].mxu0 %v593
      %v768 = vpop.f32.mrb[0].mxu0
      %v769 = vadd.f32 %v447, %v768
      %v770 = vpop.f32.mrb[0].mxu0
      %771 = vmatprep.mubr.f32.mxu0 0.0
      %772 = vmatmul.mubr.f32.gmra.mrb[0].mxu0 %v596
      %v773 = vpop.f32.mrb[0].mxu0
      %v774 = vadd.f32 %v452, %v773
      %v775 = vpop.f32.mrb[0].mxu0
      %776 = vmatprep.mubr.f32.mxu0 0.0
      %777 = vmatmul.mubr.f32.gmra.mrb[0].mxu0 %v599
      %v778 = vpop.f32.mrb[0].mxu0
      %v779 = vadd.f32 %v457, %v778
      %v780 = vpop.f32.mrb[0].mxu0
      %781 = vmatprep.mubr.f32.mxu0 0.0
      %782 = vmatmul.mubr.f32.gmra.mrb[0].mxu0 %v602
      %v783 = vpop.f32.mrb[0].mxu0
      %v784 = vadd.f32 %v462, %v783
      %v785 = vpop.f32.mrb[0].mxu0
      %786 = vmatprep.mubr.f32.mxu0 0.0
      %787 = vmatmul.mubr.f32.gmra.mrb[0].mxu0 %v605
      %v788 = vpop.f32.mrb[0].mxu0
      %v789 = vadd.f32 %v467, %v788
      %v790 = vpop.f32.mrb[0].mxu0
      %791 = vmatprep.mubr.f32.mxu0 0.0
      %792 = vmatmul.mubr.f32.gmra.mrb[0].mxu0 %v608
      %v793 = vpop.f32.mrb[0].mxu0
      %v794 = vadd.f32 %v472, %v793
      %v795 = vpop.f32.mrb[0].mxu0
      %796 = vmatprep.mubr.f32.mxu0 0.0
      %797 = vmatmul.mubr.f32.gmra.mrb[0].mxu0 %v611
      %v798 = vpop.f32.mrb[0].mxu0
      %v799 = vadd.f32 %v477, %v798
      %v800 = vpop.f32.mrb[0].mxu0
      %801 = vmatprep.mubr.f32.mxu0 0.0
      %802 = vmatmul.mubr.f32.gmra.mrb[0].mxu0 %v614
      %v803 = vpop.f32.mrb[0].mxu0
      %v804 = vadd.f32 %v482, %v803
      %v805 = vpop.f32.mrb[0].mxu0
      %806 = vmatprep.mubr.f32.mxu0 0.0
      %807 = vmatmul.mubr.f32.gmra.mrb[0].mxu0 %v617
      %v808 = vpop.f32.mrb[0].mxu0
      %v809 = vadd.f32 %v487, %v808
      %v810 = vpop.f32.mrb[0].mxu0
      %811 = vmatprep.mubr.f32.mxu0 0.0
      %812 = vmatmul.mubr.f32.gmra.mrb[0].mxu0 %v620
      %v813 = vpop.f32.mrb[0].mxu0
      %v814 = vadd.f32 %v492, %v813
      %v815 = vpop.f32.mrb[0].mxu0
      %816 = vmatprep.mubr.f32.mxu0 0.0
      %817 = vmatmul.mubr.f32.gmra.mrb[0].mxu0 %v623
      %v818 = vpop.f32.mrb[0].mxu0
      %v819 = vadd.f32 %v497, %v818
      %v820 = vpop.f32.mrb[0].mxu0
      %821 = vmatprep.mubr.f32.mxu0 0.0
      %822 = vmatmul.mubr.f32.gmra.mrb[0].mxu0 %v626
      %v823 = vpop.f32.mrb[0].mxu0
      %v824 = vadd.f32 %v502, %v823
      %v825 = vpop.f32.mrb[0].mxu0
      %826 = vmatprep.mubr.f32.mxu0 0.0
      %827 = vmatmul.mubr.f32.gmra.mrb[0].mxu0 %v629
      %v828 = vpop.f32.mrb[0].mxu0
      %v829 = vadd.f32 %v507, %v828
      %v830 = vpop.f32.mrb[0].mxu0
      %831 = vmatprep.mubr.f32.mxu0 0.0
      %832 = vmatmul.mubr.f32.gmra.mrb[0].mxu0 %v632
      %v833 = vpop.f32.mrb[0].mxu0
      %v834 = vadd.f32 %v512, %v833
      %v835 = vpop.f32.mrb[0].mxu0
      %836 = vmatprep.mubr.f32.mxu0 0.0
      %837 = vmatmul.mubr.f32.gmra.mrb[0].mxu0 %v635
      %v838 = vpop.f32.mrb[0].mxu0
      %v839 = vadd.f32 %v517, %v838
      %v840 = vpop.f32.mrb[0].mxu0
      %841 = vmatprep.mubr.f32.mxu0 0.0
      %842 = vmatmul.mubr.f32.gmra.mrb[0].mxu0 %v638
      %v843 = vpop.f32.mrb[0].mxu0
      %v844 = vadd.f32 %v522, %v843
      %v845 = vpop.f32.mrb[0].mxu0
      %846 = vmatprep.mubr.f32.mxu0 0.0
      %847 = vmatmul.mubr.f32.gmra.mrb[0].mxu0 %v641
      %v848 = vpop.f32.mrb[0].mxu0
      %v849 = vadd.f32 %v527, %v848
      %v850 = vpop.f32.mrb[0].mxu0
      %851 = vmatprep.mubr.f32.mxu0 0.0
      %852 = vmatmul.mubr.f32.gmra.mrb[0].mxu0 %v644
      %v853 = vpop.f32.mrb[0].mxu0
      %v854 = vadd.f32 %v532, %v853
      %v855 = vpop.f32.mrb[0].mxu0
      %856 = vmatprep.mubr.f32.mxu0 0.0
      %857 = vmatmul.mubr.f32.gmra.mrb[0].mxu0 %v647
      %v858 = vpop.f32.mrb[0].mxu0
      %v859 = vadd.f32 %v537, %v858
      %v860 = vpop.f32.mrb[0].mxu0
      %861 = vmatprep.mubr.f32.mxu0 0.0
      %862 = vmatmul.mubr.f32.gmra.mrb[0].mxu0 %v650
      %v863 = vpop.f32.mrb[0].mxu0
      %v864 = vadd.f32 %v542, %v863
      %v865 = vpop.f32.mrb[0].mxu0
      %866 = vmatprep.mubr.f32.mxu0 0.0
      %867 = vmatmul.mubr.f32.gmra.mrb[0].mxu0 %v653
      %v868 = vpop.f32.mrb[0].mxu0
      %v869 = vadd.f32 %v547, %v868
      %v870 = vpop.f32.mrb[0].mxu0
      %871 = vmatprep.mubr.f32.mxu0 0.0
      %872 = vmatmul.mubr.f32.gmra.mrb[0].mxu0 %v656
      %v873 = vpop.f32.mrb[0].mxu0
      %v874 = vadd.f32 %v552, %v873
      %v875 = vpop.f32.mrb[0].mxu0
      %876 = vmatprep.mubr.f32.mxu0 0.0
      %877 = vmatmul.mubr.f32.gmra.mrb[0].mxu0 %v659
      %v878 = vpop.f32.mrb[0].mxu0
      %v879 = vadd.f32 %v557, %v878
      %v880 = vpop.f32.mrb[0].mxu0
      %881 = vmatprep.mubr.f32.mxu0 0.0
      %882 = vmatmul.mubr.f32.gmra.mrb[0].mxu0 %v662
      %v883 = vpop.f32.mrb[0].mxu0
      %v884 = vadd.f32 %v562, %v883
      %v885 = vpop.f32.mrb[0].mxu0
      %886 = vmatprep.mubr.f32.mxu0 0.0
      %887 = vmatmul.mubr.f32.gmra.mrb[0].mxu0 %v665
      %v888 = vpop.f32.mrb[0].mxu0
      %v889 = vadd.f32 %v567, %v888
      %v890 = vpop.f32.mrb[0].mxu0
      %891 = vdwg.mxu0
      %v892 = vld [vmem:[%s1 + $0x14] sm:$0xf]
      %893 = vrot.lane.b32.xlu0 %v211, 120
      %v894 = vpop.permute.xlu0 %893
      %895 = vrot.lane.b32.xlu0 %v212, 120
      %v896 = vpop.permute.xlu0 %895
      %897 = vrot.lane.b32.xlu0 %v213, 120
      %v898 = vpop.permute.xlu0 %897
      %899 = vrot.lane.b32.xlu0 %v214, 120
      %v900 = vpop.permute.xlu0 %899
      %901 = vrot.lane.b32.xlu0 %v215, 120
      %v902 = vpop.permute.xlu0 %901
      %903 = vrot.lane.b32.xlu0 %v216, 120
      %v904 = vpop.permute.xlu0 %903
      %905 = vrot.lane.b32.xlu0 %v217, 120
      %v906 = vpop.permute.xlu0 %905
      %907 = vrot.lane.b32.xlu0 %v218, 120
      %v908 = vpop.permute.xlu0 %907
      %909 = vrot.lane.b32.xlu0 %v219, 120
      %v910 = vpop.permute.xlu0 %909
      %911 = vrot.lane.b32.xlu0 %v220, 120
      %v912 = vpop.permute.xlu0 %911
      %913 = vrot.lane.b32.xlu0 %v221, 120
      %v914 = vpop.permute.xlu0 %913
      %915 = vrot.lane.b32.xlu0 %v222, 120
      %v916 = vpop.permute.xlu0 %915
      %917 = vrot.lane.b32.xlu0 %v223, 120
      %v918 = vpop.permute.xlu0 %917
      %919 = vrot.lane.b32.xlu0 %v224, 120
      %v920 = vpop.permute.xlu0 %919
      %921 = vrot.lane.b32.xlu0 %v225, 120
      %v922 = vpop.permute.xlu0 %921
      %923 = vrot.lane.b32.xlu0 %v226, 120
      %v924 = vpop.permute.xlu0 %923
      %925 = vrot.lane.b32.xlu0 %v227, 120
      %v926 = vpop.permute.xlu0 %925
      %927 = vrot.lane.b32.xlu0 %v228, 120
      %v928 = vpop.permute.xlu0 %927
      %929 = vrot.lane.b32.xlu0 %v229, 120
      %v930 = vpop.permute.xlu0 %929
      %931 = vrot.lane.b32.xlu0 %v230, 120
      %v932 = vpop.permute.xlu0 %931
      %933 = vrot.lane.b32.xlu0 %v231, 120
      %v934 = vpop.permute.xlu0 %933
      %935 = vrot.lane.b32.xlu0 %v232, 120
      %v936 = vpop.permute.xlu0 %935
      %937 = vrot.lane.b32.xlu0 %v233, 120
      %v938 = vpop.permute.xlu0 %937
      %939 = vrot.lane.b32.xlu0 %v234, 120
      %v940 = vpop.permute.xlu0 %939
      %941 = vrot.lane.b32.xlu0 %v235, 120
      %v942 = vpop.permute.xlu0 %941
      %943 = vrot.lane.b32.xlu0 %v236, 120
      %v944 = vpop.permute.xlu0 %943
      %945 = vrot.lane.b32.xlu0 %v237, 120
      %v946 = vpop.permute.xlu0 %945
      %947 = vrot.lane.b32.xlu0 %v238, 120
      %v948 = vpop.permute.xlu0 %947
      %949 = vrot.lane.b32.xlu0 %v239, 120
      %v950 = vpop.permute.xlu0 %949
      %951 = vrot.lane.b32.xlu0 %v240, 120
      %v952 = vpop.permute.xlu0 %951
      %953 = vrot.lane.b32.xlu0 %v241, 120
      %v954 = vpop.permute.xlu0 %953
      %955 = vrot.lane.b32.xlu0 %v242, 120
      %v956 = vpop.permute.xlu0 %955
      %v957 = vsel %vm244, %v894, 0
      %v959 = vsel %vm244, %v896, 0
      %v961 = vsel %vm244, %v898, 0
      %v963 = vsel %vm244, %v900, 0
      %v965 = vsel %vm244, %v902, 0
      %v967 = vsel %vm244, %v904, 0
      %v969 = vsel %vm244, %v906, 0
      %v971 = vsel %vm244, %v908, 0
      %v973 = vsel %vm244, %v910, 0
      %v975 = vsel %vm244, %v912, 0
      %v977 = vsel %vm244, %v914, 0
      %v979 = vsel %vm244, %v916, 0
      %v981 = vsel %vm244, %v918, 0
      %v983 = vsel %vm244, %v920, 0
      %v985 = vsel %vm244, %v922, 0
      %v987 = vsel %vm244, %v924, 0
      %v989 = vsel %vm244, %v926, 0
      %v991 = vsel %vm244, %v928, 0
      %v993 = vsel %vm244, %v930, 0
      %v995 = vsel %vm244, %v932, 0
      %v997 = vsel %vm244, %v934, 0
      %v999 = vsel %vm244, %v936, 0
      %v1001 = vsel %vm244, %v938, 0
      %v1003 = vsel %vm244, %v940, 0
      %v1005 = vsel %vm244, %v942, 0
      %v1007 = vsel %vm244, %v944, 0
      %v1009 = vsel %vm244, %v946, 0
      %v1011 = vsel %vm244, %v948, 0
      %v1013 = vsel %vm244, %v950, 0
      %v1015 = vsel %vm244, %v952, 0
      %v1017 = vsel %vm244, %v954, 0
      %v1019 = vsel %vm244, %v956, 0
      %v1022 = vsel %vm341, %v892, 0
      %1024 = vmatprep.subr.mxu0 0.0
      %1025 = vmatpush1.msra.mxu0 %v1022
      %1026 = vmatprep.subr.mxu0 0.0
      %1027 = vmatpush1.msra.mxu0 0.0
      %1028 = vmatprep.subr.mxu0 0.0
      %1029 = vmatpush1.msra.mxu0 0.0
      %1030 = vmatprep.subr.mxu0 0.0
      %1031 = vmatpush1.msra.mxu0 0.0
      %1032 = vmatprep.subr.mxu0 0.0
      %1033 = vmatpush1.msra.mxu0 0.0
      %1034 = vmatprep.subr.mxu0 0.0
      %1035 = vmatpush1.msra.mxu0 0.0
      %1036 = vmatprep.subr.mxu0 0.0
      %1037 = vmatpush1.msra.mxu0 0.0
      %1038 = vmatprep.subr.mxu0 0.0
      %1039 = vmatpush1.msra.mxu0 0.0
      %1040 = vmatprep.subr.mxu0 0.0
      %1041 = vmatpush1.msra.mxu0 0.0
      %1042 = vmatprep.subr.mxu0 0.0
      %1043 = vmatpush1.msra.mxu0 0.0
      %1044 = vmatprep.subr.mxu0 0.0
      %1045 = vmatpush1.msra.mxu0 0.0
      %1046 = vmatprep.subr.mxu0 0.0
      %1047 = vmatpush1.msra.mxu0 0.0
      %1048 = vmatprep.subr.mxu0 0.0
      %1049 = vmatpush1.msra.mxu0 0.0
      %1050 = vmatprep.subr.mxu0 0.0
      %1051 = vmatpush1.msra.mxu0 0.0
      %1052 = vmatprep.subr.mxu0 0.0
      %1053 = vmatpush1.msra.mxu0 0.0
      %1054 = vmatprep.subr.mxu0 0.0
      %1055 = vmatpush1.msra.mxu0 0.0
      %1056 = vmatprep.subr.mxu0 0.0
      %1057 = vmatpush1.msra.mxu0 0.0
      %1058 = vmatprep.subr.mxu0 0.0
      %1059 = vmatpush1.msra.mxu0 0.0
      %1060 = vmatprep.subr.mxu0 0.0
      %1061 = vmatpush1.msra.mxu0 0.0
      %1062 = vmatprep.subr.mxu0 0.0
      %1063 = vmatpush1.msra.mxu0 0.0
      %1064 = vmatprep.subr.mxu0 0.0
      %1065 = vmatpush1.msra.mxu0 0.0
      %1066 = vmatprep.subr.mxu0 0.0
      %1067 = vmatpush1.msra.mxu0 0.0
      %1068 = vmatprep.subr.mxu0 0.0
      %1069 = vmatpush1.msra.mxu0 0.0
      %1070 = vmatprep.subr.mxu0 0.0
      %1071 = vmatpush1.msra.mxu0 0.0
      %1072 = vmatprep.subr.mxu0 0.0
      %1073 = vmatpush1.msra.mxu0 0.0
      %1074 = vmatprep.subr.mxu0 0.0
      %1075 = vmatpush1.msra.mxu0 0.0
      %1076 = vmatprep.subr.mxu0 0.0
      %1077 = vmatpush1.msra.mxu0 0.0
      %1078 = vmatprep.subr.mxu0 0.0
      %1079 = vmatpush1.msra.mxu0 0.0
      %1080 = vmatprep.subr.mxu0 0.0
      %1081 = vmatpush1.msra.mxu0 0.0
      %1082 = vmatprep.subr.mxu0 0.0
      %1083 = vmatpush1.msra.mxu0 0.0
      %1084 = vmatprep.subr.mxu0 0.0
      %1085 = vmatpush1.msra.mxu0 0.0
      %1086 = vmatprep.subr.mxu0 0.0
      %1087 = vmatpush1.msra.mxu0 0.0
      %1088 = vmatprep.mubr.f32.mxu0 0.0
      %1089 = vmatmul.mubr.f32.gmra.mrb[0].mxu0 %v957
      %v1090 = vpop.f32.mrb[0].mxu0
      %v1091 = vadd.f32 0.0, %v1090
      %v1092 = vpop.f32.mrb[0].mxu0
      %1093 = vmatprep.mubr.f32.mxu0 0.0
      %1094 = vmatmul.mubr.f32.gmra.mrb[0].mxu0 %v959
      %v1095 = vpop.f32.mrb[0].mxu0
      %v1096 = vadd.f32 0.0, %v1095
      %v1097 = vpop.f32.mrb[0].mxu0
      %1098 = vmatprep.mubr.f32.mxu0 0.0
      %1099 = vmatmul.mubr.f32.gmra.mrb[0].mxu0 %v961
      %v1100 = vpop.f32.mrb[0].mxu0
      %v1101 = vadd.f32 0.0, %v1100
      %v1102 = vpop.f32.mrb[0].mxu0
      %1103 = vmatprep.mubr.f32.mxu0 0.0
      %1104 = vmatmul.mubr.f32.gmra.mrb[0].mxu0 %v963
      %v1105 = vpop.f32.mrb[0].mxu0
      %v1106 = vadd.f32 0.0, %v1105
      %v1107 = vpop.f32.mrb[0].mxu0
      %1108 = vmatprep.mubr.f32.mxu0 0.0
      %1109 = vmatmul.mubr.f32.gmra.mrb[0].mxu0 %v965
      %v1110 = vpop.f32.mrb[0].mxu0
      %v1111 = vadd.f32 0.0, %v1110
      %v1112 = vpop.f32.mrb[0].mxu0
      %1113 = vmatprep.mubr.f32.mxu0 0.0
      %1114 = vmatmul.mubr.f32.gmra.mrb[0].mxu0 %v967
      %v1115 = vpop.f32.mrb[0].mxu0
      %v1116 = vadd.f32 0.0, %v1115
      %v1117 = vpop.f32.mrb[0].mxu0
      %1118 = vmatprep.mubr.f32.mxu0 0.0
      %1119 = vmatmul.mubr.f32.gmra.mrb[0].mxu0 %v969
      %v1120 = vpop.f32.mrb[0].mxu0
      %v1121 = vadd.f32 0.0, %v1120
      %v1122 = vpop.f32.mrb[0].mxu0
      %1123 = vmatprep.mubr.f32.mxu0 0.0
      %1124 = vmatmul.mubr.f32.gmra.mrb[0].mxu0 %v971
      %v1125 = vpop.f32.mrb[0].mxu0
      %v1126 = vadd.f32 0.0, %v1125
      %v1127 = vpop.f32.mrb[0].mxu0
      %1128 = vmatprep.mubr.f32.mxu0 0.0
      %1129 = vmatmul.mubr.f32.gmra.mrb[0].mxu0 %v973
      %v1130 = vpop.f32.mrb[0].mxu0
      %v1131 = vadd.f32 0.0, %v1130
      %v1132 = vpop.f32.mrb[0].mxu0
      %1133 = vmatprep.mubr.f32.mxu0 0.0
      %1134 = vmatmul.mubr.f32.gmra.mrb[0].mxu0 %v975
      %v1135 = vpop.f32.mrb[0].mxu0
      %v1136 = vadd.f32 0.0, %v1135
      %v1137 = vpop.f32.mrb[0].mxu0
      %1138 = vmatprep.mubr.f32.mxu0 0.0
      %1139 = vmatmul.mubr.f32.gmra.mrb[0].mxu0 %v977
      %v1140 = vpop.f32.mrb[0].mxu0
      %v1141 = vadd.f32 0.0, %v1140
      %v1142 = vpop.f32.mrb[0].mxu0
      %1143 = vmatprep.mubr.f32.mxu0 0.0
      %1144 = vmatmul.mubr.f32.gmra.mrb[0].mxu0 %v979
      %v1145 = vpop.f32.mrb[0].mxu0
      %v1146 = vadd.f32 0.0, %v1145
      %v1147 = vpop.f32.mrb[0].mxu0
      %1148 = vmatprep.mubr.f32.mxu0 0.0
      %1149 = vmatmul.mubr.f32.gmra.mrb[0].mxu0 %v981
      %v1150 = vpop.f32.mrb[0].mxu0
      %v1151 = vadd.f32 0.0, %v1150
      %v1152 = vpop.f32.mrb[0].mxu0
      %1153 = vmatprep.mubr.f32.mxu0 0.0
      %1154 = vmatmul.mubr.f32.gmra.mrb[0].mxu0 %v983
      %v1155 = vpop.f32.mrb[0].mxu0
      %v1156 = vadd.f32 0.0, %v1155
      %v1157 = vpop.f32.mrb[0].mxu0
      %1158 = vmatprep.mubr.f32.mxu0 0.0
      %1159 = vmatmul.mubr.f32.gmra.mrb[0].mxu0 %v985
      %v1160 = vpop.f32.mrb[0].mxu0
      %v1161 = vadd.f32 0.0, %v1160
      %v1162 = vpop.f32.mrb[0].mxu0
      %1163 = vmatprep.mubr.f32.mxu0 0.0
      %1164 = vmatmul.mubr.f32.gmra.mrb[0].mxu0 %v987
      %v1165 = vpop.f32.mrb[0].mxu0
      %v1166 = vadd.f32 0.0, %v1165
      %v1167 = vpop.f32.mrb[0].mxu0
      %1168 = vmatprep.mubr.f32.mxu0 0.0
      %1169 = vmatmul.mubr.f32.gmra.mrb[0].mxu0 %v989
      %v1170 = vpop.f32.mrb[0].mxu0
      %v1171 = vadd.f32 0.0, %v1170
      %v1172 = vpop.f32.mrb[0].mxu0
      %1173 = vmatprep.mubr.f32.mxu0 0.0
      %1174 = vmatmul.mubr.f32.gmra.mrb[0].mxu0 %v991
      %v1175 = vpop.f32.mrb[0].mxu0
      %v1176 = vadd.f32 0.0, %v1175
      %v1177 = vpop.f32.mrb[0].mxu0
      %1178 = vmatprep.mubr.f32.mxu0 0.0
      %1179 = vmatmul.mubr.f32.gmra.mrb[0].mxu0 %v993
      %v1180 = vpop.f32.mrb[0].mxu0
      %v1181 = vadd.f32 0.0, %v1180
      %v1182 = vpop.f32.mrb[0].mxu0
      %1183 = vmatprep.mubr.f32.mxu0 0.0
      %1184 = vmatmul.mubr.f32.gmra.mrb[0].mxu0 %v995
      %v1185 = vpop.f32.mrb[0].mxu0
      %v1186 = vadd.f32 0.0, %v1185
      %v1187 = vpop.f32.mrb[0].mxu0
      %1188 = vmatprep.mubr.f32.mxu0 0.0
      %1189 = vmatmul.mubr.f32.gmra.mrb[0].mxu0 %v997
      %v1190 = vpop.f32.mrb[0].mxu0
      %v1191 = vadd.f32 0.0, %v1190
      %v1192 = vpop.f32.mrb[0].mxu0
      %1193 = vmatprep.mubr.f32.mxu0 0.0
      %1194 = vmatmul.mubr.f32.gmra.mrb[0].mxu0 %v999
      %v1195 = vpop.f32.mrb[0].mxu0
      %v1196 = vadd.f32 0.0, %v1195
      %v1197 = vpop.f32.mrb[0].mxu0
      %1198 = vmatprep.mubr.f32.mxu0 0.0
      %1199 = vmatmul.mubr.f32.gmra.mrb[0].mxu0 %v1001
      %v1200 = vpop.f32.mrb[0].mxu0
      %v1201 = vadd.f32 0.0, %v1200
      %v1202 = vpop.f32.mrb[0].mxu0
      %1203 = vmatprep.mubr.f32.mxu0 0.0
      %1204 = vmatmul.mubr.f32.gmra.mrb[0].mxu0 %v1003
      %v1205 = vpop.f32.mrb[0].mxu0
      %v1206 = vadd.f32 0.0, %v1205
      %v1207 = vpop.f32.mrb[0].mxu0
      %1208 = vmatprep.mubr.f32.mxu0 0.0
      %1209 = vmatmul.mubr.f32.gmra.mrb[0].mxu0 %v1005
      %v1210 = vpop.f32.mrb[0].mxu0
      %v1211 = vadd.f32 0.0, %v1210
      %v1212 = vpop.f32.mrb[0].mxu0
      %1213 = vmatprep.mubr.f32.mxu0 0.0
      %1214 = vmatmul.mubr.f32.gmra.mrb[0].mxu0 %v1007
      %v1215 = vpop.f32.mrb[0].mxu0
      %v1216 = vadd.f32 0.0, %v1215
      %v1217 = vpop.f32.mrb[0].mxu0
      %1218 = vmatprep.mubr.f32.mxu0 0.0
      %1219 = vmatmul.mubr.f32.gmra.mrb[0].mxu0 %v1009
      %v1220 = vpop.f32.mrb[0].mxu0
      %v1221 = vadd.f32 0.0, %v1220
      %v1222 = vpop.f32.mrb[0].mxu0
      %1223 = vmatprep.mubr.f32.mxu0 0.0
      %1224 = vmatmul.mubr.f32.gmra.mrb[0].mxu0 %v1011
      %v1225 = vpop.f32.mrb[0].mxu0
      %v1226 = vadd.f32 0.0, %v1225
      %v1227 = vpop.f32.mrb[0].mxu0
      %1228 = vmatprep.mubr.f32.mxu0 0.0
      %1229 = vmatmul.mubr.f32.gmra.mrb[0].mxu0 %v1013
      %v1230 = vpop.f32.mrb[0].mxu0
      %v1231 = vadd.f32 0.0, %v1230
      %v1232 = vpop.f32.mrb[0].mxu0
      %1233 = vmatprep.mubr.f32.mxu0 0.0
      %1234 = vmatmul.mubr.f32.gmra.mrb[0].mxu0 %v1015
      %v1235 = vpop.f32.mrb[0].mxu0
      %v1236 = vadd.f32 0.0, %v1235
      %v1237 = vpop.f32.mrb[0].mxu0
      %1238 = vmatprep.mubr.f32.mxu0 0.0
      %1239 = vmatmul.mubr.f32.gmra.mrb[0].mxu0 %v1017
      %v1240 = vpop.f32.mrb[0].mxu0
      %v1241 = vadd.f32 0.0, %v1240
      %v1242 = vpop.f32.mrb[0].mxu0
      %1243 = vmatprep.mubr.f32.mxu0 0.0
      %1244 = vmatmul.mubr.f32.gmra.mrb[0].mxu0 %v1019
      %v1245 = vpop.f32.mrb[0].mxu0
      %v1246 = vadd.f32 0.0, %v1245
      %v1247 = vpop.f32.mrb[0].mxu0
      %1248 = vdwg.mxu0
      %v1249 = vadd.f32 %v734, %v1091
      %v1250 = vadd.f32 %v739, %v1096
      %v1251 = vadd.f32 %v744, %v1101
      %v1252 = vadd.f32 %v749, %v1106
      %v1253 = vadd.f32 %v754, %v1111
      %v1254 = vadd.f32 %v759, %v1116
      %v1255 = vadd.f32 %v764, %v1121
      %v1256 = vadd.f32 %v769, %v1126
      %v1257 = vadd.f32 %v774, %v1131
      %v1258 = vadd.f32 %v779, %v1136
      %v1259 = vadd.f32 %v784, %v1141
      %v1260 = vadd.f32 %v789, %v1146
      %v1261 = vadd.f32 %v794, %v1151
      %v1262 = vadd.f32 %v799, %v1156
      %v1263 = vadd.f32 %v804, %v1161
      %v1264 = vadd.f32 %v809, %v1166
      %v1265 = vadd.f32 %v814, %v1171
      %v1266 = vadd.f32 %v819, %v1176
      %v1267 = vadd.f32 %v824, %v1181
      %v1268 = vadd.f32 %v829, %v1186
      %v1269 = vadd.f32 %v834, %v1191
      %v1270 = vadd.f32 %v839, %v1196
      %v1271 = vadd.f32 %v844, %v1201
      %v1272 = vadd.f32 %v849, %v1206
      %v1273 = vadd.f32 %v854, %v1211
      %v1274 = vadd.f32 %v859, %v1216
      %v1275 = vadd.f32 %v864, %v1221
      %v1276 = vadd.f32 %v869, %v1226
      %v1277 = vadd.f32 %v874, %v1231
      %v1278 = vadd.f32 %v879, %v1236
      %v1279 = vadd.f32 %v884, %v1241
      %v1280 = vadd.f32 %v889, %v1246
      %s1281 = scalar_lea.vmem %s169, 16
      %v1282 = vld [vmem:[%s1281] sm:$0xff]
      %v1283 = vld [vmem:[%s1281 + $0x10] sm:$0xff]
      %v1284 = vld [vmem:[%s1281 + $0x20] sm:$0xff]
      %v1285 = vld [vmem:[%s1281 + $0x30] sm:$0xff]
      %v1286 = vld [vmem:[%s1281 + $0x40] sm:$0xff]
      %v1287 = vld [vmem:[%s1281 + $0x50] sm:$0xff]
      %v1288 = vld [vmem:[%s1281 + $0x60] sm:$0xff]
      %v1289 = vld [vmem:[%s1281 + $0x70] sm:$0xff]
      %v1290 = vld [vmem:[%s1281 + $0x90] sm:$0xff]
      %v1291 = vld [vmem:[%s1281 + $0xa0] sm:$0xff]
      %v1292 = vld [vmem:[%s1281 + $0xb0] sm:$0xff]
      %v1293 = vld [vmem:[%s1281 + $0xc0] sm:$0xff]
      %v1294 = vld [vmem:[%s1281 + $0xd0] sm:$0xff]
      %v1295 = vld [vmem:[%s1281 + $0xe0] sm:$0xff]
      %v1296 = vld [vmem:[%s1281 + $0xf0] sm:$0xff]
      %v1297 = vld [vmem:[%s1281 + $0x100] sm:$0xff]
      %v1298 = vld [vmem:[%s1281 + $0x120] sm:$0xff]
      %v1299 = vld [vmem:[%s1281 + $0x130] sm:$0xff]
      %v1300 = vld [vmem:[%s1281 + $0x140] sm:$0xff]
      %v1301 = vld [vmem:[%s1281 + $0x150] sm:$0xff]
      %v1302 = vld [vmem:[%s1281 + $0x160] sm:$0xff]
      %v1303 = vld [vmem:[%s1281 + $0x170] sm:$0xff]
      %v1304 = vld [vmem:[%s1281 + $0x180] sm:$0xff]
      %v1305 = vld [vmem:[%s1281 + $0x190] sm:$0xff]
      %v1306 = vld [vmem:[%s1281 + $0x1b0] sm:$0xff]
      %v1307 = vld [vmem:[%s1281 + $0x1c0] sm:$0xff]
      %v1308 = vld [vmem:[%s1281 + $0x1d0] sm:$0xff]
      %v1309 = vld [vmem:[%s1281 + $0x1e0] sm:$0xff]
      %v1310 = vld [vmem:[%s1281 + $0x1f0] sm:$0xff]
      %v1311 = vld [vmem:[%s1281 + $0x200] sm:$0xff]
      %v1312 = vld [vmem:[%s1281 + $0x210] sm:$0xff]
      %v1313 = vld [vmem:[%s1281 + $0x220] sm:$0xff]
      %v1314 = vld [vmem:[%s1 + $0x18] sm:$0xff]
      %vm1315 = vcmask 64512
      %v1317 = vsel %vm1315, %v1282, 0
      %v1320 = vsel %vm1315, %v1283, 0
      %v1323 = vsel %vm1315, %v1284, 0
      %v1326 = vsel %vm1315, %v1285, 0
      %v1329 = vsel %vm1315, %v1286, 0
      %v1332 = vsel %vm1315, %v1287, 0
      %v1335 = vsel %vm1315, %v1288, 0
      %v1338 = vsel %vm1315, %v1289, 0
      %v1341 = vsel %vm1315, %v1290, 0
      %v1344 = vsel %vm1315, %v1291, 0
      %v1347 = vsel %vm1315, %v1292, 0
      %v1350 = vsel %vm1315, %v1293, 0
      %v1353 = vsel %vm1315, %v1294, 0
      %v1356 = vsel %vm1315, %v1295, 0
      %v1359 = vsel %vm1315, %v1296, 0
      %v1362 = vsel %vm1315, %v1297, 0
      %v1365 = vsel %vm1315, %v1298, 0
      %v1368 = vsel %vm1315, %v1299, 0
      %v1371 = vsel %vm1315, %v1300, 0
      %v1374 = vsel %vm1315, %v1301, 0
      %v1377 = vsel %vm1315, %v1302, 0
      %v1380 = vsel %vm1315, %v1303, 0
      %v1383 = vsel %vm1315, %v1304, 0
      %v1386 = vsel %vm1315, %v1305, 0
      %v1389 = vsel %vm1315, %v1306, 0
      %v1392 = vsel %vm1315, %v1307, 0
      %v1395 = vsel %vm1315, %v1308, 0
      %v1398 = vsel %vm1315, %v1309, 0
      %v1401 = vsel %vm1315, %v1310, 0
      %v1404 = vsel %vm1315, %v1311, 0
      %v1407 = vsel %vm1315, %v1312, 0
      %v1410 = vsel %vm1315, %v1313, 0
      %1412 = vmatprep.subr.mxu0 0.0
      %1413 = vmatpush1.msra.mxu0 %v1314
      %1414 = vmatprep.subr.mxu0 0.0
      %1415 = vmatpush1.msra.mxu0 0.0
      %1416 = vmatprep.subr.mxu0 0.0
      %1417 = vmatpush1.msra.mxu0 0.0
      %1418 = vmatprep.subr.mxu0 0.0
      %1419 = vmatpush1.msra.mxu0 0.0
      %1420 = vmatprep.subr.mxu0 0.0
      %1421 = vmatpush1.msra.mxu0 0.0
      %1422 = vmatprep.subr.mxu0 0.0
      %1423 = vmatpush1.msra.mxu0 0.0
      %1424 = vmatprep.subr.mxu0 0.0
      %1425 = vmatpush1.msra.mxu0 0.0
      %1426 = vmatprep.subr.mxu0 0.0
      %1427 = vmatpush1.msra.mxu0 0.0
      %1428 = vmatprep.subr.mxu0 0.0
      %1429 = vmatpush1.msra.mxu0 0.0
      %1430 = vmatprep.subr.mxu0 0.0
      %1431 = vmatpush1.msra.mxu0 0.0
      %1432 = vmatprep.subr.mxu0 0.0
      %1433 = vmatpush1.msra.mxu0 0.0
      %1434 = vmatprep.subr.mxu0 0.0
      %1435 = vmatpush1.msra.mxu0 0.0
      %1436 = vmatprep.subr.mxu0 0.0
      %1437 = vmatpush1.msra.mxu0 0.0
      %1438 = vmatprep.subr.mxu0 0.0
      %1439 = vmatpush1.msra.mxu0 0.0
      %1440 = vmatprep.subr.mxu0 0.0
      %1441 = vmatpush1.msra.mxu0 0.0
      %1442 = vmatprep.subr.mxu0 0.0
      %1443 = vmatpush1.msra.mxu0 0.0
      %1444 = vmatprep.subr.mxu0 0.0
      %1445 = vmatpush1.msra.mxu0 0.0
      %1446 = vmatprep.subr.mxu0 0.0
      %1447 = vmatpush1.msra.mxu0 0.0
      %1448 = vmatprep.subr.mxu0 0.0
      %1449 = vmatpush1.msra.mxu0 0.0
      %1450 = vmatprep.subr.mxu0 0.0
      %1451 = vmatpush1.msra.mxu0 0.0
      %1452 = vmatprep.subr.mxu0 0.0
      %1453 = vmatpush1.msra.mxu0 0.0
      %1454 = vmatprep.subr.mxu0 0.0
      %1455 = vmatpush1.msra.mxu0 0.0
      %1456 = vmatprep.subr.mxu0 0.0
      %1457 = vmatpush1.msra.mxu0 0.0
      %1458 = vmatprep.subr.mxu0 0.0
      %1459 = vmatpush1.msra.mxu0 0.0
      %1460 = vmatprep.subr.mxu0 0.0
      %1461 = vmatpush1.msra.mxu0 0.0
      %1462 = vmatprep.subr.mxu0 0.0
      %1463 = vmatpush1.msra.mxu0 0.0
      %1464 = vmatprep.subr.mxu0 0.0
      %1465 = vmatpush1.msra.mxu0 0.0
      %1466 = vmatprep.subr.mxu0 0.0
      %1467 = vmatpush1.msra.mxu0 0.0
      %1468 = vmatprep.subr.mxu0 0.0
      %1469 = vmatpush1.msra.mxu0 0.0
      %1470 = vmatprep.subr.mxu0 0.0
      %1471 = vmatpush1.msra.mxu0 0.0
      %1472 = vmatprep.subr.mxu0 0.0
      %1473 = vmatpush1.msra.mxu0 0.0
      %1474 = vmatprep.subr.mxu0 0.0
      %1475 = vmatpush1.msra.mxu0 0.0
      %1476 = vmatprep.mubr.f32.mxu0 0.0
      %1477 = vmatmul.mubr.f32.gmra.mrb[0].mxu0 %v1317
      %v1478 = vpop.f32.mrb[0].mxu0
      %v1479 = vadd.f32 0.0, %v1478
      %v1480 = vpop.f32.mrb[0].mxu0
      %1481 = vmatprep.mubr.f32.mxu0 0.0
      %1482 = vmatmul.mubr.f32.gmra.mrb[0].mxu0 %v1320
      %v1483 = vpop.f32.mrb[0].mxu0
      %v1484 = vadd.f32 0.0, %v1483
      %v1485 = vpop.f32.mrb[0].mxu0
      %1486 = vmatprep.mubr.f32.mxu0 0.0
      %1487 = vmatmul.mubr.f32.gmra.mrb[0].mxu0 %v1323
      %v1488 = vpop.f32.mrb[0].mxu0
      %v1489 = vadd.f32 0.0, %v1488
      %v1490 = vpop.f32.mrb[0].mxu0
      %1491 = vmatprep.mubr.f32.mxu0 0.0
      %1492 = vmatmul.mubr.f32.gmra.mrb[0].mxu0 %v1326
      %v1493 = vpop.f32.mrb[0].mxu0
      %v1494 = vadd.f32 0.0, %v1493
      %v1495 = vpop.f32.mrb[0].mxu0
      %1496 = vmatprep.mubr.f32.mxu0 0.0
      %1497 = vmatmul.mubr.f32.gmra.mrb[0].mxu0 %v1329
      %v1498 = vpop.f32.mrb[0].mxu0
      %v1499 = vadd.f32 0.0, %v1498
      %v1500 = vpop.f32.mrb[0].mxu0
      %1501 = vmatprep.mubr.f32.mxu0 0.0
      %1502 = vmatmul.mubr.f32.gmra.mrb[0].mxu0 %v1332
      %v1503 = vpop.f32.mrb[0].mxu0
      %v1504 = vadd.f32 0.0, %v1503
      %v1505 = vpop.f32.mrb[0].mxu0
      %1506 = vmatprep.mubr.f32.mxu0 0.0
      %1507 = vmatmul.mubr.f32.gmra.mrb[0].mxu0 %v1335
      %v1508 = vpop.f32.mrb[0].mxu0
      %v1509 = vadd.f32 0.0, %v1508
      %v1510 = vpop.f32.mrb[0].mxu0
      %1511 = vmatprep.mubr.f32.mxu0 0.0
      %1512 = vmatmul.mubr.f32.gmra.mrb[0].mxu0 %v1338
      %v1513 = vpop.f32.mrb[0].mxu0
      %v1514 = vadd.f32 0.0, %v1513
      %v1515 = vpop.f32.mrb[0].mxu0
      %1516 = vmatprep.mubr.f32.mxu0 0.0
      %1517 = vmatmul.mubr.f32.gmra.mrb[0].mxu0 %v1341
      %v1518 = vpop.f32.mrb[0].mxu0
      %v1519 = vadd.f32 0.0, %v1518
      %v1520 = vpop.f32.mrb[0].mxu0
      %1521 = vmatprep.mubr.f32.mxu0 0.0
      %1522 = vmatmul.mubr.f32.gmra.mrb[0].mxu0 %v1344
      %v1523 = vpop.f32.mrb[0].mxu0
      %v1524 = vadd.f32 0.0, %v1523
      %v1525 = vpop.f32.mrb[0].mxu0
      %1526 = vmatprep.mubr.f32.mxu0 0.0
      %1527 = vmatmul.mubr.f32.gmra.mrb[0].mxu0 %v1347
      %v1528 = vpop.f32.mrb[0].mxu0
      %v1529 = vadd.f32 0.0, %v1528
      %v1530 = vpop.f32.mrb[0].mxu0
      %1531 = vmatprep.mubr.f32.mxu0 0.0
      %1532 = vmatmul.mubr.f32.gmra.mrb[0].mxu0 %v1350
      %v1533 = vpop.f32.mrb[0].mxu0
      %v1534 = vadd.f32 0.0, %v1533
      %v1535 = vpop.f32.mrb[0].mxu0
      %1536 = vmatprep.mubr.f32.mxu0 0.0
      %1537 = vmatmul.mubr.f32.gmra.mrb[0].mxu0 %v1353
      %v1538 = vpop.f32.mrb[0].mxu0
      %v1539 = vadd.f32 0.0, %v1538
      %v1540 = vpop.f32.mrb[0].mxu0
      %1541 = vmatprep.mubr.f32.mxu0 0.0
      %1542 = vmatmul.mubr.f32.gmra.mrb[0].mxu0 %v1356
      %v1543 = vpop.f32.mrb[0].mxu0
      %v1544 = vadd.f32 0.0, %v1543
      %v1545 = vpop.f32.mrb[0].mxu0
      %1546 = vmatprep.mubr.f32.mxu0 0.0
      %1547 = vmatmul.mubr.f32.gmra.mrb[0].mxu0 %v1359
      %v1548 = vpop.f32.mrb[0].mxu0
      %v1549 = vadd.f32 0.0, %v1548
      %v1550 = vpop.f32.mrb[0].mxu0
      %1551 = vmatprep.mubr.f32.mxu0 0.0
      %1552 = vmatmul.mubr.f32.gmra.mrb[0].mxu0 %v1362
      %v1553 = vpop.f32.mrb[0].mxu0
      %v1554 = vadd.f32 0.0, %v1553
      %v1555 = vpop.f32.mrb[0].mxu0
      %1556 = vmatprep.mubr.f32.mxu0 0.0
      %1557 = vmatmul.mubr.f32.gmra.mrb[0].mxu0 %v1365
      %v1558 = vpop.f32.mrb[0].mxu0
      %v1559 = vadd.f32 0.0, %v1558
      %v1560 = vpop.f32.mrb[0].mxu0
      %1561 = vmatprep.mubr.f32.mxu0 0.0
      %1562 = vmatmul.mubr.f32.gmra.mrb[0].mxu0 %v1368
      %v1563 = vpop.f32.mrb[0].mxu0
      %v1564 = vadd.f32 0.0, %v1563
      %v1565 = vpop.f32.mrb[0].mxu0
      %1566 = vmatprep.mubr.f32.mxu0 0.0
      %1567 = vmatmul.mubr.f32.gmra.mrb[0].mxu0 %v1371
      %v1568 = vpop.f32.mrb[0].mxu0
      %v1569 = vadd.f32 0.0, %v1568
      %v1570 = vpop.f32.mrb[0].mxu0
      %1571 = vmatprep.mubr.f32.mxu0 0.0
      %1572 = vmatmul.mubr.f32.gmra.mrb[0].mxu0 %v1374
      %v1573 = vpop.f32.mrb[0].mxu0
      %v1574 = vadd.f32 0.0, %v1573
      %v1575 = vpop.f32.mrb[0].mxu0
      %1576 = vmatprep.mubr.f32.mxu0 0.0
      %1577 = vmatmul.mubr.f32.gmra.mrb[0].mxu0 %v1377
      %v1578 = vpop.f32.mrb[0].mxu0
      %v1579 = vadd.f32 0.0, %v1578
      %v1580 = vpop.f32.mrb[0].mxu0
      %1581 = vmatprep.mubr.f32.mxu0 0.0
      %1582 = vmatmul.mubr.f32.gmra.mrb[0].mxu0 %v1380
      %v1583 = vpop.f32.mrb[0].mxu0
      %v1584 = vadd.f32 0.0, %v1583
      %v1585 = vpop.f32.mrb[0].mxu0
      %1586 = vmatprep.mubr.f32.mxu0 0.0
      %1587 = vmatmul.mubr.f32.gmra.mrb[0].mxu0 %v1383
      %v1588 = vpop.f32.mrb[0].mxu0
      %v1589 = vadd.f32 0.0, %v1588
      %v1590 = vpop.f32.mrb[0].mxu0
      %1591 = vmatprep.mubr.f32.mxu0 0.0
      %1592 = vmatmul.mubr.f32.gmra.mrb[0].mxu0 %v1386
      %v1593 = vpop.f32.mrb[0].mxu0
      %v1594 = vadd.f32 0.0, %v1593
      %v1595 = vpop.f32.mrb[0].mxu0
      %1596 = vmatprep.mubr.f32.mxu0 0.0
      %1597 = vmatmul.mubr.f32.gmra.mrb[0].mxu0 %v1389
      %v1598 = vpop.f32.mrb[0].mxu0
      %v1599 = vadd.f32 0.0, %v1598
      %v1600 = vpop.f32.mrb[0].mxu0
      %1601 = vmatprep.mubr.f32.mxu0 0.0
      %1602 = vmatmul.mubr.f32.gmra.mrb[0].mxu0 %v1392
      %v1603 = vpop.f32.mrb[0].mxu0
      %v1604 = vadd.f32 0.0, %v1603
      %v1605 = vpop.f32.mrb[0].mxu0
      %1606 = vmatprep.mubr.f32.mxu0 0.0
      %1607 = vmatmul.mubr.f32.gmra.mrb[0].mxu0 %v1395
      %v1608 = vpop.f32.mrb[0].mxu0
      %v1609 = vadd.f32 0.0, %v1608
      %v1610 = vpop.f32.mrb[0].mxu0
      %1611 = vmatprep.mubr.f32.mxu0 0.0
      %1612 = vmatmul.mubr.f32.gmra.mrb[0].mxu0 %v1398
      %v1613 = vpop.f32.mrb[0].mxu0
      %v1614 = vadd.f32 0.0, %v1613
      %v1615 = vpop.f32.mrb[0].mxu0
      %1616 = vmatprep.mubr.f32.mxu0 0.0
      %1617 = vmatmul.mubr.f32.gmra.mrb[0].mxu0 %v1401
      %v1618 = vpop.f32.mrb[0].mxu0
      %v1619 = vadd.f32 0.0, %v1618
      %v1620 = vpop.f32.mrb[0].mxu0
      %1621 = vmatprep.mubr.f32.mxu0 0.0
      %1622 = vmatmul.mubr.f32.gmra.mrb[0].mxu0 %v1404
      %v1623 = vpop.f32.mrb[0].mxu0
      %v1624 = vadd.f32 0.0, %v1623
      %v1625 = vpop.f32.mrb[0].mxu0
      %1626 = vmatprep.mubr.f32.mxu0 0.0
      %1627 = vmatmul.mubr.f32.gmra.mrb[0].mxu0 %v1407
      %v1628 = vpop.f32.mrb[0].mxu0
      %v1629 = vadd.f32 0.0, %v1628
      %v1630 = vpop.f32.mrb[0].mxu0
      %1631 = vmatprep.mubr.f32.mxu0 0.0
      %1632 = vmatmul.mubr.f32.gmra.mrb[0].mxu0 %v1410
      %v1633 = vpop.f32.mrb[0].mxu0
      %v1634 = vadd.f32 0.0, %v1633
      %v1635 = vpop.f32.mrb[0].mxu0
      %1636 = vdwg.mxu0
      %v1637 = vadd.f32 %v1249, %v1479
      %v1638 = vadd.f32 %v1250, %v1484
      %v1639 = vadd.f32 %v1251, %v1489
      %v1640 = vadd.f32 %v1252, %v1494
      %v1641 = vadd.f32 %v1253, %v1499
      %v1642 = vadd.f32 %v1254, %v1504
      %v1643 = vadd.f32 %v1255, %v1509
      %v1644 = vadd.f32 %v1256, %v1514
      %v1645 = vadd.f32 %v1257, %v1519
      %v1646 = vadd.f32 %v1258, %v1524
      %v1647 = vadd.f32 %v1259, %v1529
      %v1648 = vadd.f32 %v1260, %v1534
      %v1649 = vadd.f32 %v1261, %v1539
      %v1650 = vadd.f32 %v1262, %v1544
      %v1651 = vadd.f32 %v1263, %v1549
      %v1652 = vadd.f32 %v1264, %v1554
      %v1653 = vadd.f32 %v1265, %v1559
      %v1654 = vadd.f32 %v1266, %v1564
      %v1655 = vadd.f32 %v1267, %v1569
      %v1656 = vadd.f32 %v1268, %v1574
      %v1657 = vadd.f32 %v1269, %v1579
      %v1658 = vadd.f32 %v1270, %v1584
      %v1659 = vadd.f32 %v1271, %v1589
      %v1660 = vadd.f32 %v1272, %v1594
      %v1661 = vadd.f32 %v1273, %v1599
      %v1662 = vadd.f32 %v1274, %v1604
      %v1663 = vadd.f32 %v1275, %v1609
      %v1664 = vadd.f32 %v1276, %v1614
      %v1665 = vadd.f32 %v1277, %v1619
      %v1666 = vadd.f32 %v1278, %v1624
      %v1667 = vadd.f32 %v1279, %v1629
      %v1668 = vadd.f32 %v1280, %v1634
      %v1669 = vld [vmem:[%s1281 + $0x1] sm:$0xff]
      %v1670 = vld [vmem:[%s1281 + $0x11] sm:$0xff]
      %v1671 = vld [vmem:[%s1281 + $0x21] sm:$0xff]
      %v1672 = vld [vmem:[%s1281 + $0x31] sm:$0xff]
      %v1673 = vld [vmem:[%s1281 + $0x41] sm:$0xff]
      %v1674 = vld [vmem:[%s1281 + $0x51] sm:$0xff]
      %v1675 = vld [vmem:[%s1281 + $0x61] sm:$0xff]
      %v1676 = vld [vmem:[%s1281 + $0x71] sm:$0xff]
      %v1677 = vld [vmem:[%s1281 + $0x91] sm:$0xff]
      %v1678 = vld [vmem:[%s1281 + $0xa1] sm:$0xff]
      %v1679 = vld [vmem:[%s1281 + $0xb1] sm:$0xff]
      %v1680 = vld [vmem:[%s1281 + $0xc1] sm:$0xff]
      %v1681 = vld [vmem:[%s1281 + $0xd1] sm:$0xff]
      %v1682 = vld [vmem:[%s1281 + $0xe1] sm:$0xff]
      %v1683 = vld [vmem:[%s1281 + $0xf1] sm:$0xff]
      %v1684 = vld [vmem:[%s1281 + $0x101] sm:$0xff]
      %v1685 = vld [vmem:[%s1281 + $0x121] sm:$0xff]
      %v1686 = vld [vmem:[%s1281 + $0x131] sm:$0xff]
      %v1687 = vld [vmem:[%s1281 + $0x141] sm:$0xff]
      %v1688 = vld [vmem:[%s1281 + $0x151] sm:$0xff]
      %v1689 = vld [vmem:[%s1281 + $0x161] sm:$0xff]
      %v1690 = vld [vmem:[%s1281 + $0x171] sm:$0xff]
      %v1691 = vld [vmem:[%s1281 + $0x181] sm:$0xff]
      %v1692 = vld [vmem:[%s1281 + $0x191] sm:$0xff]
      %v1693 = vld [vmem:[%s1281 + $0x1b1] sm:$0xff]
      %v1694 = vld [vmem:[%s1281 + $0x1c1] sm:$0xff]
      %v1695 = vld [vmem:[%s1281 + $0x1d1] sm:$0xff]
      %v1696 = vld [vmem:[%s1281 + $0x1e1] sm:$0xff]
      %v1697 = vld [vmem:[%s1281 + $0x1f1] sm:$0xff]
      %v1698 = vld [vmem:[%s1281 + $0x201] sm:$0xff]
      %v1699 = vld [vmem:[%s1281 + $0x211] sm:$0xff]
      %v1700 = vld [vmem:[%s1281 + $0x221] sm:$0xff]
      %v1701 = vld [vmem:[%s1 + $0x20] sm:$0xf]
      %v1703 = vsel %vm244, %v1669, 0
      %v1706 = vsel %vm244, %v1670, 0
      %v1709 = vsel %vm244, %v1671, 0
      %v1712 = vsel %vm244, %v1672, 0
      %v1715 = vsel %vm244, %v1673, 0
      %v1718 = vsel %vm244, %v1674, 0
      %v1721 = vsel %vm244, %v1675, 0
      %v1724 = vsel %vm244, %v1676, 0
      %v1727 = vsel %vm244, %v1677, 0
      %v1730 = vsel %vm244, %v1678, 0
      %v1733 = vsel %vm244, %v1679, 0
      %v1736 = vsel %vm244, %v1680, 0
      %v1739 = vsel %vm244, %v1681, 0
      %v1742 = vsel %vm244, %v1682, 0
      %v1745 = vsel %vm244, %v1683, 0
      %v1748 = vsel %vm244, %v1684, 0
      %v1751 = vsel %vm244, %v1685, 0
      %v1754 = vsel %vm244, %v1686, 0
      %v1757 = vsel %vm244, %v1687, 0
      %v1760 = vsel %vm244, %v1688, 0
      %v1763 = vsel %vm244, %v1689, 0
      %v1766 = vsel %vm244, %v1690, 0
      %v1769 = vsel %vm244, %v1691, 0
      %v1772 = vsel %vm244, %v1692, 0
      %v1775 = vsel %vm244, %v1693, 0
      %v1778 = vsel %vm244, %v1694, 0
      %v1781 = vsel %vm244, %v1695, 0
      %v1784 = vsel %vm244, %v1696, 0
      %v1787 = vsel %vm244, %v1697, 0
      %v1790 = vsel %vm244, %v1698, 0
      %v1793 = vsel %vm244, %v1699, 0
      %v1796 = vsel %vm244, %v1700, 0
      %v1799 = vsel %vm341, %v1701, 0
      %1801 = vmatprep.subr.mxu0 0.0
      %1802 = vmatpush1.msra.mxu0 %v1799
      %1803 = vmatprep.subr.mxu0 0.0
      %1804 = vmatpush1.msra.mxu0 0.0
      %1805 = vmatprep.subr.mxu0 0.0
      %1806 = vmatpush1.msra.mxu0 0.0
      %1807 = vmatprep.subr.mxu0 0.0
      %1808 = vmatpush1.msra.mxu0 0.0
      %1809 = vmatprep.subr.mxu0 0.0
      %1810 = vmatpush1.msra.mxu0 0.0
      %1811 = vmatprep.subr.mxu0 0.0
      %1812 = vmatpush1.msra.mxu0 0.0
      %1813 = vmatprep.subr.mxu0 0.0
      %1814 = vmatpush1.msra.mxu0 0.0
      %1815 = vmatprep.subr.mxu0 0.0
      %1816 = vmatpush1.msra.mxu0 0.0
      %1817 = vmatprep.subr.mxu0 0.0
      %1818 = vmatpush1.msra.mxu0 0.0
      %1819 = vmatprep.subr.mxu0 0.0
      %1820 = vmatpush1.msra.mxu0 0.0
      %1821 = vmatprep.subr.mxu0 0.0
      %1822 = vmatpush1.msra.mxu0 0.0
      %1823 = vmatprep.subr.mxu0 0.0
      %1824 = vmatpush1.msra.mxu0 0.0
      %1825 = vmatprep.subr.mxu0 0.0
      %1826 = vmatpush1.msra.mxu0 0.0
      %1827 = vmatprep.subr.mxu0 0.0
      %1828 = vmatpush1.msra.mxu0 0.0
      %1829 = vmatprep.subr.mxu0 0.0
      %1830 = vmatpush1.msra.mxu0 0.0
      %1831 = vmatprep.subr.mxu0 0.0
      %1832 = vmatpush1.msra.mxu0 0.0
      %1833 = vmatprep.subr.mxu0 0.0
      %1834 = vmatpush1.msra.mxu0 0.0
      %1835 = vmatprep.subr.mxu0 0.0
      %1836 = vmatpush1.msra.mxu0 0.0
      %1837 = vmatprep.subr.mxu0 0.0
      %1838 = vmatpush1.msra.mxu0 0.0
      %1839 = vmatprep.subr.mxu0 0.0
      %1840 = vmatpush1.msra.mxu0 0.0
      %1841 = vmatprep.subr.mxu0 0.0
      %1842 = vmatpush1.msra.mxu0 0.0
      %1843 = vmatprep.subr.mxu0 0.0
      %1844 = vmatpush1.msra.mxu0 0.0
      %1845 = vmatprep.subr.mxu0 0.0
      %1846 = vmatpush1.msra.mxu0 0.0
      %1847 = vmatprep.subr.mxu0 0.0
      %1848 = vmatpush1.msra.mxu0 0.0
      %1849 = vmatprep.subr.mxu0 0.0
      %1850 = vmatpush1.msra.mxu0 0.0
      %1851 = vmatprep.subr.mxu0 0.0
      %1852 = vmatpush1.msra.mxu0 0.0
      %1853 = vmatprep.subr.mxu0 0.0
      %1854 = vmatpush1.msra.mxu0 0.0
      %1855 = vmatprep.subr.mxu0 0.0
      %1856 = vmatpush1.msra.mxu0 0.0
      %1857 = vmatprep.subr.mxu0 0.0
      %1858 = vmatpush1.msra.mxu0 0.0
      %1859 = vmatprep.subr.mxu0 0.0
      %1860 = vmatpush1.msra.mxu0 0.0
      %1861 = vmatprep.subr.mxu0 0.0
      %1862 = vmatpush1.msra.mxu0 0.0
      %1863 = vmatprep.subr.mxu0 0.0
      %1864 = vmatpush1.msra.mxu0 0.0
      %1865 = vmatprep.mubr.f32.mxu0 0.0
      %1866 = vmatmul.mubr.f32.gmra.mrb[0].mxu0 %v1703
      %v1867 = vpop.f32.mrb[0].mxu0
      %v1868 = vadd.f32 0.0, %v1867
      %v1869 = vpop.f32.mrb[0].mxu0
      %1870 = vmatprep.mubr.f32.mxu0 0.0
      %1871 = vmatmul.mubr.f32.gmra.mrb[0].mxu0 %v1706
      %v1872 = vpop.f32.mrb[0].mxu0
      %v1873 = vadd.f32 0.0, %v1872
      %v1874 = vpop.f32.mrb[0].mxu0
      %1875 = vmatprep.mubr.f32.mxu0 0.0
      %1876 = vmatmul.mubr.f32.gmra.mrb[0].mxu0 %v1709
      %v1877 = vpop.f32.mrb[0].mxu0
      %v1878 = vadd.f32 0.0, %v1877
      %v1879 = vpop.f32.mrb[0].mxu0
      %1880 = vmatprep.mubr.f32.mxu0 0.0
      %1881 = vmatmul.mubr.f32.gmra.mrb[0].mxu0 %v1712
      %v1882 = vpop.f32.mrb[0].mxu0
      %v1883 = vadd.f32 0.0, %v1882
      %v1884 = vpop.f32.mrb[0].mxu0
      %1885 = vmatprep.mubr.f32.mxu0 0.0
      %1886 = vmatmul.mubr.f32.gmra.mrb[0].mxu0 %v1715
      %v1887 = vpop.f32.mrb[0].mxu0
      %v1888 = vadd.f32 0.0, %v1887
      %v1889 = vpop.f32.mrb[0].mxu0
      %1890 = vmatprep.mubr.f32.mxu0 0.0
      %1891 = vmatmul.mubr.f32.gmra.mrb[0].mxu0 %v1718
      %v1892 = vpop.f32.mrb[0].mxu0
      %v1893 = vadd.f32 0.0, %v1892
      %v1894 = vpop.f32.mrb[0].mxu0
      %1895 = vmatprep.mubr.f32.mxu0 0.0
      %1896 = vmatmul.mubr.f32.gmra.mrb[0].mxu0 %v1721
      %v1897 = vpop.f32.mrb[0].mxu0
      %v1898 = vadd.f32 0.0, %v1897
      %v1899 = vpop.f32.mrb[0].mxu0
      %1900 = vmatprep.mubr.f32.mxu0 0.0
      %1901 = vmatmul.mubr.f32.gmra.mrb[0].mxu0 %v1724
      %v1902 = vpop.f32.mrb[0].mxu0
      %v1903 = vadd.f32 0.0, %v1902
      %v1904 = vpop.f32.mrb[0].mxu0
      %1905 = vmatprep.mubr.f32.mxu0 0.0
      %1906 = vmatmul.mubr.f32.gmra.mrb[0].mxu0 %v1727
      %v1907 = vpop.f32.mrb[0].mxu0
      %v1908 = vadd.f32 0.0, %v1907
      %v1909 = vpop.f32.mrb[0].mxu0
      %1910 = vmatprep.mubr.f32.mxu0 0.0
      %1911 = vmatmul.mubr.f32.gmra.mrb[0].mxu0 %v1730
      %v1912 = vpop.f32.mrb[0].mxu0
      %v1913 = vadd.f32 0.0, %v1912
      %v1914 = vpop.f32.mrb[0].mxu0
      %1915 = vmatprep.mubr.f32.mxu0 0.0
      %1916 = vmatmul.mubr.f32.gmra.mrb[0].mxu0 %v1733
      %v1917 = vpop.f32.mrb[0].mxu0
      %v1918 = vadd.f32 0.0, %v1917
      %v1919 = vpop.f32.mrb[0].mxu0
      %1920 = vmatprep.mubr.f32.mxu0 0.0
      %1921 = vmatmul.mubr.f32.gmra.mrb[0].mxu0 %v1736
      %v1922 = vpop.f32.mrb[0].mxu0
      %v1923 = vadd.f32 0.0, %v1922
      %v1924 = vpop.f32.mrb[0].mxu0
      %1925 = vmatprep.mubr.f32.mxu0 0.0
      %1926 = vmatmul.mubr.f32.gmra.mrb[0].mxu0 %v1739
      %v1927 = vpop.f32.mrb[0].mxu0
      %v1928 = vadd.f32 0.0, %v1927
      %v1929 = vpop.f32.mrb[0].mxu0
      %1930 = vmatprep.mubr.f32.mxu0 0.0
      %1931 = vmatmul.mubr.f32.gmra.mrb[0].mxu0 %v1742
      %v1932 = vpop.f32.mrb[0].mxu0
      %v1933 = vadd.f32 0.0, %v1932
      %v1934 = vpop.f32.mrb[0].mxu0
      %1935 = vmatprep.mubr.f32.mxu0 0.0
      %1936 = vmatmul.mubr.f32.gmra.mrb[0].mxu0 %v1745
      %v1937 = vpop.f32.mrb[0].mxu0
      %v1938 = vadd.f32 0.0, %v1937
      %v1939 = vpop.f32.mrb[0].mxu0
      %1940 = vmatprep.mubr.f32.mxu0 0.0
      %1941 = vmatmul.mubr.f32.gmra.mrb[0].mxu0 %v1748
      %v1942 = vpop.f32.mrb[0].mxu0
      %v1943 = vadd.f32 0.0, %v1942
      %v1944 = vpop.f32.mrb[0].mxu0
      %1945 = vmatprep.mubr.f32.mxu0 0.0
      %1946 = vmatmul.mubr.f32.gmra.mrb[0].mxu0 %v1751
      %v1947 = vpop.f32.mrb[0].mxu0
      %v1948 = vadd.f32 0.0, %v1947
      %v1949 = vpop.f32.mrb[0].mxu0
      %1950 = vmatprep.mubr.f32.mxu0 0.0
      %1951 = vmatmul.mubr.f32.gmra.mrb[0].mxu0 %v1754
      %v1952 = vpop.f32.mrb[0].mxu0
      %v1953 = vadd.f32 0.0, %v1952
      %v1954 = vpop.f32.mrb[0].mxu0
      %1955 = vmatprep.mubr.f32.mxu0 0.0
      %1956 = vmatmul.mubr.f32.gmra.mrb[0].mxu0 %v1757
      %v1957 = vpop.f32.mrb[0].mxu0
      %v1958 = vadd.f32 0.0, %v1957
      %v1959 = vpop.f32.mrb[0].mxu0
      %1960 = vmatprep.mubr.f32.mxu0 0.0
      %1961 = vmatmul.mubr.f32.gmra.mrb[0].mxu0 %v1760
      %v1962 = vpop.f32.mrb[0].mxu0
      %v1963 = vadd.f32 0.0, %v1962
      %v1964 = vpop.f32.mrb[0].mxu0
      %1965 = vmatprep.mubr.f32.mxu0 0.0
      %1966 = vmatmul.mubr.f32.gmra.mrb[0].mxu0 %v1763
      %v1967 = vpop.f32.mrb[0].mxu0
      %v1968 = vadd.f32 0.0, %v1967
      %v1969 = vpop.f32.mrb[0].mxu0
      %1970 = vmatprep.mubr.f32.mxu0 0.0
      %1971 = vmatmul.mubr.f32.gmra.mrb[0].mxu0 %v1766
      %v1972 = vpop.f32.mrb[0].mxu0
      %v1973 = vadd.f32 0.0, %v1972
      %v1974 = vpop.f32.mrb[0].mxu0
      %1975 = vmatprep.mubr.f32.mxu0 0.0
      %1976 = vmatmul.mubr.f32.gmra.mrb[0].mxu0 %v1769
      %v1977 = vpop.f32.mrb[0].mxu0
      %v1978 = vadd.f32 0.0, %v1977
      %v1979 = vpop.f32.mrb[0].mxu0
      %1980 = vmatprep.mubr.f32.mxu0 0.0
      %1981 = vmatmul.mubr.f32.gmra.mrb[0].mxu0 %v1772
      %v1982 = vpop.f32.mrb[0].mxu0
      %v1983 = vadd.f32 0.0, %v1982
      %v1984 = vpop.f32.mrb[0].mxu0
      %1985 = vmatprep.mubr.f32.mxu0 0.0
      %1986 = vmatmul.mubr.f32.gmra.mrb[0].mxu0 %v1775
      %v1987 = vpop.f32.mrb[0].mxu0
      %v1988 = vadd.f32 0.0, %v1987
      %v1989 = vpop.f32.mrb[0].mxu0
      %1990 = vmatprep.mubr.f32.mxu0 0.0
      %1991 = vmatmul.mubr.f32.gmra.mrb[0].mxu0 %v1778
      %v1992 = vpop.f32.mrb[0].mxu0
      %v1993 = vadd.f32 0.0, %v1992
      %v1994 = vpop.f32.mrb[0].mxu0
      %1995 = vmatprep.mubr.f32.mxu0 0.0
      %1996 = vmatmul.mubr.f32.gmra.mrb[0].mxu0 %v1781
      %v1997 = vpop.f32.mrb[0].mxu0
      %v1998 = vadd.f32 0.0, %v1997
      %v1999 = vpop.f32.mrb[0].mxu0
      %2000 = vmatprep.mubr.f32.mxu0 0.0
      %2001 = vmatmul.mubr.f32.gmra.mrb[0].mxu0 %v1784
      %v2002 = vpop.f32.mrb[0].mxu0
      %v2003 = vadd.f32 0.0, %v2002
      %v2004 = vpop.f32.mrb[0].mxu0
      %2005 = vmatprep.mubr.f32.mxu0 0.0
      %2006 = vmatmul.mubr.f32.gmra.mrb[0].mxu0 %v1787
      %v2007 = vpop.f32.mrb[0].mxu0
      %v2008 = vadd.f32 0.0, %v2007
      %v2009 = vpop.f32.mrb[0].mxu0
      %2010 = vmatprep.mubr.f32.mxu0 0.0
      %2011 = vmatmul.mubr.f32.gmra.mrb[0].mxu0 %v1790
      %v2012 = vpop.f32.mrb[0].mxu0
      %v2013 = vadd.f32 0.0, %v2012
      %v2014 = vpop.f32.mrb[0].mxu0
      %2015 = vmatprep.mubr.f32.mxu0 0.0
      %2016 = vmatmul.mubr.f32.gmra.mrb[0].mxu0 %v1793
      %v2017 = vpop.f32.mrb[0].mxu0
      %v2018 = vadd.f32 0.0, %v2017
      %v2019 = vpop.f32.mrb[0].mxu0
      %2020 = vmatprep.mubr.f32.mxu0 0.0
      %2021 = vmatmul.mubr.f32.gmra.mrb[0].mxu0 %v1796
      %v2022 = vpop.f32.mrb[0].mxu0
      %v2023 = vadd.f32 0.0, %v2022
      %v2024 = vpop.f32.mrb[0].mxu0
      %2025 = vdwg.mxu0
      %v2026 = vadd.f32 %v1637, %v1868
      %v2027 = vadd.f32 %v1638, %v1873
      %v2028 = vadd.f32 %v1639, %v1878
      %v2029 = vadd.f32 %v1640, %v1883
      %v2030 = vadd.f32 %v1641, %v1888
      %v2031 = vadd.f32 %v1642, %v1893
      %v2032 = vadd.f32 %v1643, %v1898
      %v2033 = vadd.f32 %v1644, %v1903
      %v2034 = vadd.f32 %v1645, %v1908
      %v2035 = vadd.f32 %v1646, %v1913
      %v2036 = vadd.f32 %v1647, %v1918
      %v2037 = vadd.f32 %v1648, %v1923
      %v2038 = vadd.f32 %v1649, %v1928
      %v2039 = vadd.f32 %v1650, %v1933
      %v2040 = vadd.f32 %v1651, %v1938
      %v2041 = vadd.f32 %v1652, %v1943
      %v2042 = vadd.f32 %v1653, %v1948
      %v2043 = vadd.f32 %v1654, %v1953
      %v2044 = vadd.f32 %v1655, %v1958
      %v2045 = vadd.f32 %v1656, %v1963
      %v2046 = vadd.f32 %v1657, %v1968
      %v2047 = vadd.f32 %v1658, %v1973
      %v2048 = vadd.f32 %v1659, %v1978
      %v2049 = vadd.f32 %v1660, %v1983
      %v2050 = vadd.f32 %v1661, %v1988
      %v2051 = vadd.f32 %v1662, %v1993
      %v2052 = vadd.f32 %v1663, %v1998
      %v2053 = vadd.f32 %v1664, %v2003
      %v2054 = vadd.f32 %v1665, %v2008
      %v2055 = vadd.f32 %v1666, %v2013
      %v2056 = vadd.f32 %v1667, %v2018
      %v2057 = vadd.f32 %v1668, %v2023
      %v2058 = vld [vmem:[%s2] sm:$0x1]
      %v2060 = vlaneseq
      %v2061 = vshrl.u32 %v2060, 7
      %v2062 = vsub.s32 0, %v2061
      %v2063 = vrot.slane %v2058, %v2062
      %v2065 = vadd.f32 %v2026, %v2063
      %v2066 = vadd.f32 %v2027, %v2063
      %v2067 = vadd.f32 %v2028, %v2063
      %v2068 = vadd.f32 %v2029, %v2063
      %v2069 = vadd.f32 %v2030, %v2063
      %v2070 = vadd.f32 %v2031, %v2063
      %v2071 = vadd.f32 %v2032, %v2063
      %v2072 = vadd.f32 %v2033, %v2063
      %v2073 = vadd.f32 %v2034, %v2063
      %v2074 = vadd.f32 %v2035, %v2063
      %v2075 = vadd.f32 %v2036, %v2063
      %v2076 = vadd.f32 %v2037, %v2063
      %v2077 = vadd.f32 %v2038, %v2063
      %v2078 = vadd.f32 %v2039, %v2063
      %v2079 = vadd.f32 %v2040, %v2063
      %v2080 = vadd.f32 %v2041, %v2063
      %v2081 = vadd.f32 %v2042, %v2063
      %v2082 = vadd.f32 %v2043, %v2063
      %v2083 = vadd.f32 %v2044, %v2063
      %v2084 = vadd.f32 %v2045, %v2063
      %v2085 = vadd.f32 %v2046, %v2063
      %v2086 = vadd.f32 %v2047, %v2063
      %v2087 = vadd.f32 %v2048, %v2063
      %v2088 = vadd.f32 %v2049, %v2063
      %v2089 = vadd.f32 %v2050, %v2063
      %v2090 = vadd.f32 %v2051, %v2063
      %v2091 = vadd.f32 %v2052, %v2063
      %v2092 = vadd.f32 %v2053, %v2063
      %v2093 = vadd.f32 %v2054, %v2063
      %v2094 = vadd.f32 %v2055, %v2063
      %v2095 = vadd.f32 %v2056, %v2063
      %v2096 = vadd.f32 %v2057, %v2063
      %2097 = vst.msk [vmem:[%s175] sm:$0xff] %vm1315, %v2065
      %2098 = vst.msk [vmem:[%s175 + $0x8] sm:$0xff] %vm1315, %v2066
      %2099 = vst.msk [vmem:[%s175 + $0x10] sm:$0xff] %vm1315, %v2067
      %2100 = vst.msk [vmem:[%s175 + $0x18] sm:$0xff] %vm1315, %v2068
      %2101 = vst.msk [vmem:[%s175 + $0x20] sm:$0xff] %vm1315, %v2069
      %2102 = vst.msk [vmem:[%s175 + $0x28] sm:$0xff] %vm1315, %v2070
      %2103 = vst.msk [vmem:[%s175 + $0x30] sm:$0xff] %vm1315, %v2071
      %2104 = vst.msk [vmem:[%s175 + $0x38] sm:$0xff] %vm1315, %v2072
      %2105 = vst.msk [vmem:[%s175 + $0x40] sm:$0xff] %vm1315, %v2073
      %2106 = vst.msk [vmem:[%s175 + $0x48] sm:$0xff] %vm1315, %v2074
      %2107 = vst.msk [vmem:[%s175 + $0x50] sm:$0xff] %vm1315, %v2075
      %2108 = vst.msk [vmem:[%s175 + $0x58] sm:$0xff] %vm1315, %v2076
      %2109 = vst.msk [vmem:[%s175 + $0x60] sm:$0xff] %vm1315, %v2077
      %2110 = vst.msk [vmem:[%s175 + $0x68] sm:$0xff] %vm1315, %v2078
      %2111 = vst.msk [vmem:[%s175 + $0x70] sm:$0xff] %vm1315, %v2079
      %2112 = vst.msk [vmem:[%s175 + $0x78] sm:$0xff] %vm1315, %v2080
      %2113 = vst.msk [vmem:[%s175 + $0x80] sm:$0xff] %vm1315, %v2081
      %2114 = vst.msk [vmem:[%s175 + $0x88] sm:$0xff] %vm1315, %v2082
      %2115 = vst.msk [vmem:[%s175 + $0x90] sm:$0xff] %vm1315, %v2083
      %2116 = vst.msk [vmem:[%s175 + $0x98] sm:$0xff] %vm1315, %v2084
      %2117 = vst.msk [vmem:[%s175 + $0xa0] sm:$0xff] %vm1315, %v2085
      %2118 = vst.msk [vmem:[%s175 + $0xa8] sm:$0xff] %vm1315, %v2086
      %2119 = vst.msk [vmem:[%s175 + $0xb0] sm:$0xff] %vm1315, %v2087
      %2120 = vst.msk [vmem:[%s175 + $0xb8] sm:$0xff] %vm1315, %v2088
      %2121 = vst.msk [vmem:[%s175 + $0xc0] sm:$0xff] %vm1315, %v2089
      %2122 = vst.msk [vmem:[%s175 + $0xc8] sm:$0xff] %vm1315, %v2090
      %2123 = vst.msk [vmem:[%s175 + $0xd0] sm:$0xff] %vm1315, %v2091
      %2124 = vst.msk [vmem:[%s175 + $0xd8] sm:$0xff] %vm1315, %v2092
      %2125 = vst.msk [vmem:[%s175 + $0xe0] sm:$0xff] %vm1315, %v2093
      %2126 = vst.msk [vmem:[%s175 + $0xe8] sm:$0xff] %vm1315, %v2094
      %2127 = vst.msk [vmem:[%s175 + $0xf0] sm:$0xff] %vm1315, %v2095
      %2128 = vst.msk [vmem:[%s175 + $0xf8] sm:$0xff] %vm1315, %v2096
      %s2129 = smul.u32 32, %s14
      %p2130 = scmp.lt.s32.totalorder %s2129, 63
      %s2131 = scalar_select %p2130, %s2129, 63
      %s2132 = smul.addr %s2131, 8
      %s2133 = scalar_lea.vmem %s3, %s2132
      // Predicated region
      $region33: #{tpu_custom_call.1} parent=31 // pred_check
        %p2134 = pneg %p100
      $region34: #{tpu_custom_call.1} parent=31 // pred_check_branch
        %2136 = sbr.rel (%p2134) target = $region36
      $region35: #{tpu_custom_call.1} parent=31 // pred_region
        %s2137 = smul.u32 32, %s14
      $region36: #{tpu_custom_call.1} parent=31 // pred_fallthru
        _
    $region32: #{tpu_custom_call.1} parent=5 // pred_fallthru
      _
    %p2138 = scmp.le.s32.totalorder 2, %s9
    // Predicated region
    $region37: #{tpu_custom_call.1} parent=5 // pred_check
      %p2139 = pneg %p2138
    $region38: #{tpu_custom_call.1} parent=5 // pred_check_branch
      %2141 = sbr.rel (%p2139) target = $region40
    $region39: #{tpu_custom_call.1} parent=5 // pred_region
      %s2142 = ssub.s32 %s9, 2
      // Predicated region
      $region41: #{tpu_custom_call.1} parent=39 // pred_check
        %p2143 = pneg %p106
      $region42: #{tpu_custom_call.1} parent=39 // pred_check_branch
        %2145 = sbr.rel (%p2143) target = $region44
      $region43: #{tpu_custom_call.1} parent=39 // pred_region
        %s2146 = smul.u32 32, %s15
        %p2147 = scmp.lt.s32.totalorder %s2146, 63
        %s2148 = scalar_select %p2147, %s2146, 63
        %s2149 = smul.addr %s2148, 8
        %s2150 = scalar_lea.vmem %s3, %s2149
      $region44: #{tpu_custom_call.1} parent=39 // pred_fallthru
        _
    $region40: #{tpu_custom_call.1} parent=5 // pred_fallthru
      _
  $region6: #{tpu_custom_call.1} parent=0 // loop_footer
    %s13 = sadd.s32 1, %s9
  $region7: #{tpu_custom_call.1} parent=0 // loop_footer_branch
    %8 = sbr.rel target = $region3
  $region8: #{tpu_custom_call.1} parent=0 // loop_exit
    _

// kernel: tpu_custom_call.1
$region0: #{tpu_custom_call.1}
  #allocation0 [shape = 'u32[]', space=smem, size = 0x4, offset = 0x4, fixed_abs, tag = 'smem constant byte address 0x4 - core index']
  #allocation1 [shape = 'u32[144,128]{1,0:T(1,128)}', space=vmem, size = 0x12000, scoped, tag = 'internal scratch']
  %s0 = inlined_call_operand.vmem [shape: f32[8,9,9,16], index: 0, kind: input, shape index: {}]
  %s1 = inlined_call_operand.vmem [shape: f32[36,8], index: 1, kind: input, shape index: {}]
  %s2 = inlined_call_operand.vmem [shape: f32[1,8], index: 2, kind: input, shape index: {}]
  %s3 = inlined_call_operand.vmem [shape: f32[512,8], index: 3, kind: output, shape index: {}]
  %s4 = sld [smem:[#allocation0]]
  $region45: #{tpu_custom_call.1} parent=0
    _
  %s6 = ssub.s32 1, %s4
  %s7 = scalar_select 0, %s6, %s4
  loop: start=0, step=1, limit=4
  $region2: #{tpu_custom_call.1} parent=0 // loop_pre_header
    _
  $region3: #{tpu_custom_call.1} parent=0 // loop_header
    %s9 = sphi 0, %s13
    %p10 = scmp.ge.s32.totalorder %s9, 4
    %s19 = sphi 0, %s21
    %s22 = sphi 0, %s19
    %s23 = sphi 0, %s22
    %s39 = sphi 0, %s23
    %s43 = sphi 0, %s43
    %s45 = sphi 0, %s43
    %s46 = sphi 0, %s45
    %s60 = sphi 0, %s46
    %s64 = sphi 0, %s64
    %s66 = sphi 0, %s64
    %s67 = sphi 0, %s66
    %s81 = sphi 0, %s67
    %s87 = sphi 0, %s89
    %s90 = sphi 0, %s87
    %s91 = sphi 0, %s90
    %s107 = sphi 0, %s91
  $region4: #{tpu_custom_call.1} parent=0 // loop_header_branch
    %12 = sbr.rel (%p10) target = $region8
  $region5: #{tpu_custom_call.1} parent=0 // loop_body
    %s14 = ssub.s32 %s9, 1
    %s15 = ssub.s32 %s9, 2
    %s16 = sadd.s32 %s9, 1
    %s17 = ssub.s32 %s9, %s16
    %p18 = scmp.eq.s32.totalorder %s17, 0
    %s20 = sadd.s32 %s19, 1
    %s21 = scalar_select %p18, %s19, %s20
    %p24 = pneg %p18
    %p25 = scmp.eq.s32.totalorder %s9, 1
    %p26 = por %p24, %p25
    %p27 = scmp.ne.s32.totalorder %s19, %s22
    %p28 = scmp.eq.s32.totalorder %s9, 0
    %p29 = por %p27, %p28
    %p30 = scmp.ne.s32.totalorder %s19, %s22
    %p31 = scmp.eq.s32.totalorder %s14, 1
    %p32 = por %p30, %p31
    %p33 = scmp.ne.s32.totalorder %s22, %s23
    %p34 = scmp.eq.s32.totalorder %s14, 0
    %p35 = por %p33, %p34
    %p36 = scmp.ne.s32.totalorder %s22, %s23
    %p37 = scmp.eq.s32.totalorder %s15, 1
    %p38 = por %p36, %p37
    %p40 = scmp.ne.s32.totalorder %s23, %s39
    %p41 = scmp.eq.s32.totalorder %s15, 0
    %p42 = por %p40, %p41
    %s44 = sadd.s32 %s43, 1
    %p47 = scmp.eq.s32.totalorder %s9, 1
    %p48 = scmp.ne.s32.totalorder %s43, %s45
    %p49 = scmp.eq.s32.totalorder %s9, 0
    %p50 = por %p48, %p49
    %p51 = scmp.ne.s32.totalorder %s43, %s45
    %p52 = scmp.eq.s32.totalorder %s14, 1
    %p53 = por %p51, %p52
    %p54 = scmp.ne.s32.totalorder %s45, %s46
    %p55 = scmp.eq.s32.totalorder %s14, 0
    %p56 = por %p54, %p55
    %p57 = scmp.ne.s32.totalorder %s45, %s46
    %p58 = scmp.eq.s32.totalorder %s15, 1
    %p59 = por %p57, %p58
    %p61 = scmp.ne.s32.totalorder %s46, %s60
    %p62 = scmp.eq.s32.totalorder %s15, 0
    %p63 = por %p61, %p62
    %s65 = sadd.s32 %s64, 1
    %p68 = scmp.eq.s32.totalorder %s9, 1
    %p69 = scmp.ne.s32.totalorder %s64, %s66
    %p70 = scmp.eq.s32.totalorder %s9, 0
    %p71 = por %p69, %p70
    %p72 = scmp.ne.s32.totalorder %s64, %s66
    %p73 = scmp.eq.s32.totalorder %s14, 1
    %p74 = por %p72, %p73
    %p75 = scmp.ne.s32.totalorder %s66, %s67
    %p76 = scmp.eq.s32.totalorder %s14, 0
    %p77 = por %p75, %p76
    %p78 = scmp.ne.s32.totalorder %s66, %s67
    %p79 = scmp.eq.s32.totalorder %s15, 1
    %p80 = por %p78, %p79
    %p82 = scmp.ne.s32.totalorder %s67, %s81
    %p83 = scmp.eq.s32.totalorder %s15, 0
    %p84 = por %p82, %p83
    %s85 = ssub.s32 %s9, %s16
    %p86 = scmp.eq.s32.totalorder %s85, 0
    %s88 = sadd.s32 %s87, 1
    %s89 = scalar_select %p86, %s87, %s88
    %p92 = pneg %p86
    %p93 = scmp.eq.s32.totalorder %s9, 1
    %p94 = por %p92, %p93
    %p95 = scmp.ne.s32.totalorder %s87, %s90
    %p96 = scmp.eq.s32.totalorder %s9, 0
    %p97 = por %p95, %p96
    %p98 = scmp.ne.s32.totalorder %s87, %s90
    %p99 = scmp.eq.s32.totalorder %s14, 1
    %p100 = por %p98, %p99
    %p101 = scmp.ne.s32.totalorder %s90, %s91
    %p102 = scmp.eq.s32.totalorder %s14, 0
    %p103 = por %p101, %p102
    %p104 = scmp.ne.s32.totalorder %s90, %s91
    %p105 = scmp.eq.s32.totalorder %s15, 1
    %p106 = por %p104, %p105
    %p108 = scmp.ne.s32.totalorder %s91, %s107
    %p109 = scmp.eq.s32.totalorder %s15, 0
    %p110 = por %p108, %p109
    %p111 = scmp.le.s32.totalorder 1, %s9
    %p112 = scmp.lt.s32.totalorder %s9, 3
    %p113 = pnand %p111, %p112
    %p114 = pneg %p113
    // Predicated region
    $region9: #{tpu_custom_call.1} parent=5 // pred_check
      _
    $region10: #{tpu_custom_call.1} parent=5 // pred_check_branch
      %116 = sbr.rel (%p113) target = $region12
    $region11: #{tpu_custom_call.1} parent=5 // pred_region
      %s117 = ssub.s32 %s9, 1
      // Predicated region
      $region13: #{tpu_custom_call.1} parent=11 // pred_check
        %p118 = pneg %p56
      $region14: #{tpu_custom_call.1} parent=11 // pred_check_branch
        %120 = sbr.rel (%p118) target = $region16
      $region15: #{tpu_custom_call.1} parent=11 // pred_region
        _
      $region16: #{tpu_custom_call.1} parent=11 // pred_fallthru
        _
      // Predicated region
      $region17: #{tpu_custom_call.1} parent=11 // pred_check
        %p121 = pneg %p77
      $region18: #{tpu_custom_call.1} parent=11 // pred_check_branch
        %123 = sbr.rel (%p121) target = $region20
      $region19: #{tpu_custom_call.1} parent=11 // pred_region
        _
      $region20: #{tpu_custom_call.1} parent=11 // pred_fallthru
        _
    $region12: #{tpu_custom_call.1} parent=5 // pred_fallthru
      _
    %p124 = scmp.lt.s32.totalorder %s9, 2
    // Predicated region
    $region21: #{tpu_custom_call.1} parent=5 // pred_check
      %p125 = pneg %p124
    $region22: #{tpu_custom_call.1} parent=5 // pred_check_branch
      %127 = sbr.rel (%p125) target = $region24
    $region23: #{tpu_custom_call.1} parent=5 // pred_region
      // Predicated region
      $region25: #{tpu_custom_call.1} parent=23 // pred_check
        %p128 = pneg %p29
      $region26: #{tpu_custom_call.1} parent=23 // pred_check_branch
        %130 = sbr.rel (%p128) target = $region28
      $region27: #{tpu_custom_call.1} parent=23 // pred_region
        %s131 = smul.u32 4, %s9
        %p132 = scmp.lt.s32.totalorder %s131, 7
        %s133 = scalar_select %p132, %s131, 7
        %s134 = smul.addr %s133, 18
        %s135 = smul.addr %s134, 8
        %s136 = scalar_lea.vmem %s0, %s135
        %s137 = smul.u32 4, %s9
      $region28: #{tpu_custom_call.1} parent=23 // pred_fallthru
        _
    $region24: #{tpu_custom_call.1} parent=5 // pred_fallthru
      _
    %p138 = scmp.le.s32.totalorder 1, %s9
    %p139 = scmp.lt.s32.totalorder %s9, 3
    %p140 = pnand %p138, %p139
    %p141 = pneg %p140
    // Predicated region
    $region29: #{tpu_custom_call.1} parent=5 // pred_check
      _
    $region30: #{tpu_custom_call.1} parent=5 // pred_check_branch
      %143 = sbr.rel (%p140) target = $region32
    $region31: #{tpu_custom_call.1} parent=5 // pred_region
      %s144 = ssub.s32 %s9, 1
      %s145 = smul.u32 4, %s14
      %p146 = scmp.lt.s32.totalorder %s145, 7
      %s147 = scalar_select %p146, %s145, 7
      %s148 = smul.addr %s147, 18
      %s149 = smul.addr %s148, 8
      %s150 = scalar_lea.vmem %s0, %s149
      %p151 = pneg %p35
      %p152 = pneg %p32
      %p153 = pneg %p56
      %p154 = pneg %p53
      %p155 = pneg %p77
      %p156 = pneg %p74
      %p157 = pneg %p103
      %p158 = pneg %p100
      %s159 = smul.u32 32, %s14
      %p160 = scmp.lt.s32.totalorder %s159, 63
      %s161 = scalar_select %p160, %s159, 63
      %s162 = smul.addr %s161, 8
      %s163 = scalar_lea.vmem %s3, %s162
      %s164 = smul.u32 4, %s14
      %p165 = scmp.lt.s32.totalorder %s164, 7
      %s166 = scalar_select %p165, %s164, 7
      %s167 = smul.addr %s166, 18
      %s168 = smul.addr %s167, 8
      %s169 = scalar_lea.vmem %s0, %s168
      %s170 = smul.u32 4, %s14
      %s171 = smul.u32 32, %s14
      %p172 = scmp.lt.s32.totalorder %s171, 63
      %s173 = scalar_select %p172, %s171, 63
      %s174 = smul.addr %s173, 8
      %s175 = scalar_lea.vmem %s3, %s174
      %s176 = smul.u32 32, %s14
      %v177 = vld [vmem:[%s169] sm:$0xff]
      %v178 = vld [vmem:[%s169 + $0x10] sm:$0xff]
      %v179 = vld [vmem:[%s169 + $0x20] sm:$0xff]
      %v180 = vld [vmem:[%s169 + $0x30] sm:$0xff]
      %v181 = vld [vmem:[%s169 + $0x40] sm:$0xff]
      %v182 = vld [vmem:[%s169 + $0x50] sm:$0xff]
      %v183 = vld [vmem:[%s169 + $0x60] sm:$0xff]
      %v184 = vld [vmem:[%s169 + $0x70] sm:$0xff]
      %v185 = vld [vmem:[%s169 + $0x90] sm:$0xff]
      %v186 = vld [vmem:[%s169 + $0xa0] sm:$0xff]
      %v187 = vld [vmem:[%s169 + $0xb0] sm:$0xff]
      %v188 = vld [vmem:[%s169 + $0xc0] sm:$0xff]
      %v189 = vld [vmem:[%s169 + $0xd0] sm:$0xff]
      %v190 = vld [vmem:[%s169 + $0xe0] sm:$0xff]
      %v191 = vld [vmem:[%s169 + $0xf0] sm:$0xff]
      %v192 = vld [vmem:[%s169 + $0x100] sm:$0xff]
      %v193 = vld [vmem:[%s169 + $0x120] sm:$0xff]
      %v194 = vld [vmem:[%s169 + $0x130] sm:$0xff]
      %v195 = vld [vmem:[%s169 + $0x140] sm:$0xff]
      %v196 = vld [vmem:[%s169 + $0x150] sm:$0xff]
      %v197 = vld [vmem:[%s169 + $0x160] sm:$0xff]
      %v198 = vld [vmem:[%s169 + $0x170] sm:$0xff]
      %v199 = vld [vmem:[%s169 + $0x180] sm:$0xff]
      %v200 = vld [vmem:[%s169 + $0x190] sm:$0xff]
      %v201 = vld [vmem:[%s169 + $0x1b0] sm:$0xff]
      %v202 = vld [vmem:[%s169 + $0x1c0] sm:$0xff]
      %v203 = vld [vmem:[%s169 + $0x1d0] sm:$0xff]
      %v204 = vld [vmem:[%s169 + $0x1e0] sm:$0xff]
      %v205 = vld [vmem:[%s169 + $0x1f0] sm:$0xff]
      %v206 = vld [vmem:[%s169 + $0x200] sm:$0xff]
      %v207 = vld [vmem:[%s169 + $0x210] sm:$0xff]
      %v208 = vld [vmem:[%s169 + $0x220] sm:$0xff]
      %v209 = vld [vmem:[%s1] sm:$0xff]
      %v210 = vld [vmem:[%s1 + $0x8] sm:$0xff]
      %v211 = vld [vmem:[%s169 + $0x1] sm:$0xff]
      %v212 = vld [vmem:[%s169 + $0x11] sm:$0xff]
      %v213 = vld [vmem:[%s169 + $0x21] sm:$0xff]
      %v214 = vld [vmem:[%s169 + $0x31] sm:$0xff]
      %v215 = vld [vmem:[%s169 + $0x41] sm:$0xff]
      %v216 = vld [vmem:[%s169 + $0x51] sm:$0xff]
      %v217 = vld [vmem:[%s169 + $0x61] sm:$0xff]
      %v218 = vld [vmem:[%s169 + $0x71] sm:$0xff]
      %v219 = vld [vmem:[%s169 + $0x91] sm:$0xff]
      %v220 = vld [vmem:[%s169 + $0xa1] sm:$0xff]
      %v221 = vld [vmem:[%s169 + $0xb1] sm:$0xff]
      %v222 = vld [vmem:[%s169 + $0xc1] sm:$0xff]
      %v223 = vld [vmem:[%s169 + $0xd1] sm:$0xff]
      %v224 = vld [vmem:[%s169 + $0xe1] sm:$0xff]
      %v225 = vld [vmem:[%s169 + $0xf1] sm:$0xff]
      %v226 = vld [vmem:[%s169 + $0x101] sm:$0xff]
      %v227 = vld [vmem:[%s169 + $0x121] sm:$0xff]
      %v228 = vld [vmem:[%s169 + $0x131] sm:$0xff]
      %v229 = vld [vmem:[%s169 + $0x141] sm:$0xff]
      %v230 = vld [vmem:[%s169 + $0x151] sm:$0xff]
      %v231 = vld [vmem:[%s169 + $0x161] sm:$0xff]
      %v232 = vld [vmem:[%s169 + $0x171] sm:$0xff]
      %v233 = vld [vmem:[%s169 + $0x181] sm:$0xff]
      %v234 = vld [vmem:[%s169 + $0x191] sm:$0xff]
      %v235 = vld [vmem:[%s169 + $0x1b1] sm:$0xff]
      %v236 = vld [vmem:[%s169 + $0x1c1] sm:$0xff]
      %v237 = vld [vmem:[%s169 + $0x1d1] sm:$0xff]
      %v238 = vld [vmem:[%s169 + $0x1e1] sm:$0xff]
      %v239 = vld [vmem:[%s169 + $0x1f1] sm:$0xff]
      %v240 = vld [vmem:[%s169 + $0x201] sm:$0xff]
      %v241 = vld [vmem:[%s169 + $0x211] sm:$0xff]
      %v242 = vld [vmem:[%s169 + $0x221] sm:$0xff]
      %v243 = vld [vmem:[%s1 + $0x10] sm:$0xf]
      %vm244 = vcmask 31744
      %v246 = vsel %vm244, %v211, 0
      %v249 = vsel %vm244, %v212, 0
      %v252 = vsel %vm244, %v213, 0
      %v255 = vsel %vm244, %v214, 0
      %v258 = vsel %vm244, %v215, 0
      %v261 = vsel %vm244, %v216, 0
      %v264 = vsel %vm244, %v217, 0
      %v267 = vsel %vm244, %v218, 0
      %v270 = vsel %vm244, %v219, 0
      %v273 = vsel %vm244, %v220, 0
      %v276 = vsel %vm244, %v221, 0
      %v279 = vsel %vm244, %v222, 0
      %v282 = vsel %vm244, %v223, 0
      %v285 = vsel %vm244, %v224, 0
      %v288 = vsel %vm244, %v225, 0
      %v291 = vsel %vm244, %v226, 0
      %v294 = vsel %vm244, %v227, 0
      %v297 = vsel %vm244, %v228, 0
      %v300 = vsel %vm244, %v229, 0
      %v303 = vsel %vm244, %v230, 0
      %v306 = vsel %vm244, %v231, 0
      %v309 = vsel %vm244, %v232, 0
      %v312 = vsel %vm244, %v233, 0
      %v315 = vsel %vm244, %v234, 0
      %v318 = vsel %vm244, %v235, 0
      %v321 = vsel %vm244, %v236, 0
      %v324 = vsel %vm244, %v237, 0
      %v327 = vsel %vm244, %v238, 0
      %v330 = vsel %vm244, %v239, 0
      %v333 = vsel %vm244, %v240, 0
      %v336 = vsel %vm244, %v241, 0
      %v339 = vsel %vm244, %v242, 0
      %vm341 = vcmask 1043456
      %v343 = vsel %vm341, %v243, 0
      %345 = vmatprep.subr.mxu0 0.0
      %346 = vmatpush1.msra.mxu0 %v343
      %347 = vmatprep.subr.mxu0 0.0
      %348 = vmatpush1.msra.mxu0 0.0
      %349 = vmatprep.subr.mxu0 0.0
      %350 = vmatpush1.msra.mxu0 0.0
      %351 = vmatprep.subr.mxu0 0.0
      %352 = vmatpush1.msra.mxu0 0.0
      %353 = vmatprep.subr.mxu0 0.0
      %354 = vmatpush1.msra.mxu0 0.0
      %355 = vmatprep.subr.mxu0 0.0
      %356 = vmatpush1.msra.mxu0 0.0
      %357 = vmatprep.subr.mxu0 0.0
      %358 = vmatpush1.msra.mxu0 0.0
      %359 = vmatprep.subr.mxu0 0.0
      %360 = vmatpush1.msra.mxu0 0.0
      %361 = vmatprep.subr.mxu0 0.0
      %362 = vmatpush1.msra.mxu0 0.0
      %363 = vmatprep.subr.mxu0 0.0
      %364 = vmatpush1.msra.mxu0 0.0
      %365 = vmatprep.subr.mxu0 0.0
      %366 = vmatpush1.msra.mxu0 0.0
      %367 = vmatprep.subr.mxu0 0.0
      %368 = vmatpush1.msra.mxu0 0.0
      %369 = vmatprep.subr.mxu0 0.0
      %370 = vmatpush1.msra.mxu0 0.0
      %371 = vmatprep.subr.mxu0 0.0
      %372 = vmatpush1.msra.mxu0 0.0
      %373 = vmatprep.subr.mxu0 0.0
      %374 = vmatpush1.msra.mxu0 0.0
      %375 = vmatprep.subr.mxu0 0.0
      %376 = vmatpush1.msra.mxu0 0.0
      %377 = vmatprep.subr.mxu0 0.0
      %378 = vmatpush1.msra.mxu0 0.0
      %379 = vmatprep.subr.mxu0 0.0
      %380 = vmatpush1.msra.mxu0 0.0
      %381 = vmatprep.subr.mxu0 0.0
      %382 = vmatpush1.msra.mxu0 0.0
      %383 = vmatprep.subr.mxu0 0.0
      %384 = vmatpush1.msra.mxu0 0.0
      %385 = vmatprep.subr.mxu0 0.0
      %386 = vmatpush1.msra.mxu0 0.0
      %387 = vmatprep.subr.mxu0 0.0
      %388 = vmatpush1.msra.mxu0 0.0
      %389 = vmatprep.subr.mxu0 0.0
      %390 = vmatpush1.msra.mxu0 0.0
      %391 = vmatprep.subr.mxu0 0.0
      %392 = vmatpush1.msra.mxu0 0.0
      %393 = vmatprep.subr.mxu0 0.0
      %394 = vmatpush1.msra.mxu0 0.0
      %395 = vmatprep.subr.mxu0 0.0
      %396 = vmatpush1.msra.mxu0 0.0
      %397 = vmatprep.subr.mxu0 0.0
      %398 = vmatpush1.msra.mxu0 0.0
      %399 = vmatprep.subr.mxu0 0.0
      %400 = vmatpush1.msra.mxu0 0.0
      %401 = vmatprep.subr.mxu0 0.0
      %402 = vmatpush1.msra.mxu0 0.0
      %403 = vmatprep.subr.mxu0 0.0
      %404 = vmatpush1.msra.mxu0 0.0
      %405 = vmatprep.subr.mxu0 0.0
      %406 = vmatpush1.msra.mxu0 0.0
      %407 = vmatprep.subr.mxu0 0.0
      %408 = vmatpush1.msra.mxu0 0.0
      %409 = vmatprep.mubr.f32.mxu0 0.0
      %410 = vmatmul.mubr.f32.gmra.mrb[0].mxu0 %v246
      %v411 = vpop.f32.mrb[0].mxu0
      %v412 = vadd.f32 0.0, %v411
      %v413 = vpop.f32.mrb[0].mxu0
      %414 = vmatprep.mubr.f32.mxu0 0.0
      %415 = vmatmul.mubr.f32.gmra.mrb[0].mxu0 %v249
      %v416 = vpop.f32.mrb[0].mxu0
      %v417 = vadd.f32 0.0, %v416
      %v418 = vpop.f32.mrb[0].mxu0
      %419 = vmatprep.mubr.f32.mxu0 0.0
      %420 = vmatmul.mubr.f32.gmra.mrb[0].mxu0 %v252
      %v421 = vpop.f32.mrb[0].mxu0
      %v422 = vadd.f32 0.0, %v421
      %v423 = vpop.f32.mrb[0].mxu0
      %424 = vmatprep.mubr.f32.mxu0 0.0
      %425 = vmatmul.mubr.f32.gmra.mrb[0].mxu0 %v255
      %v426 = vpop.f32.mrb[0].mxu0
      %v427 = vadd.f32 0.0, %v426
      %v428 = vpop.f32.mrb[0].mxu0
      %429 = vmatprep.mubr.f32.mxu0 0.0
      %430 = vmatmul.mubr.f32.gmra.mrb[0].mxu0 %v258
      %v431 = vpop.f32.mrb[0].mxu0
      %v432 = vadd.f32 0.0, %v431
      %v433 = vpop.f32.mrb[0].mxu0
      %434 = vmatprep.mubr.f32.mxu0 0.0
      %435 = vmatmul.mubr.f32.gmra.mrb[0].mxu0 %v261
      %v436 = vpop.f32.mrb[0].mxu0
      %v437 = vadd.f32 0.0, %v436
      %v438 = vpop.f32.mrb[0].mxu0
      %439 = vmatprep.mubr.f32.mxu0 0.0
      %440 = vmatmul.mubr.f32.gmra.mrb[0].mxu0 %v264
      %v441 = vpop.f32.mrb[0].mxu0
      %v442 = vadd.f32 0.0, %v441
      %v443 = vpop.f32.mrb[0].mxu0
      %444 = vmatprep.mubr.f32.mxu0 0.0
      %445 = vmatmul.mubr.f32.gmra.mrb[0].mxu0 %v267
      %v446 = vpop.f32.mrb[0].mxu0
      %v447 = vadd.f32 0.0, %v446
      %v448 = vpop.f32.mrb[0].mxu0
      %449 = vmatprep.mubr.f32.mxu0 0.0
      %450 = vmatmul.mubr.f32.gmra.mrb[0].mxu0 %v270
      %v451 = vpop.f32.mrb[0].mxu0
      %v452 = vadd.f32 0.0, %v451
      %v453 = vpop.f32.mrb[0].mxu0
      %454 = vmatprep.mubr.f32.mxu0 0.0
      %455 = vmatmul.mubr.f32.gmra.mrb[0].mxu0 %v273
      %v456 = vpop.f32.mrb[0].mxu0
      %v457 = vadd.f32 0.0, %v456
      %v458 = vpop.f32.mrb[0].mxu0
      %459 = vmatprep.mubr.f32.mxu0 0.0
      %460 = vmatmul.mubr.f32.gmra.mrb[0].mxu0 %v276
      %v461 = vpop.f32.mrb[0].mxu0
      %v462 = vadd.f32 0.0, %v461
      %v463 = vpop.f32.mrb[0].mxu0
      %464 = vmatprep.mubr.f32.mxu0 0.0
      %465 = vmatmul.mubr.f32.gmra.mrb[0].mxu0 %v279
      %v466 = vpop.f32.mrb[0].mxu0
      %v467 = vadd.f32 0.0, %v466
      %v468 = vpop.f32.mrb[0].mxu0
      %469 = vmatprep.mubr.f32.mxu0 0.0
      %470 = vmatmul.mubr.f32.gmra.mrb[0].mxu0 %v282
      %v471 = vpop.f32.mrb[0].mxu0
      %v472 = vadd.f32 0.0, %v471
      %v473 = vpop.f32.mrb[0].mxu0
      %474 = vmatprep.mubr.f32.mxu0 0.0
      %475 = vmatmul.mubr.f32.gmra.mrb[0].mxu0 %v285
      %v476 = vpop.f32.mrb[0].mxu0
      %v477 = vadd.f32 0.0, %v476
      %v478 = vpop.f32.mrb[0].mxu0
      %479 = vmatprep.mubr.f32.mxu0 0.0
      %480 = vmatmul.mubr.f32.gmra.mrb[0].mxu0 %v288
      %v481 = vpop.f32.mrb[0].mxu0
      %v482 = vadd.f32 0.0, %v481
      %v483 = vpop.f32.mrb[0].mxu0
      %484 = vmatprep.mubr.f32.mxu0 0.0
      %485 = vmatmul.mubr.f32.gmra.mrb[0].mxu0 %v291
      %v486 = vpop.f32.mrb[0].mxu0
      %v487 = vadd.f32 0.0, %v486
      %v488 = vpop.f32.mrb[0].mxu0
      %489 = vmatprep.mubr.f32.mxu0 0.0
      %490 = vmatmul.mubr.f32.gmra.mrb[0].mxu0 %v294
      %v491 = vpop.f32.mrb[0].mxu0
      %v492 = vadd.f32 0.0, %v491
      %v493 = vpop.f32.mrb[0].mxu0
      %494 = vmatprep.mubr.f32.mxu0 0.0
      %495 = vmatmul.mubr.f32.gmra.mrb[0].mxu0 %v297
      %v496 = vpop.f32.mrb[0].mxu0
      %v497 = vadd.f32 0.0, %v496
      %v498 = vpop.f32.mrb[0].mxu0
      %499 = vmatprep.mubr.f32.mxu0 0.0
      %500 = vmatmul.mubr.f32.gmra.mrb[0].mxu0 %v300
      %v501 = vpop.f32.mrb[0].mxu0
      %v502 = vadd.f32 0.0, %v501
      %v503 = vpop.f32.mrb[0].mxu0
      %504 = vmatprep.mubr.f32.mxu0 0.0
      %505 = vmatmul.mubr.f32.gmra.mrb[0].mxu0 %v303
      %v506 = vpop.f32.mrb[0].mxu0
      %v507 = vadd.f32 0.0, %v506
      %v508 = vpop.f32.mrb[0].mxu0
      %509 = vmatprep.mubr.f32.mxu0 0.0
      %510 = vmatmul.mubr.f32.gmra.mrb[0].mxu0 %v306
      %v511 = vpop.f32.mrb[0].mxu0
      %v512 = vadd.f32 0.0, %v511
      %v513 = vpop.f32.mrb[0].mxu0
      %514 = vmatprep.mubr.f32.mxu0 0.0
      %515 = vmatmul.mubr.f32.gmra.mrb[0].mxu0 %v309
      %v516 = vpop.f32.mrb[0].mxu0
      %v517 = vadd.f32 0.0, %v516
      %v518 = vpop.f32.mrb[0].mxu0
      %519 = vmatprep.mubr.f32.mxu0 0.0
      %520 = vmatmul.mubr.f32.gmra.mrb[0].mxu0 %v312
      %v521 = vpop.f32.mrb[0].mxu0
      %v522 = vadd.f32 0.0, %v521
      %v523 = vpop.f32.mrb[0].mxu0
      %524 = vmatprep.mubr.f32.mxu0 0.0
      %525 = vmatmul.mubr.f32.gmra.mrb[0].mxu0 %v315
      %v526 = vpop.f32.mrb[0].mxu0
      %v527 = vadd.f32 0.0, %v526
      %v528 = vpop.f32.mrb[0].mxu0
      %529 = vmatprep.mubr.f32.mxu0 0.0
      %530 = vmatmul.mubr.f32.gmra.mrb[0].mxu0 %v318
      %v531 = vpop.f32.mrb[0].mxu0
      %v532 = vadd.f32 0.0, %v531
      %v533 = vpop.f32.mrb[0].mxu0
      %534 = vmatprep.mubr.f32.mxu0 0.0
      %535 = vmatmul.mubr.f32.gmra.mrb[0].mxu0 %v321
      %v536 = vpop.f32.mrb[0].mxu0
      %v537 = vadd.f32 0.0, %v536
      %v538 = vpop.f32.mrb[0].mxu0
      %539 = vmatprep.mubr.f32.mxu0 0.0
      %540 = vmatmul.mubr.f32.gmra.mrb[0].mxu0 %v324
      %v541 = vpop.f32.mrb[0].mxu0
      %v542 = vadd.f32 0.0, %v541
      %v543 = vpop.f32.mrb[0].mxu0
      %544 = vmatprep.mubr.f32.mxu0 0.0
      %545 = vmatmul.mubr.f32.gmra.mrb[0].mxu0 %v327
      %v546 = vpop.f32.mrb[0].mxu0
      %v547 = vadd.f32 0.0, %v546
      %v548 = vpop.f32.mrb[0].mxu0
      %549 = vmatprep.mubr.f32.mxu0 0.0
      %550 = vmatmul.mubr.f32.gmra.mrb[0].mxu0 %v330
      %v551 = vpop.f32.mrb[0].mxu0
      %v552 = vadd.f32 0.0, %v551
      %v553 = vpop.f32.mrb[0].mxu0
      %554 = vmatprep.mubr.f32.mxu0 0.0
      %555 = vmatmul.mubr.f32.gmra.mrb[0].mxu0 %v333
      %v556 = vpop.f32.mrb[0].mxu0
      %v557 = vadd.f32 0.0, %v556
      %v558 = vpop.f32.mrb[0].mxu0
      %559 = vmatprep.mubr.f32.mxu0 0.0
      %560 = vmatmul.mubr.f32.gmra.mrb[0].mxu0 %v336
      %v561 = vpop.f32.mrb[0].mxu0
      %v562 = vadd.f32 0.0, %v561
      %v563 = vpop.f32.mrb[0].mxu0
      %564 = vmatprep.mubr.f32.mxu0 0.0
      %565 = vmatmul.mubr.f32.gmra.mrb[0].mxu0 %v339
      %v566 = vpop.f32.mrb[0].mxu0
      %v567 = vadd.f32 0.0, %v566
      %v568 = vpop.f32.mrb[0].mxu0
      %569 = vdwg.mxu0
      %vm570 = vcmask 130048
      %v572 = vsel %vm570, %v177, 0
      %v575 = vsel %vm570, %v178, 0
      %v578 = vsel %vm570, %v179, 0
      %v581 = vsel %vm570, %v180, 0
      %v584 = vsel %vm570, %v181, 0
      %v587 = vsel %vm570, %v182, 0
      %v590 = vsel %vm570, %v183, 0
      %v593 = vsel %vm570, %v184, 0
      %v596 = vsel %vm570, %v185, 0
      %v599 = vsel %vm570, %v186, 0
      %v602 = vsel %vm570, %v187, 0
      %v605 = vsel %vm570, %v188, 0
      %v608 = vsel %vm570, %v189, 0
      %v611 = vsel %vm570, %v190, 0
      %v614 = vsel %vm570, %v191, 0
      %v617 = vsel %vm570, %v192, 0
      %v620 = vsel %vm570, %v193, 0
      %v623 = vsel %vm570, %v194, 0
      %v626 = vsel %vm570, %v195, 0
      %v629 = vsel %vm570, %v196, 0
      %v632 = vsel %vm570, %v197, 0
      %v635 = vsel %vm570, %v198, 0
      %v638 = vsel %vm570, %v199, 0
      %v641 = vsel %vm570, %v200, 0
      %v644 = vsel %vm570, %v201, 0
      %v647 = vsel %vm570, %v202, 0
      %v650 = vsel %vm570, %v203, 0
      %v653 = vsel %vm570, %v204, 0
      %v656 = vsel %vm570, %v205, 0
      %v659 = vsel %vm570, %v206, 0
      %v662 = vsel %vm570, %v207, 0
      %v665 = vsel %vm570, %v208, 0
      %667 = vmatprep.subr.mxu0 0.0
      %668 = vmatpush1.msra.mxu0 %v209
      %669 = vmatprep.subr.mxu0 0.0
      %670 = vmatpush1.msra.mxu0 %v210
      %671 = vmatprep.subr.mxu0 0.0
      %672 = vmatpush1.msra.mxu0 0.0
      %673 = vmatprep.subr.mxu0 0.0
      %674 = vmatpush1.msra.mxu0 0.0
      %675 = vmatprep.subr.mxu0 0.0
      %676 = vmatpush1.msra.mxu0 0.0
      %677 = vmatprep.subr.mxu0 0.0
      %678 = vmatpush1.msra.mxu0 0.0
      %679 = vmatprep.subr.mxu0 0.0
      %680 = vmatpush1.msra.mxu0 0.0
      %681 = vmatprep.subr.mxu0 0.0
      %682 = vmatpush1.msra.mxu0 0.0
      %683 = vmatprep.subr.mxu0 0.0
      %684 = vmatpush1.msra.mxu0 0.0
      %685 = vmatprep.subr.mxu0 0.0
      %686 = vmatpush1.msra.mxu0 0.0
      %687 = vmatprep.subr.mxu0 0.0
      %688 = vmatpush1.msra.mxu0 0.0
      %689 = vmatprep.subr.mxu0 0.0
      %690 = vmatpush1.msra.mxu0 0.0
      %691 = vmatprep.subr.mxu0 0.0
      %692 = vmatpush1.msra.mxu0 0.0
      %693 = vmatprep.subr.mxu0 0.0
      %694 = vmatpush1.msra.mxu0 0.0
      %695 = vmatprep.subr.mxu0 0.0
      %696 = vmatpush1.msra.mxu0 0.0
      %697 = vmatprep.subr.mxu0 0.0
      %698 = vmatpush1.msra.mxu0 0.0
      %699 = vmatprep.subr.mxu0 0.0
      %700 = vmatpush1.msra.mxu0 0.0
      %701 = vmatprep.subr.mxu0 0.0
      %702 = vmatpush1.msra.mxu0 0.0
      %703 = vmatprep.subr.mxu0 0.0
      %704 = vmatpush1.msra.mxu0 0.0
      %705 = vmatprep.subr.mxu0 0.0
      %706 = vmatpush1.msra.mxu0 0.0
      %707 = vmatprep.subr.mxu0 0.0
      %708 = vmatpush1.msra.mxu0 0.0
      %709 = vmatprep.subr.mxu0 0.0
      %710 = vmatpush1.msra.mxu0 0.0
      %711 = vmatprep.subr.mxu0 0.0
      %712 = vmatpush1.msra.mxu0 0.0
      %713 = vmatprep.subr.mxu0 0.0
      %714 = vmatpush1.msra.mxu0 0.0
      %715 = vmatprep.subr.mxu0 0.0
      %716 = vmatpush1.msra.mxu0 0.0
      %717 = vmatprep.subr.mxu0 0.0
      %718 = vmatpush1.msra.mxu0 0.0
      %719 = vmatprep.subr.mxu0 0.0
      %720 = vmatpush1.msra.mxu0 0.0
      %721 = vmatprep.subr.mxu0 0.0
      %722 = vmatpush1.msra.mxu0 0.0
      %723 = vmatprep.subr.mxu0 0.0
      %724 = vmatpush1.msra.mxu0 0.0
      %725 = vmatprep.subr.mxu0 0.0
      %726 = vmatpush1.msra.mxu0 0.0
      %727 = vmatprep.subr.mxu0 0.0
      %728 = vmatpush1.msra.mxu0 0.0
      %729 = vmatprep.subr.mxu0 0.0
      %730 = vmatpush1.msra.mxu0 0.0
      %731 = vmatprep.mubr.f32.mxu0 0.0
      %732 = vmatmul.mubr.f32.gmra.mrb[0].mxu0 %v572
      %v733 = vpop.f32.mrb[0].mxu0
      %v734 = vadd.f32 %v412, %v733
      %v735 = vpop.f32.mrb[0].mxu0
      %736 = vmatprep.mubr.f32.mxu0 0.0
      %737 = vmatmul.mubr.f32.gmra.mrb[0].mxu0 %v575
      %v738 = vpop.f32.mrb[0].mxu0
      %v739 = vadd.f32 %v417, %v738
      %v740 = vpop.f32.mrb[0].mxu0
      %741 = vmatprep.mubr.f32.mxu0 0.0
      %742 = vmatmul.mubr.f32.gmra.mrb[0].mxu0 %v578
      %v743 = vpop.f32.mrb[0].mxu0
      %v744 = vadd.f32 %v422, %v743
      %v745 = vpop.f32.mrb[0].mxu0
      %746 = vmatprep.mubr.f32.mxu0 0.0
      %747 = vmatmul.mubr.f32.gmra.mrb[0].mxu0 %v581
      %v748 = vpop.f32.mrb[0].mxu0
      %v749 = vadd.f32 %v427, %v748
      %v750 = vpop.f32.mrb[0].mxu0
      %751 = vmatprep.mubr.f32.mxu0 0.0
      %752 = vmatmul.mubr.f32.gmra.mrb[0].mxu0 %v584
      %v753 = vpop.f32.mrb[0].mxu0
      %v754 = vadd.f32 %v432, %v753
      %v755 = vpop.f32.mrb[0].mxu0
      %756 = vmatprep.mubr.f32.mxu0 0.0
      %757 = vmatmul.mubr.f32.gmra.mrb[0].mxu0 %v587
      %v758 = vpop.f32.mrb[0].mxu0
      %v759 = vadd.f32 %v437, %v758
      %v760 = vpop.f32.mrb[0].mxu0
      %761 = vmatprep.mubr.f32.mxu0 0.0
      %762 = vmatmul.mubr.f32.gmra.mrb[0].mxu0 %v590
      %v763 = vpop.f32.mrb[0].mxu0
      %v764 = vadd.f32 %v442, %v763
      %v765 = vpop.f32.mrb[0].mxu0
      %766 = vmatprep.mubr.f32.mxu0 0.0
      %767 = vmatmul.mubr.f32.gmra.mrb[0].mxu0 %v593
      %v768 = vpop.f32.mrb[0].mxu0
      %v769 = vadd.f32 %v447, %v768
      %v770 = vpop.f32.mrb[0].mxu0
      %771 = vmatprep.mubr.f32.mxu0 0.0
      %772 = vmatmul.mubr.f32.gmra.mrb[0].mxu0 %v596
      %v773 = vpop.f32.mrb[0].mxu0
      %v774 = vadd.f32 %v452, %v773
      %v775 = vpop.f32.mrb[0].mxu0
      %776 = vmatprep.mubr.f32.mxu0 0.0
      %777 = vmatmul.mubr.f32.gmra.mrb[0].mxu0 %v599
      %v778 = vpop.f32.mrb[0].mxu0
      %v779 = vadd.f32 %v457, %v778
      %v780 = vpop.f32.mrb[0].mxu0
      %781 = vmatprep.mubr.f32.mxu0 0.0
      %782 = vmatmul.mubr.f32.gmra.mrb[0].mxu0 %v602
      %v783 = vpop.f32.mrb[0].mxu0
      %v784 = vadd.f32 %v462, %v783
      %v785 = vpop.f32.mrb[0].mxu0
      %786 = vmatprep.mubr.f32.mxu0 0.0
      %787 = vmatmul.mubr.f32.gmra.mrb[0].mxu0 %v605
      %v788 = vpop.f32.mrb[0].mxu0
      %v789 = vadd.f32 %v467, %v788
      %v790 = vpop.f32.mrb[0].mxu0
      %791 = vmatprep.mubr.f32.mxu0 0.0
      %792 = vmatmul.mubr.f32.gmra.mrb[0].mxu0 %v608
      %v793 = vpop.f32.mrb[0].mxu0
      %v794 = vadd.f32 %v472, %v793
      %v795 = vpop.f32.mrb[0].mxu0
      %796 = vmatprep.mubr.f32.mxu0 0.0
      %797 = vmatmul.mubr.f32.gmra.mrb[0].mxu0 %v611
      %v798 = vpop.f32.mrb[0].mxu0
      %v799 = vadd.f32 %v477, %v798
      %v800 = vpop.f32.mrb[0].mxu0
      %801 = vmatprep.mubr.f32.mxu0 0.0
      %802 = vmatmul.mubr.f32.gmra.mrb[0].mxu0 %v614
      %v803 = vpop.f32.mrb[0].mxu0
      %v804 = vadd.f32 %v482, %v803
      %v805 = vpop.f32.mrb[0].mxu0
      %806 = vmatprep.mubr.f32.mxu0 0.0
      %807 = vmatmul.mubr.f32.gmra.mrb[0].mxu0 %v617
      %v808 = vpop.f32.mrb[0].mxu0
      %v809 = vadd.f32 %v487, %v808
      %v810 = vpop.f32.mrb[0].mxu0
      %811 = vmatprep.mubr.f32.mxu0 0.0
      %812 = vmatmul.mubr.f32.gmra.mrb[0].mxu0 %v620
      %v813 = vpop.f32.mrb[0].mxu0
      %v814 = vadd.f32 %v492, %v813
      %v815 = vpop.f32.mrb[0].mxu0
      %816 = vmatprep.mubr.f32.mxu0 0.0
      %817 = vmatmul.mubr.f32.gmra.mrb[0].mxu0 %v623
      %v818 = vpop.f32.mrb[0].mxu0
      %v819 = vadd.f32 %v497, %v818
      %v820 = vpop.f32.mrb[0].mxu0
      %821 = vmatprep.mubr.f32.mxu0 0.0
      %822 = vmatmul.mubr.f32.gmra.mrb[0].mxu0 %v626
      %v823 = vpop.f32.mrb[0].mxu0
      %v824 = vadd.f32 %v502, %v823
      %v825 = vpop.f32.mrb[0].mxu0
      %826 = vmatprep.mubr.f32.mxu0 0.0
      %827 = vmatmul.mubr.f32.gmra.mrb[0].mxu0 %v629
      %v828 = vpop.f32.mrb[0].mxu0
      %v829 = vadd.f32 %v507, %v828
      %v830 = vpop.f32.mrb[0].mxu0
      %831 = vmatprep.mubr.f32.mxu0 0.0
      %832 = vmatmul.mubr.f32.gmra.mrb[0].mxu0 %v632
      %v833 = vpop.f32.mrb[0].mxu0
      %v834 = vadd.f32 %v512, %v833
      %v835 = vpop.f32.mrb[0].mxu0
      %836 = vmatprep.mubr.f32.mxu0 0.0
      %837 = vmatmul.mubr.f32.gmra.mrb[0].mxu0 %v635
      %v838 = vpop.f32.mrb[0].mxu0
      %v839 = vadd.f32 %v517, %v838
      %v840 = vpop.f32.mrb[0].mxu0
      %841 = vmatprep.mubr.f32.mxu0 0.0
      %842 = vmatmul.mubr.f32.gmra.mrb[0].mxu0 %v638
      %v843 = vpop.f32.mrb[0].mxu0
      %v844 = vadd.f32 %v522, %v843
      %v845 = vpop.f32.mrb[0].mxu0
      %846 = vmatprep.mubr.f32.mxu0 0.0
      %847 = vmatmul.mubr.f32.gmra.mrb[0].mxu0 %v641
      %v848 = vpop.f32.mrb[0].mxu0
      %v849 = vadd.f32 %v527, %v848
      %v850 = vpop.f32.mrb[0].mxu0
      %851 = vmatprep.mubr.f32.mxu0 0.0
      %852 = vmatmul.mubr.f32.gmra.mrb[0].mxu0 %v644
      %v853 = vpop.f32.mrb[0].mxu0
      %v854 = vadd.f32 %v532, %v853
      %v855 = vpop.f32.mrb[0].mxu0
      %856 = vmatprep.mubr.f32.mxu0 0.0
      %857 = vmatmul.mubr.f32.gmra.mrb[0].mxu0 %v647
      %v858 = vpop.f32.mrb[0].mxu0
      %v859 = vadd.f32 %v537, %v858
      %v860 = vpop.f32.mrb[0].mxu0
      %861 = vmatprep.mubr.f32.mxu0 0.0
      %862 = vmatmul.mubr.f32.gmra.mrb[0].mxu0 %v650
      %v863 = vpop.f32.mrb[0].mxu0
      %v864 = vadd.f32 %v542, %v863
      %v865 = vpop.f32.mrb[0].mxu0
      %866 = vmatprep.mubr.f32.mxu0 0.0
      %867 = vmatmul.mubr.f32.gmra.mrb[0].mxu0 %v653
      %v868 = vpop.f32.mrb[0].mxu0
      %v869 = vadd.f32 %v547, %v868
      %v870 = vpop.f32.mrb[0].mxu0
      %871 = vmatprep.mubr.f32.mxu0 0.0
      %872 = vmatmul.mubr.f32.gmra.mrb[0].mxu0 %v656
      %v873 = vpop.f32.mrb[0].mxu0
      %v874 = vadd.f32 %v552, %v873
      %v875 = vpop.f32.mrb[0].mxu0
      %876 = vmatprep.mubr.f32.mxu0 0.0
      %877 = vmatmul.mubr.f32.gmra.mrb[0].mxu0 %v659
      %v878 = vpop.f32.mrb[0].mxu0
      %v879 = vadd.f32 %v557, %v878
      %v880 = vpop.f32.mrb[0].mxu0
      %881 = vmatprep.mubr.f32.mxu0 0.0
      %882 = vmatmul.mubr.f32.gmra.mrb[0].mxu0 %v662
      %v883 = vpop.f32.mrb[0].mxu0
      %v884 = vadd.f32 %v562, %v883
      %v885 = vpop.f32.mrb[0].mxu0
      %886 = vmatprep.mubr.f32.mxu0 0.0
      %887 = vmatmul.mubr.f32.gmra.mrb[0].mxu0 %v665
      %v888 = vpop.f32.mrb[0].mxu0
      %v889 = vadd.f32 %v567, %v888
      %v890 = vpop.f32.mrb[0].mxu0
      %891 = vdwg.mxu0
      %v892 = vld [vmem:[%s1 + $0x14] sm:$0xf]
      %893 = vrot.lane.b32.xlu0 %v211, 120
      %v894 = vpop.permute.xlu0 %893
      %895 = vrot.lane.b32.xlu0 %v212, 120
      %v896 = vpop.permute.xlu0 %895
      %897 = vrot.lane.b32.xlu0 %v213, 120
      %v898 = vpop.permute.xlu0 %897
      %899 = vrot.lane.b32.xlu0 %v214, 120
      %v900 = vpop.permute.xlu0 %899
      %901 = vrot.lane.b32.xlu0 %v215, 120
      %v902 = vpop.permute.xlu0 %901
      %903 = vrot.lane.b32.xlu0 %v216, 120
      %v904 = vpop.permute.xlu0 %903
      %905 = vrot.lane.b32.xlu0 %v217, 120
      %v906 = vpop.permute.xlu0 %905
      %907 = vrot.lane.b32.xlu0 %v218, 120
      %v908 = vpop.permute.xlu0 %907
      %909 = vrot.lane.b32.xlu0 %v219, 120
      %v910 = vpop.permute.xlu0 %909
      %911 = vrot.lane.b32.xlu0 %v220, 120
      %v912 = vpop.permute.xlu0 %911
      %913 = vrot.lane.b32.xlu0 %v221, 120
      %v914 = vpop.permute.xlu0 %913
      %915 = vrot.lane.b32.xlu0 %v222, 120
      %v916 = vpop.permute.xlu0 %915
      %917 = vrot.lane.b32.xlu0 %v223, 120
      %v918 = vpop.permute.xlu0 %917
      %919 = vrot.lane.b32.xlu0 %v224, 120
      %v920 = vpop.permute.xlu0 %919
      %921 = vrot.lane.b32.xlu0 %v225, 120
      %v922 = vpop.permute.xlu0 %921
      %923 = vrot.lane.b32.xlu0 %v226, 120
      %v924 = vpop.permute.xlu0 %923
      %925 = vrot.lane.b32.xlu0 %v227, 120
      %v926 = vpop.permute.xlu0 %925
      %927 = vrot.lane.b32.xlu0 %v228, 120
      %v928 = vpop.permute.xlu0 %927
      %929 = vrot.lane.b32.xlu0 %v229, 120
      %v930 = vpop.permute.xlu0 %929
      %931 = vrot.lane.b32.xlu0 %v230, 120
      %v932 = vpop.permute.xlu0 %931
      %933 = vrot.lane.b32.xlu0 %v231, 120
      %v934 = vpop.permute.xlu0 %933
      %935 = vrot.lane.b32.xlu0 %v232, 120
      %v936 = vpop.permute.xlu0 %935
      %937 = vrot.lane.b32.xlu0 %v233, 120
      %v938 = vpop.permute.xlu0 %937
      %939 = vrot.lane.b32.xlu0 %v234, 120
      %v940 = vpop.permute.xlu0 %939
      %941 = vrot.lane.b32.xlu0 %v235, 120
      %v942 = vpop.permute.xlu0 %941
      %943 = vrot.lane.b32.xlu0 %v236, 120
      %v944 = vpop.permute.xlu0 %943
      %945 = vrot.lane.b32.xlu0 %v237, 120
      %v946 = vpop.permute.xlu0 %945
      %947 = vrot.lane.b32.xlu0 %v238, 120
      %v948 = vpop.permute.xlu0 %947
      %949 = vrot.lane.b32.xlu0 %v239, 120
      %v950 = vpop.permute.xlu0 %949
      %951 = vrot.lane.b32.xlu0 %v240, 120
      %v952 = vpop.permute.xlu0 %951
      %953 = vrot.lane.b32.xlu0 %v241, 120
      %v954 = vpop.permute.xlu0 %953
      %955 = vrot.lane.b32.xlu0 %v242, 120
      %v956 = vpop.permute.xlu0 %955
      %v957 = vsel %vm244, %v894, 0
      %v959 = vsel %vm244, %v896, 0
      %v961 = vsel %vm244, %v898, 0
      %v963 = vsel %vm244, %v900, 0
      %v965 = vsel %vm244, %v902, 0
      %v967 = vsel %vm244, %v904, 0
      %v969 = vsel %vm244, %v906, 0
      %v971 = vsel %vm244, %v908, 0
      %v973 = vsel %vm244, %v910, 0
      %v975 = vsel %vm244, %v912, 0
      %v977 = vsel %vm244, %v914, 0
      %v979 = vsel %vm244, %v916, 0
      %v981 = vsel %vm244, %v918, 0
      %v983 = vsel %vm244, %v920, 0
      %v985 = vsel %vm244, %v922, 0
      %v987 = vsel %vm244, %v924, 0
      %v989 = vsel %vm244, %v926, 0
      %v991 = vsel %vm244, %v928, 0
      %v993 = vsel %vm244, %v930, 0
      %v995 = vsel %vm244, %v932, 0
      %v997 = vsel %vm244, %v934, 0
      %v999 = vsel %vm244, %v936, 0
      %v1001 = vsel %vm244, %v938, 0
      %v1003 = vsel %vm244, %v940, 0
      %v1005 = vsel %vm244, %v942, 0
      %v1007 = vsel %vm244, %v944, 0
      %v1009 = vsel %vm244, %v946, 0
      %v1011 = vsel %vm244, %v948, 0
      %v1013 = vsel %vm244, %v950, 0
      %v1015 = vsel %vm244, %v952, 0
      %v1017 = vsel %vm244, %v954, 0
      %v1019 = vsel %vm244, %v956, 0
      %v1022 = vsel %vm341, %v892, 0
      %1024 = vmatprep.subr.mxu0 0.0
      %1025 = vmatpush1.msra.mxu0 %v1022
      %1026 = vmatprep.subr.mxu0 0.0
      %1027 = vmatpush1.msra.mxu0 0.0
      %1028 = vmatprep.subr.mxu0 0.0
      %1029 = vmatpush1.msra.mxu0 0.0
      %1030 = vmatprep.subr.mxu0 0.0
      %1031 = vmatpush1.msra.mxu0 0.0
      %1032 = vmatprep.subr.mxu0 0.0
      %1033 = vmatpush1.msra.mxu0 0.0
      %1034 = vmatprep.subr.mxu0 0.0
      %1035 = vmatpush1.msra.mxu0 0.0
      %1036 = vmatprep.subr.mxu0 0.0
      %1037 = vmatpush1.msra.mxu0 0.0
      %1038 = vmatprep.subr.mxu0 0.0
      %1039 = vmatpush1.msra.mxu0 0.0
      %1040 = vmatprep.subr.mxu0 0.0
      %1041 = vmatpush1.msra.mxu0 0.0
      %1042 = vmatprep.subr.mxu0 0.0
      %1043 = vmatpush1.msra.mxu0 0.0
      %1044 = vmatprep.subr.mxu0 0.0
      %1045 = vmatpush1.msra.mxu0 0.0
      %1046 = vmatprep.subr.mxu0 0.0
      %1047 = vmatpush1.msra.mxu0 0.0
      %1048 = vmatprep.subr.mxu0 0.0
      %1049 = vmatpush1.msra.mxu0 0.0
      %1050 = vmatprep.subr.mxu0 0.0
      %1051 = vmatpush1.msra.mxu0 0.0
      %1052 = vmatprep.subr.mxu0 0.0
      %1053 = vmatpush1.msra.mxu0 0.0
      %1054 = vmatprep.subr.mxu0 0.0
      %1055 = vmatpush1.msra.mxu0 0.0
      %1056 = vmatprep.subr.mxu0 0.0
      %1057 = vmatpush1.msra.mxu0 0.0
      %1058 = vmatprep.subr.mxu0 0.0
      %1059 = vmatpush1.msra.mxu0 0.0
      %1060 = vmatprep.subr.mxu0 0.0
      %1061 = vmatpush1.msra.mxu0 0.0
      %1062 = vmatprep.subr.mxu0 0.0
      %1063 = vmatpush1.msra.mxu0 0.0
      %1064 = vmatprep.subr.mxu0 0.0
      %1065 = vmatpush1.msra.mxu0 0.0
      %1066 = vmatprep.subr.mxu0 0.0
      %1067 = vmatpush1.msra.mxu0 0.0
      %1068 = vmatprep.subr.mxu0 0.0
      %1069 = vmatpush1.msra.mxu0 0.0
      %1070 = vmatprep.subr.mxu0 0.0
      %1071 = vmatpush1.msra.mxu0 0.0
      %1072 = vmatprep.subr.mxu0 0.0
      %1073 = vmatpush1.msra.mxu0 0.0
      %1074 = vmatprep.subr.mxu0 0.0
      %1075 = vmatpush1.msra.mxu0 0.0
      %1076 = vmatprep.subr.mxu0 0.0
      %1077 = vmatpush1.msra.mxu0 0.0
      %1078 = vmatprep.subr.mxu0 0.0
      %1079 = vmatpush1.msra.mxu0 0.0
      %1080 = vmatprep.subr.mxu0 0.0
      %1081 = vmatpush1.msra.mxu0 0.0
      %1082 = vmatprep.subr.mxu0 0.0
      %1083 = vmatpush1.msra.mxu0 0.0
      %1084 = vmatprep.subr.mxu0 0.0
      %1085 = vmatpush1.msra.mxu0 0.0
      %1086 = vmatprep.subr.mxu0 0.0
      %1087 = vmatpush1.msra.mxu0 0.0
      %1088 = vmatprep.mubr.f32.mxu0 0.0
      %1089 = vmatmul.mubr.f32.gmra.mrb[0].mxu0 %v957
      %v1090 = vpop.f32.mrb[0].mxu0
      %v1091 = vadd.f32 0.0, %v1090
      %v1092 = vpop.f32.mrb[0].mxu0
      %1093 = vmatprep.mubr.f32.mxu0 0.0
      %1094 = vmatmul.mubr.f32.gmra.mrb[0].mxu0 %v959
      %v1095 = vpop.f32.mrb[0].mxu0
      %v1096 = vadd.f32 0.0, %v1095
      %v1097 = vpop.f32.mrb[0].mxu0
      %1098 = vmatprep.mubr.f32.mxu0 0.0
      %1099 = vmatmul.mubr.f32.gmra.mrb[0].mxu0 %v961
      %v1100 = vpop.f32.mrb[0].mxu0
      %v1101 = vadd.f32 0.0, %v1100
      %v1102 = vpop.f32.mrb[0].mxu0
      %1103 = vmatprep.mubr.f32.mxu0 0.0
      %1104 = vmatmul.mubr.f32.gmra.mrb[0].mxu0 %v963
      %v1105 = vpop.f32.mrb[0].mxu0
      %v1106 = vadd.f32 0.0, %v1105
      %v1107 = vpop.f32.mrb[0].mxu0
      %1108 = vmatprep.mubr.f32.mxu0 0.0
      %1109 = vmatmul.mubr.f32.gmra.mrb[0].mxu0 %v965
      %v1110 = vpop.f32.mrb[0].mxu0
      %v1111 = vadd.f32 0.0, %v1110
      %v1112 = vpop.f32.mrb[0].mxu0
      %1113 = vmatprep.mubr.f32.mxu0 0.0
      %1114 = vmatmul.mubr.f32.gmra.mrb[0].mxu0 %v967
      %v1115 = vpop.f32.mrb[0].mxu0
      %v1116 = vadd.f32 0.0, %v1115
      %v1117 = vpop.f32.mrb[0].mxu0
      %1118 = vmatprep.mubr.f32.mxu0 0.0
      %1119 = vmatmul.mubr.f32.gmra.mrb[0].mxu0 %v969
      %v1120 = vpop.f32.mrb[0].mxu0
      %v1121 = vadd.f32 0.0, %v1120
      %v1122 = vpop.f32.mrb[0].mxu0
      %1123 = vmatprep.mubr.f32.mxu0 0.0
      %1124 = vmatmul.mubr.f32.gmra.mrb[0].mxu0 %v971
      %v1125 = vpop.f32.mrb[0].mxu0
      %v1126 = vadd.f32 0.0, %v1125
      %v1127 = vpop.f32.mrb[0].mxu0
      %1128 = vmatprep.mubr.f32.mxu0 0.0
      %1129 = vmatmul.mubr.f32.gmra.mrb[0].mxu0 %v973
      %v1130 = vpop.f32.mrb[0].mxu0
      %v1131 = vadd.f32 0.0, %v1130
      %v1132 = vpop.f32.mrb[0].mxu0
      %1133 = vmatprep.mubr.f32.mxu0 0.0
      %1134 = vmatmul.mubr.f32.gmra.mrb[0].mxu0 %v975
      %v1135 = vpop.f32.mrb[0].mxu0
      %v1136 = vadd.f32 0.0, %v1135
      %v1137 = vpop.f32.mrb[0].mxu0
      %1138 = vmatprep.mubr.f32.mxu0 0.0
      %1139 = vmatmul.mubr.f32.gmra.mrb[0].mxu0 %v977
      %v1140 = vpop.f32.mrb[0].mxu0
      %v1141 = vadd.f32 0.0, %v1140
      %v1142 = vpop.f32.mrb[0].mxu0
      %1143 = vmatprep.mubr.f32.mxu0 0.0
      %1144 = vmatmul.mubr.f32.gmra.mrb[0].mxu0 %v979
      %v1145 = vpop.f32.mrb[0].mxu0
      %v1146 = vadd.f32 0.0, %v1145
      %v1147 = vpop.f32.mrb[0].mxu0
      %1148 = vmatprep.mubr.f32.mxu0 0.0
      %1149 = vmatmul.mubr.f32.gmra.mrb[0].mxu0 %v981
      %v1150 = vpop.f32.mrb[0].mxu0
      %v1151 = vadd.f32 0.0, %v1150
      %v1152 = vpop.f32.mrb[0].mxu0
      %1153 = vmatprep.mubr.f32.mxu0 0.0
      %1154 = vmatmul.mubr.f32.gmra.mrb[0].mxu0 %v983
      %v1155 = vpop.f32.mrb[0].mxu0
      %v1156 = vadd.f32 0.0, %v1155
      %v1157 = vpop.f32.mrb[0].mxu0
      %1158 = vmatprep.mubr.f32.mxu0 0.0
      %1159 = vmatmul.mubr.f32.gmra.mrb[0].mxu0 %v985
      %v1160 = vpop.f32.mrb[0].mxu0
      %v1161 = vadd.f32 0.0, %v1160
      %v1162 = vpop.f32.mrb[0].mxu0
      %1163 = vmatprep.mubr.f32.mxu0 0.0
      %1164 = vmatmul.mubr.f32.gmra.mrb[0].mxu0 %v987
      %v1165 = vpop.f32.mrb[0].mxu0
      %v1166 = vadd.f32 0.0, %v1165
      %v1167 = vpop.f32.mrb[0].mxu0
      %1168 = vmatprep.mubr.f32.mxu0 0.0
      %1169 = vmatmul.mubr.f32.gmra.mrb[0].mxu0 %v989
      %v1170 = vpop.f32.mrb[0].mxu0
      %v1171 = vadd.f32 0.0, %v1170
      %v1172 = vpop.f32.mrb[0].mxu0
      %1173 = vmatprep.mubr.f32.mxu0 0.0
      %1174 = vmatmul.mubr.f32.gmra.mrb[0].mxu0 %v991
      %v1175 = vpop.f32.mrb[0].mxu0
      %v1176 = vadd.f32 0.0, %v1175
      %v1177 = vpop.f32.mrb[0].mxu0
      %1178 = vmatprep.mubr.f32.mxu0 0.0
      %1179 = vmatmul.mubr.f32.gmra.mrb[0].mxu0 %v993
      %v1180 = vpop.f32.mrb[0].mxu0
      %v1181 = vadd.f32 0.0, %v1180
      %v1182 = vpop.f32.mrb[0].mxu0
      %1183 = vmatprep.mubr.f32.mxu0 0.0
      %1184 = vmatmul.mubr.f32.gmra.mrb[0].mxu0 %v995
      %v1185 = vpop.f32.mrb[0].mxu0
      %v1186 = vadd.f32 0.0, %v1185
      %v1187 = vpop.f32.mrb[0].mxu0
      %1188 = vmatprep.mubr.f32.mxu0 0.0
      %1189 = vmatmul.mubr.f32.gmra.mrb[0].mxu0 %v997
      %v1190 = vpop.f32.mrb[0].mxu0
      %v1191 = vadd.f32 0.0, %v1190
      %v1192 = vpop.f32.mrb[0].mxu0
      %1193 = vmatprep.mubr.f32.mxu0 0.0
      %1194 = vmatmul.mubr.f32.gmra.mrb[0].mxu0 %v999
      %v1195 = vpop.f32.mrb[0].mxu0
      %v1196 = vadd.f32 0.0, %v1195
      %v1197 = vpop.f32.mrb[0].mxu0
      %1198 = vmatprep.mubr.f32.mxu0 0.0
      %1199 = vmatmul.mubr.f32.gmra.mrb[0].mxu0 %v1001
      %v1200 = vpop.f32.mrb[0].mxu0
      %v1201 = vadd.f32 0.0, %v1200
      %v1202 = vpop.f32.mrb[0].mxu0
      %1203 = vmatprep.mubr.f32.mxu0 0.0
      %1204 = vmatmul.mubr.f32.gmra.mrb[0].mxu0 %v1003
      %v1205 = vpop.f32.mrb[0].mxu0
      %v1206 = vadd.f32 0.0, %v1205
      %v1207 = vpop.f32.mrb[0].mxu0
      %1208 = vmatprep.mubr.f32.mxu0 0.0
      %1209 = vmatmul.mubr.f32.gmra.mrb[0].mxu0 %v1005
      %v1210 = vpop.f32.mrb[0].mxu0
      %v1211 = vadd.f32 0.0, %v1210
      %v1212 = vpop.f32.mrb[0].mxu0
      %1213 = vmatprep.mubr.f32.mxu0 0.0
      %1214 = vmatmul.mubr.f32.gmra.mrb[0].mxu0 %v1007
      %v1215 = vpop.f32.mrb[0].mxu0
      %v1216 = vadd.f32 0.0, %v1215
      %v1217 = vpop.f32.mrb[0].mxu0
      %1218 = vmatprep.mubr.f32.mxu0 0.0
      %1219 = vmatmul.mubr.f32.gmra.mrb[0].mxu0 %v1009
      %v1220 = vpop.f32.mrb[0].mxu0
      %v1221 = vadd.f32 0.0, %v1220
      %v1222 = vpop.f32.mrb[0].mxu0
      %1223 = vmatprep.mubr.f32.mxu0 0.0
      %1224 = vmatmul.mubr.f32.gmra.mrb[0].mxu0 %v1011
      %v1225 = vpop.f32.mrb[0].mxu0
      %v1226 = vadd.f32 0.0, %v1225
      %v1227 = vpop.f32.mrb[0].mxu0
      %1228 = vmatprep.mubr.f32.mxu0 0.0
      %1229 = vmatmul.mubr.f32.gmra.mrb[0].mxu0 %v1013
      %v1230 = vpop.f32.mrb[0].mxu0
      %v1231 = vadd.f32 0.0, %v1230
      %v1232 = vpop.f32.mrb[0].mxu0
      %1233 = vmatprep.mubr.f32.mxu0 0.0
      %1234 = vmatmul.mubr.f32.gmra.mrb[0].mxu0 %v1015
      %v1235 = vpop.f32.mrb[0].mxu0
      %v1236 = vadd.f32 0.0, %v1235
      %v1237 = vpop.f32.mrb[0].mxu0
      %1238 = vmatprep.mubr.f32.mxu0 0.0
      %1239 = vmatmul.mubr.f32.gmra.mrb[0].mxu0 %v1017
      %v1240 = vpop.f32.mrb[0].mxu0
      %v1241 = vadd.f32 0.0, %v1240
      %v1242 = vpop.f32.mrb[0].mxu0
      %1243 = vmatprep.mubr.f32.mxu0 0.0
      %1244 = vmatmul.mubr.f32.gmra.mrb[0].mxu0 %v1019
      %v1245 = vpop.f32.mrb[0].mxu0
      %v1246 = vadd.f32 0.0, %v1245
      %v1247 = vpop.f32.mrb[0].mxu0
      %1248 = vdwg.mxu0
      %v1249 = vadd.f32 %v734, %v1091
      %v1250 = vadd.f32 %v739, %v1096
      %v1251 = vadd.f32 %v744, %v1101
      %v1252 = vadd.f32 %v749, %v1106
      %v1253 = vadd.f32 %v754, %v1111
      %v1254 = vadd.f32 %v759, %v1116
      %v1255 = vadd.f32 %v764, %v1121
      %v1256 = vadd.f32 %v769, %v1126
      %v1257 = vadd.f32 %v774, %v1131
      %v1258 = vadd.f32 %v779, %v1136
      %v1259 = vadd.f32 %v784, %v1141
      %v1260 = vadd.f32 %v789, %v1146
      %v1261 = vadd.f32 %v794, %v1151
      %v1262 = vadd.f32 %v799, %v1156
      %v1263 = vadd.f32 %v804, %v1161
      %v1264 = vadd.f32 %v809, %v1166
      %v1265 = vadd.f32 %v814, %v1171
      %v1266 = vadd.f32 %v819, %v1176
      %v1267 = vadd.f32 %v824, %v1181
      %v1268 = vadd.f32 %v829, %v1186
      %v1269 = vadd.f32 %v834, %v1191
      %v1270 = vadd.f32 %v839, %v1196
      %v1271 = vadd.f32 %v844, %v1201
      %v1272 = vadd.f32 %v849, %v1206
      %v1273 = vadd.f32 %v854, %v1211
      %v1274 = vadd.f32 %v859, %v1216
      %v1275 = vadd.f32 %v864, %v1221
      %v1276 = vadd.f32 %v869, %v1226
      %v1277 = vadd.f32 %v874, %v1231
      %v1278 = vadd.f32 %v879, %v1236
      %v1279 = vadd.f32 %v884, %v1241
      %v1280 = vadd.f32 %v889, %v1246
      %s1281 = scalar_lea.vmem %s169, 16
      %v1282 = vld [vmem:[%s1281] sm:$0xff]
      %v1283 = vld [vmem:[%s1281 + $0x10] sm:$0xff]
      %v1284 = vld [vmem:[%s1281 + $0x20] sm:$0xff]
      %v1285 = vld [vmem:[%s1281 + $0x30] sm:$0xff]
      %v1286 = vld [vmem:[%s1281 + $0x40] sm:$0xff]
      %v1287 = vld [vmem:[%s1281 + $0x50] sm:$0xff]
      %v1288 = vld [vmem:[%s1281 + $0x60] sm:$0xff]
      %v1289 = vld [vmem:[%s1281 + $0x70] sm:$0xff]
      %v1290 = vld [vmem:[%s1281 + $0x90] sm:$0xff]
      %v1291 = vld [vmem:[%s1281 + $0xa0] sm:$0xff]
      %v1292 = vld [vmem:[%s1281 + $0xb0] sm:$0xff]
      %v1293 = vld [vmem:[%s1281 + $0xc0] sm:$0xff]
      %v1294 = vld [vmem:[%s1281 + $0xd0] sm:$0xff]
      %v1295 = vld [vmem:[%s1281 + $0xe0] sm:$0xff]
      %v1296 = vld [vmem:[%s1281 + $0xf0] sm:$0xff]
      %v1297 = vld [vmem:[%s1281 + $0x100] sm:$0xff]
      %v1298 = vld [vmem:[%s1281 + $0x120] sm:$0xff]
      %v1299 = vld [vmem:[%s1281 + $0x130] sm:$0xff]
      %v1300 = vld [vmem:[%s1281 + $0x140] sm:$0xff]
      %v1301 = vld [vmem:[%s1281 + $0x150] sm:$0xff]
      %v1302 = vld [vmem:[%s1281 + $0x160] sm:$0xff]
      %v1303 = vld [vmem:[%s1281 + $0x170] sm:$0xff]
      %v1304 = vld [vmem:[%s1281 + $0x180] sm:$0xff]
      %v1305 = vld [vmem:[%s1281 + $0x190] sm:$0xff]
      %v1306 = vld [vmem:[%s1281 + $0x1b0] sm:$0xff]
      %v1307 = vld [vmem:[%s1281 + $0x1c0] sm:$0xff]
      %v1308 = vld [vmem:[%s1281 + $0x1d0] sm:$0xff]
      %v1309 = vld [vmem:[%s1281 + $0x1e0] sm:$0xff]
      %v1310 = vld [vmem:[%s1281 + $0x1f0] sm:$0xff]
      %v1311 = vld [vmem:[%s1281 + $0x200] sm:$0xff]
      %v1312 = vld [vmem:[%s1281 + $0x210] sm:$0xff]
      %v1313 = vld [vmem:[%s1281 + $0x220] sm:$0xff]
      %v1314 = vld [vmem:[%s1 + $0x18] sm:$0xff]
      %vm1315 = vcmask 64512
      %v1317 = vsel %vm1315, %v1282, 0
      %v1320 = vsel %vm1315, %v1283, 0
      %v1323 = vsel %vm1315, %v1284, 0
      %v1326 = vsel %vm1315, %v1285, 0
      %v1329 = vsel %vm1315, %v1286, 0
      %v1332 = vsel %vm1315, %v1287, 0
      %v1335 = vsel %vm1315, %v1288, 0
      %v1338 = vsel %vm1315, %v1289, 0
      %v1341 = vsel %vm1315, %v1290, 0
      %v1344 = vsel %vm1315, %v1291, 0
      %v1347 = vsel %vm1315, %v1292, 0
      %v1350 = vsel %vm1315, %v1293, 0
      %v1353 = vsel %vm1315, %v1294, 0
      %v1356 = vsel %vm1315, %v1295, 0
      %v1359 = vsel %vm1315, %v1296, 0
      %v1362 = vsel %vm1315, %v1297, 0
      %v1365 = vsel %vm1315, %v1298, 0
      %v1368 = vsel %vm1315, %v1299, 0
      %v1371 = vsel %vm1315, %v1300, 0
      %v1374 = vsel %vm1315, %v1301, 0
      %v1377 = vsel %vm1315, %v1302, 0
      %v1380 = vsel %vm1315, %v1303, 0
      %v1383 = vsel %vm1315, %v1304, 0
      %v1386 = vsel %vm1315, %v1305, 0
      %v1389 = vsel %vm1315, %v1306, 0
      %v1392 = vsel %vm1315, %v1307, 0
      %v1395 = vsel %vm1315, %v1308, 0
      %v1398 = vsel %vm1315, %v1309, 0
      %v1401 = vsel %vm1315, %v1310, 0
      %v1404 = vsel %vm1315, %v1311, 0
      %v1407 = vsel %vm1315, %v1312, 0
      %v1410 = vsel %vm1315, %v1313, 0
      %1412 = vmatprep.subr.mxu0 0.0
      %1413 = vmatpush1.msra.mxu0 %v1314
      %1414 = vmatprep.subr.mxu0 0.0
      %1415 = vmatpush1.msra.mxu0 0.0
      %1416 = vmatprep.subr.mxu0 0.0
      %1417 = vmatpush1.msra.mxu0 0.0
      %1418 = vmatprep.subr.mxu0 0.0
      %1419 = vmatpush1.msra.mxu0 0.0
      %1420 = vmatprep.subr.mxu0 0.0
      %1421 = vmatpush1.msra.mxu0 0.0
      %1422 = vmatprep.subr.mxu0 0.0
      %1423 = vmatpush1.msra.mxu0 0.0
      %1424 = vmatprep.subr.mxu0 0.0
      %1425 = vmatpush1.msra.mxu0 0.0
      %1426 = vmatprep.subr.mxu0 0.0
      %1427 = vmatpush1.msra.mxu0 0.0
      %1428 = vmatprep.subr.mxu0 0.0
      %1429 = vmatpush1.msra.mxu0 0.0
      %1430 = vmatprep.subr.mxu0 0.0
      %1431 = vmatpush1.msra.mxu0 0.0
      %1432 = vmatprep.subr.mxu0 0.0
      %1433 = vmatpush1.msra.mxu0 0.0
      %1434 = vmatprep.subr.mxu0 0.0
      %1435 = vmatpush1.msra.mxu0 0.0
      %1436 = vmatprep.subr.mxu0 0.0
      %1437 = vmatpush1.msra.mxu0 0.0
      %1438 = vmatprep.subr.mxu0 0.0
      %1439 = vmatpush1.msra.mxu0 0.0
      %1440 = vmatprep.subr.mxu0 0.0
      %1441 = vmatpush1.msra.mxu0 0.0
      %1442 = vmatprep.subr.mxu0 0.0
      %1443 = vmatpush1.msra.mxu0 0.0
      %1444 = vmatprep.subr.mxu0 0.0
      %1445 = vmatpush1.msra.mxu0 0.0
      %1446 = vmatprep.subr.mxu0 0.0
      %1447 = vmatpush1.msra.mxu0 0.0
      %1448 = vmatprep.subr.mxu0 0.0
      %1449 = vmatpush1.msra.mxu0 0.0
      %1450 = vmatprep.subr.mxu0 0.0
      %1451 = vmatpush1.msra.mxu0 0.0
      %1452 = vmatprep.subr.mxu0 0.0
      %1453 = vmatpush1.msra.mxu0 0.0
      %1454 = vmatprep.subr.mxu0 0.0
      %1455 = vmatpush1.msra.mxu0 0.0
      %1456 = vmatprep.subr.mxu0 0.0
      %1457 = vmatpush1.msra.mxu0 0.0
      %1458 = vmatprep.subr.mxu0 0.0
      %1459 = vmatpush1.msra.mxu0 0.0
      %1460 = vmatprep.subr.mxu0 0.0
      %1461 = vmatpush1.msra.mxu0 0.0
      %1462 = vmatprep.subr.mxu0 0.0
      %1463 = vmatpush1.msra.mxu0 0.0
      %1464 = vmatprep.subr.mxu0 0.0
      %1465 = vmatpush1.msra.mxu0 0.0
      %1466 = vmatprep.subr.mxu0 0.0
      %1467 = vmatpush1.msra.mxu0 0.0
      %1468 = vmatprep.subr.mxu0 0.0
      %1469 = vmatpush1.msra.mxu0 0.0
      %1470 = vmatprep.subr.mxu0 0.0
      %1471 = vmatpush1.msra.mxu0 0.0
      %1472 = vmatprep.subr.mxu0 0.0
      %1473 = vmatpush1.msra.mxu0 0.0
      %1474 = vmatprep.subr.mxu0 0.0
      %1475 = vmatpush1.msra.mxu0 0.0
      %1476 = vmatprep.mubr.f32.mxu0 0.0
      %1477 = vmatmul.mubr.f32.gmra.mrb[0].mxu0 %v1317
      %v1478 = vpop.f32.mrb[0].mxu0
      %v1479 = vadd.f32 0.0, %v1478
      %v1480 = vpop.f32.mrb[0].mxu0
      %1481 = vmatprep.mubr.f32.mxu0 0.0
      %1482 = vmatmul.mubr.f32.gmra.mrb[0].mxu0 %v1320
      %v1483 = vpop.f32.mrb[0].mxu0
      %v1484 = vadd.f32 0.0, %v1483
      %v1485 = vpop.f32.mrb[0].mxu0
      %1486 = vmatprep.mubr.f32.mxu0 0.0
      %1487 = vmatmul.mubr.f32.gmra.mrb[0].mxu0 %v1323
      %v1488 = vpop.f32.mrb[0].mxu0
      %v1489 = vadd.f32 0.0, %v1488
      %v1490 = vpop.f32.mrb[0].mxu0
      %1491 = vmatprep.mubr.f32.mxu0 0.0
      %1492 = vmatmul.mubr.f32.gmra.mrb[0].mxu0 %v1326
      %v1493 = vpop.f32.mrb[0].mxu0
      %v1494 = vadd.f32 0.0, %v1493
      %v1495 = vpop.f32.mrb[0].mxu0
      %1496 = vmatprep.mubr.f32.mxu0 0.0
      %1497 = vmatmul.mubr.f32.gmra.mrb[0].mxu0 %v1329
      %v1498 = vpop.f32.mrb[0].mxu0
      %v1499 = vadd.f32 0.0, %v1498
      %v1500 = vpop.f32.mrb[0].mxu0
      %1501 = vmatprep.mubr.f32.mxu0 0.0
      %1502 = vmatmul.mubr.f32.gmra.mrb[0].mxu0 %v1332
      %v1503 = vpop.f32.mrb[0].mxu0
      %v1504 = vadd.f32 0.0, %v1503
      %v1505 = vpop.f32.mrb[0].mxu0
      %1506 = vmatprep.mubr.f32.mxu0 0.0
      %1507 = vmatmul.mubr.f32.gmra.mrb[0].mxu0 %v1335
      %v1508 = vpop.f32.mrb[0].mxu0
      %v1509 = vadd.f32 0.0, %v1508
      %v1510 = vpop.f32.mrb[0].mxu0
      %1511 = vmatprep.mubr.f32.mxu0 0.0
      %1512 = vmatmul.mubr.f32.gmra.mrb[0].mxu0 %v1338
      %v1513 = vpop.f32.mrb[0].mxu0
      %v1514 = vadd.f32 0.0, %v1513
      %v1515 = vpop.f32.mrb[0].mxu0
      %1516 = vmatprep.mubr.f32.mxu0 0.0
      %1517 = vmatmul.mubr.f32.gmra.mrb[0].mxu0 %v1341
      %v1518 = vpop.f32.mrb[0].mxu0
      %v1519 = vadd.f32 0.0, %v1518
      %v1520 = vpop.f32.mrb[0].mxu0
      %1521 = vmatprep.mubr.f32.mxu0 0.0
      %1522 = vmatmul.mubr.f32.gmra.mrb[0].mxu0 %v1344
      %v1523 = vpop.f32.mrb[0].mxu0
      %v1524 = vadd.f32 0.0, %v1523
      %v1525 = vpop.f32.mrb[0].mxu0
      %1526 = vmatprep.mubr.f32.mxu0 0.0
      %1527 = vmatmul.mubr.f32.gmra.mrb[0].mxu0 %v1347
      %v1528 = vpop.f32.mrb[0].mxu0
      %v1529 = vadd.f32 0.0, %v1528
      %v1530 = vpop.f32.mrb[0].mxu0
      %1531 = vmatprep.mubr.f32.mxu0 0.0
      %1532 = vmatmul.mubr.f32.gmra.mrb[0].mxu0 %v1350
      %v1533 = vpop.f32.mrb[0].mxu0
      %v1534 = vadd.f32 0.0, %v1533
      %v1535 = vpop.f32.mrb[0].mxu0
      %1536 = vmatprep.mubr.f32.mxu0 0.0
      %1537 = vmatmul.mubr.f32.gmra.mrb[0].mxu0 %v1353
      %v1538 = vpop.f32.mrb[0].mxu0
      %v1539 = vadd.f32 0.0, %v1538
      %v1540 = vpop.f32.mrb[0].mxu0
      %1541 = vmatprep.mubr.f32.mxu0 0.0
      %1542 = vmatmul.mubr.f32.gmra.mrb[0].mxu0 %v1356
      %v1543 = vpop.f32.mrb[0].mxu0
      %v1544 = vadd.f32 0.0, %v1543
      %v1545 = vpop.f32.mrb[0].mxu0
      %1546 = vmatprep.mubr.f32.mxu0 0.0
      %1547 = vmatmul.mubr.f32.gmra.mrb[0].mxu0 %v1359
      %v1548 = vpop.f32.mrb[0].mxu0
      %v1549 = vadd.f32 0.0, %v1548
      %v1550 = vpop.f32.mrb[0].mxu0
      %1551 = vmatprep.mubr.f32.mxu0 0.0
      %1552 = vmatmul.mubr.f32.gmra.mrb[0].mxu0 %v1362
      %v1553 = vpop.f32.mrb[0].mxu0
      %v1554 = vadd.f32 0.0, %v1553
      %v1555 = vpop.f32.mrb[0].mxu0
      %1556 = vmatprep.mubr.f32.mxu0 0.0
      %1557 = vmatmul.mubr.f32.gmra.mrb[0].mxu0 %v1365
      %v1558 = vpop.f32.mrb[0].mxu0
      %v1559 = vadd.f32 0.0, %v1558
      %v1560 = vpop.f32.mrb[0].mxu0
      %1561 = vmatprep.mubr.f32.mxu0 0.0
      %1562 = vmatmul.mubr.f32.gmra.mrb[0].mxu0 %v1368
      %v1563 = vpop.f32.mrb[0].mxu0
      %v1564 = vadd.f32 0.0, %v1563
      %v1565 = vpop.f32.mrb[0].mxu0
      %1566 = vmatprep.mubr.f32.mxu0 0.0
      %1567 = vmatmul.mubr.f32.gmra.mrb[0].mxu0 %v1371
      %v1568 = vpop.f32.mrb[0].mxu0
      %v1569 = vadd.f32 0.0, %v1568
      %v1570 = vpop.f32.mrb[0].mxu0
      %1571 = vmatprep.mubr.f32.mxu0 0.0
      %1572 = vmatmul.mubr.f32.gmra.mrb[0].mxu0 %v1374
      %v1573 = vpop.f32.mrb[0].mxu0
      %v1574 = vadd.f32 0.0, %v1573
      %v1575 = vpop.f32.mrb[0].mxu0
      %1576 = vmatprep.mubr.f32.mxu0 0.0
      %1577 = vmatmul.mubr.f32.gmra.mrb[0].mxu0 %v1377
      %v1578 = vpop.f32.mrb[0].mxu0
      %v1579 = vadd.f32 0.0, %v1578
      %v1580 = vpop.f32.mrb[0].mxu0
      %1581 = vmatprep.mubr.f32.mxu0 0.0
      %1582 = vmatmul.mubr.f32.gmra.mrb[0].mxu0 %v1380
      %v1583 = vpop.f32.mrb[0].mxu0
      %v1584 = vadd.f32 0.0, %v1583
      %v1585 = vpop.f32.mrb[0].mxu0
      %1586 = vmatprep.mubr.f32.mxu0 0.0
      %1587 = vmatmul.mubr.f32.gmra.mrb[0].mxu0 %v1383
      %v1588 = vpop.f32.mrb[0].mxu0
      %v1589 = vadd.f32 0.0, %v1588
      %v1590 = vpop.f32.mrb[0].mxu0
      %1591 = vmatprep.mubr.f32.mxu0 0.0
      %1592 = vmatmul.mubr.f32.gmra.mrb[0].mxu0 %v1386
      %v1593 = vpop.f32.mrb[0].mxu0
      %v1594 = vadd.f32 0.0, %v1593
      %v1595 = vpop.f32.mrb[0].mxu0
      %1596 = vmatprep.mubr.f32.mxu0 0.0
      %1597 = vmatmul.mubr.f32.gmra.mrb[0].mxu0 %v1389
      %v1598 = vpop.f32.mrb[0].mxu0
      %v1599 = vadd.f32 0.0, %v1598
      %v1600 = vpop.f32.mrb[0].mxu0
      %1601 = vmatprep.mubr.f32.mxu0 0.0
      %1602 = vmatmul.mubr.f32.gmra.mrb[0].mxu0 %v1392
      %v1603 = vpop.f32.mrb[0].mxu0
      %v1604 = vadd.f32 0.0, %v1603
      %v1605 = vpop.f32.mrb[0].mxu0
      %1606 = vmatprep.mubr.f32.mxu0 0.0
      %1607 = vmatmul.mubr.f32.gmra.mrb[0].mxu0 %v1395
      %v1608 = vpop.f32.mrb[0].mxu0
      %v1609 = vadd.f32 0.0, %v1608
      %v1610 = vpop.f32.mrb[0].mxu0
      %1611 = vmatprep.mubr.f32.mxu0 0.0
      %1612 = vmatmul.mubr.f32.gmra.mrb[0].mxu0 %v1398
      %v1613 = vpop.f32.mrb[0].mxu0
      %v1614 = vadd.f32 0.0, %v1613
      %v1615 = vpop.f32.mrb[0].mxu0
      %1616 = vmatprep.mubr.f32.mxu0 0.0
      %1617 = vmatmul.mubr.f32.gmra.mrb[0].mxu0 %v1401
      %v1618 = vpop.f32.mrb[0].mxu0
      %v1619 = vadd.f32 0.0, %v1618
      %v1620 = vpop.f32.mrb[0].mxu0
      %1621 = vmatprep.mubr.f32.mxu0 0.0
      %1622 = vmatmul.mubr.f32.gmra.mrb[0].mxu0 %v1404
      %v1623 = vpop.f32.mrb[0].mxu0
      %v1624 = vadd.f32 0.0, %v1623
      %v1625 = vpop.f32.mrb[0].mxu0
      %1626 = vmatprep.mubr.f32.mxu0 0.0
      %1627 = vmatmul.mubr.f32.gmra.mrb[0].mxu0 %v1407
      %v1628 = vpop.f32.mrb[0].mxu0
      %v1629 = vadd.f32 0.0, %v1628
      %v1630 = vpop.f32.mrb[0].mxu0
      %1631 = vmatprep.mubr.f32.mxu0 0.0
      %1632 = vmatmul.mubr.f32.gmra.mrb[0].mxu0 %v1410
      %v1633 = vpop.f32.mrb[0].mxu0
      %v1634 = vadd.f32 0.0, %v1633
      %v1635 = vpop.f32.mrb[0].mxu0
      %1636 = vdwg.mxu0
      %v1637 = vadd.f32 %v1249, %v1479
      %v1638 = vadd.f32 %v1250, %v1484
      %v1639 = vadd.f32 %v1251, %v1489
      %v1640 = vadd.f32 %v1252, %v1494
      %v1641 = vadd.f32 %v1253, %v1499
      %v1642 = vadd.f32 %v1254, %v1504
      %v1643 = vadd.f32 %v1255, %v1509
      %v1644 = vadd.f32 %v1256, %v1514
      %v1645 = vadd.f32 %v1257, %v1519
      %v1646 = vadd.f32 %v1258, %v1524
      %v1647 = vadd.f32 %v1259, %v1529
      %v1648 = vadd.f32 %v1260, %v1534
      %v1649 = vadd.f32 %v1261, %v1539
      %v1650 = vadd.f32 %v1262, %v1544
      %v1651 = vadd.f32 %v1263, %v1549
      %v1652 = vadd.f32 %v1264, %v1554
      %v1653 = vadd.f32 %v1265, %v1559
      %v1654 = vadd.f32 %v1266, %v1564
      %v1655 = vadd.f32 %v1267, %v1569
      %v1656 = vadd.f32 %v1268, %v1574
      %v1657 = vadd.f32 %v1269, %v1579
      %v1658 = vadd.f32 %v1270, %v1584
      %v1659 = vadd.f32 %v1271, %v1589
      %v1660 = vadd.f32 %v1272, %v1594
      %v1661 = vadd.f32 %v1273, %v1599
      %v1662 = vadd.f32 %v1274, %v1604
      %v1663 = vadd.f32 %v1275, %v1609
      %v1664 = vadd.f32 %v1276, %v1614
      %v1665 = vadd.f32 %v1277, %v1619
      %v1666 = vadd.f32 %v1278, %v1624
      %v1667 = vadd.f32 %v1279, %v1629
      %v1668 = vadd.f32 %v1280, %v1634
      %v1669 = vld [vmem:[%s1281 + $0x1] sm:$0xff]
      %v1670 = vld [vmem:[%s1281 + $0x11] sm:$0xff]
      %v1671 = vld [vmem:[%s1281 + $0x21] sm:$0xff]
      %v1672 = vld [vmem:[%s1281 + $0x31] sm:$0xff]
      %v1673 = vld [vmem:[%s1281 + $0x41] sm:$0xff]
      %v1674 = vld [vmem:[%s1281 + $0x51] sm:$0xff]
      %v1675 = vld [vmem:[%s1281 + $0x61] sm:$0xff]
      %v1676 = vld [vmem:[%s1281 + $0x71] sm:$0xff]
      %v1677 = vld [vmem:[%s1281 + $0x91] sm:$0xff]
      %v1678 = vld [vmem:[%s1281 + $0xa1] sm:$0xff]
      %v1679 = vld [vmem:[%s1281 + $0xb1] sm:$0xff]
      %v1680 = vld [vmem:[%s1281 + $0xc1] sm:$0xff]
      %v1681 = vld [vmem:[%s1281 + $0xd1] sm:$0xff]
      %v1682 = vld [vmem:[%s1281 + $0xe1] sm:$0xff]
      %v1683 = vld [vmem:[%s1281 + $0xf1] sm:$0xff]
      %v1684 = vld [vmem:[%s1281 + $0x101] sm:$0xff]
      %v1685 = vld [vmem:[%s1281 + $0x121] sm:$0xff]
      %v1686 = vld [vmem:[%s1281 + $0x131] sm:$0xff]
      %v1687 = vld [vmem:[%s1281 + $0x141] sm:$0xff]
      %v1688 = vld [vmem:[%s1281 + $0x151] sm:$0xff]
      %v1689 = vld [vmem:[%s1281 + $0x161] sm:$0xff]
      %v1690 = vld [vmem:[%s1281 + $0x171] sm:$0xff]
      %v1691 = vld [vmem:[%s1281 + $0x181] sm:$0xff]
      %v1692 = vld [vmem:[%s1281 + $0x191] sm:$0xff]
      %v1693 = vld [vmem:[%s1281 + $0x1b1] sm:$0xff]
      %v1694 = vld [vmem:[%s1281 + $0x1c1] sm:$0xff]
      %v1695 = vld [vmem:[%s1281 + $0x1d1] sm:$0xff]
      %v1696 = vld [vmem:[%s1281 + $0x1e1] sm:$0xff]
      %v1697 = vld [vmem:[%s1281 + $0x1f1] sm:$0xff]
      %v1698 = vld [vmem:[%s1281 + $0x201] sm:$0xff]
      %v1699 = vld [vmem:[%s1281 + $0x211] sm:$0xff]
      %v1700 = vld [vmem:[%s1281 + $0x221] sm:$0xff]
      %v1701 = vld [vmem:[%s1 + $0x20] sm:$0xf]
      %v1703 = vsel %vm244, %v1669, 0
      %v1706 = vsel %vm244, %v1670, 0
      %v1709 = vsel %vm244, %v1671, 0
      %v1712 = vsel %vm244, %v1672, 0
      %v1715 = vsel %vm244, %v1673, 0
      %v1718 = vsel %vm244, %v1674, 0
      %v1721 = vsel %vm244, %v1675, 0
      %v1724 = vsel %vm244, %v1676, 0
      %v1727 = vsel %vm244, %v1677, 0
      %v1730 = vsel %vm244, %v1678, 0
      %v1733 = vsel %vm244, %v1679, 0
      %v1736 = vsel %vm244, %v1680, 0
      %v1739 = vsel %vm244, %v1681, 0
      %v1742 = vsel %vm244, %v1682, 0
      %v1745 = vsel %vm244, %v1683, 0
      %v1748 = vsel %vm244, %v1684, 0
      %v1751 = vsel %vm244, %v1685, 0
      %v1754 = vsel %vm244, %v1686, 0
      %v1757 = vsel %vm244, %v1687, 0
      %v1760 = vsel %vm244, %v1688, 0
      %v1763 = vsel %vm244, %v1689, 0
      %v1766 = vsel %vm244, %v1690, 0
      %v1769 = vsel %vm244, %v1691, 0
      %v1772 = vsel %vm244, %v1692, 0
      %v1775 = vsel %vm244, %v1693, 0
      %v1778 = vsel %vm244, %v1694, 0
      %v1781 = vsel %vm244, %v1695, 0
      %v1784 = vsel %vm244, %v1696, 0
      %v1787 = vsel %vm244, %v1697, 0
      %v1790 = vsel %vm244, %v1698, 0
      %v1793 = vsel %vm244, %v1699, 0
      %v1796 = vsel %vm244, %v1700, 0
      %v1799 = vsel %vm341, %v1701, 0
      %1801 = vmatprep.subr.mxu0 0.0
      %1802 = vmatpush1.msra.mxu0 %v1799
      %1803 = vmatprep.subr.mxu0 0.0
      %1804 = vmatpush1.msra.mxu0 0.0
      %1805 = vmatprep.subr.mxu0 0.0
      %1806 = vmatpush1.msra.mxu0 0.0
      %1807 = vmatprep.subr.mxu0 0.0
      %1808 = vmatpush1.msra.mxu0 0.0
      %1809 = vmatprep.subr.mxu0 0.0
      %1810 = vmatpush1.msra.mxu0 0.0
      %1811 = vmatprep.subr.mxu0 0.0
      %1812 = vmatpush1.msra.mxu0 0.0
      %1813 = vmatprep.subr.mxu0 0.0
      %1814 = vmatpush1.msra.mxu0 0.0
      %1815 = vmatprep.subr.mxu0 0.0
      %1816 = vmatpush1.msra.mxu0 0.0
      %1817 = vmatprep.subr.mxu0 0.0
      %1818 = vmatpush1.msra.mxu0 0.0
      %1819 = vmatprep.subr.mxu0 0.0
      %1820 = vmatpush1.msra.mxu0 0.0
      %1821 = vmatprep.subr.mxu0 0.0
      %1822 = vmatpush1.msra.mxu0 0.0
      %1823 = vmatprep.subr.mxu0 0.0
      %1824 = vmatpush1.msra.mxu0 0.0
      %1825 = vmatprep.subr.mxu0 0.0
      %1826 = vmatpush1.msra.mxu0 0.0
      %1827 = vmatprep.subr.mxu0 0.0
      %1828 = vmatpush1.msra.mxu0 0.0
      %1829 = vmatprep.subr.mxu0 0.0
      %1830 = vmatpush1.msra.mxu0 0.0
      %1831 = vmatprep.subr.mxu0 0.0
      %1832 = vmatpush1.msra.mxu0 0.0
      %1833 = vmatprep.subr.mxu0 0.0
      %1834 = vmatpush1.msra.mxu0 0.0
      %1835 = vmatprep.subr.mxu0 0.0
      %1836 = vmatpush1.msra.mxu0 0.0
      %1837 = vmatprep.subr.mxu0 0.0
      %1838 = vmatpush1.msra.mxu0 0.0
      %1839 = vmatprep.subr.mxu0 0.0
      %1840 = vmatpush1.msra.mxu0 0.0
      %1841 = vmatprep.subr.mxu0 0.0
      %1842 = vmatpush1.msra.mxu0 0.0
      %1843 = vmatprep.subr.mxu0 0.0
      %1844 = vmatpush1.msra.mxu0 0.0
      %1845 = vmatprep.subr.mxu0 0.0
      %1846 = vmatpush1.msra.mxu0 0.0
      %1847 = vmatprep.subr.mxu0 0.0
      %1848 = vmatpush1.msra.mxu0 0.0
      %1849 = vmatprep.subr.mxu0 0.0
      %1850 = vmatpush1.msra.mxu0 0.0
      %1851 = vmatprep.subr.mxu0 0.0
      %1852 = vmatpush1.msra.mxu0 0.0
      %1853 = vmatprep.subr.mxu0 0.0
      %1854 = vmatpush1.msra.mxu0 0.0
      %1855 = vmatprep.subr.mxu0 0.0
      %1856 = vmatpush1.msra.mxu0 0.0
      %1857 = vmatprep.subr.mxu0 0.0
      %1858 = vmatpush1.msra.mxu0 0.0
      %1859 = vmatprep.subr.mxu0 0.0
      %1860 = vmatpush1.msra.mxu0 0.0
      %1861 = vmatprep.subr.mxu0 0.0
      %1862 = vmatpush1.msra.mxu0 0.0
      %1863 = vmatprep.subr.mxu0 0.0
      %1864 = vmatpush1.msra.mxu0 0.0
      %1865 = vmatprep.mubr.f32.mxu0 0.0
      %1866 = vmatmul.mubr.f32.gmra.mrb[0].mxu0 %v1703
      %v1867 = vpop.f32.mrb[0].mxu0
      %v1868 = vadd.f32 0.0, %v1867
      %v1869 = vpop.f32.mrb[0].mxu0
      %1870 = vmatprep.mubr.f32.mxu0 0.0
      %1871 = vmatmul.mubr.f32.gmra.mrb[0].mxu0 %v1706
      %v1872 = vpop.f32.mrb[0].mxu0
      %v1873 = vadd.f32 0.0, %v1872
      %v1874 = vpop.f32.mrb[0].mxu0
      %1875 = vmatprep.mubr.f32.mxu0 0.0
      %1876 = vmatmul.mubr.f32.gmra.mrb[0].mxu0 %v1709
      %v1877 = vpop.f32.mrb[0].mxu0
      %v1878 = vadd.f32 0.0, %v1877
      %v1879 = vpop.f32.mrb[0].mxu0
      %1880 = vmatprep.mubr.f32.mxu0 0.0
      %1881 = vmatmul.mubr.f32.gmra.mrb[0].mxu0 %v1712
      %v1882 = vpop.f32.mrb[0].mxu0
      %v1883 = vadd.f32 0.0, %v1882
      %v1884 = vpop.f32.mrb[0].mxu0
      %1885 = vmatprep.mubr.f32.mxu0 0.0
      %1886 = vmatmul.mubr.f32.gmra.mrb[0].mxu0 %v1715
      %v1887 = vpop.f32.mrb[0].mxu0
      %v1888 = vadd.f32 0.0, %v1887
      %v1889 = vpop.f32.mrb[0].mxu0
      %1890 = vmatprep.mubr.f32.mxu0 0.0
      %1891 = vmatmul.mubr.f32.gmra.mrb[0].mxu0 %v1718
      %v1892 = vpop.f32.mrb[0].mxu0
      %v1893 = vadd.f32 0.0, %v1892
      %v1894 = vpop.f32.mrb[0].mxu0
      %1895 = vmatprep.mubr.f32.mxu0 0.0
      %1896 = vmatmul.mubr.f32.gmra.mrb[0].mxu0 %v1721
      %v1897 = vpop.f32.mrb[0].mxu0
      %v1898 = vadd.f32 0.0, %v1897
      %v1899 = vpop.f32.mrb[0].mxu0
      %1900 = vmatprep.mubr.f32.mxu0 0.0
      %1901 = vmatmul.mubr.f32.gmra.mrb[0].mxu0 %v1724
      %v1902 = vpop.f32.mrb[0].mxu0
      %v1903 = vadd.f32 0.0, %v1902
      %v1904 = vpop.f32.mrb[0].mxu0
      %1905 = vmatprep.mubr.f32.mxu0 0.0
      %1906 = vmatmul.mubr.f32.gmra.mrb[0].mxu0 %v1727
      %v1907 = vpop.f32.mrb[0].mxu0
      %v1908 = vadd.f32 0.0, %v1907
      %v1909 = vpop.f32.mrb[0].mxu0
      %1910 = vmatprep.mubr.f32.mxu0 0.0
      %1911 = vmatmul.mubr.f32.gmra.mrb[0].mxu0 %v1730
      %v1912 = vpop.f32.mrb[0].mxu0
      %v1913 = vadd.f32 0.0, %v1912
      %v1914 = vpop.f32.mrb[0].mxu0
      %1915 = vmatprep.mubr.f32.mxu0 0.0
      %1916 = vmatmul.mubr.f32.gmra.mrb[0].mxu0 %v1733
      %v1917 = vpop.f32.mrb[0].mxu0
      %v1918 = vadd.f32 0.0, %v1917
      %v1919 = vpop.f32.mrb[0].mxu0
      %1920 = vmatprep.mubr.f32.mxu0 0.0
      %1921 = vmatmul.mubr.f32.gmra.mrb[0].mxu0 %v1736
      %v1922 = vpop.f32.mrb[0].mxu0
      %v1923 = vadd.f32 0.0, %v1922
      %v1924 = vpop.f32.mrb[0].mxu0
      %1925 = vmatprep.mubr.f32.mxu0 0.0
      %1926 = vmatmul.mubr.f32.gmra.mrb[0].mxu0 %v1739
      %v1927 = vpop.f32.mrb[0].mxu0
      %v1928 = vadd.f32 0.0, %v1927
      %v1929 = vpop.f32.mrb[0].mxu0
      %1930 = vmatprep.mubr.f32.mxu0 0.0
      %1931 = vmatmul.mubr.f32.gmra.mrb[0].mxu0 %v1742
      %v1932 = vpop.f32.mrb[0].mxu0
      %v1933 = vadd.f32 0.0, %v1932
      %v1934 = vpop.f32.mrb[0].mxu0
      %1935 = vmatprep.mubr.f32.mxu0 0.0
      %1936 = vmatmul.mubr.f32.gmra.mrb[0].mxu0 %v1745
      %v1937 = vpop.f32.mrb[0].mxu0
      %v1938 = vadd.f32 0.0, %v1937
      %v1939 = vpop.f32.mrb[0].mxu0
      %1940 = vmatprep.mubr.f32.mxu0 0.0
      %1941 = vmatmul.mubr.f32.gmra.mrb[0].mxu0 %v1748
      %v1942 = vpop.f32.mrb[0].mxu0
      %v1943 = vadd.f32 0.0, %v1942
      %v1944 = vpop.f32.mrb[0].mxu0
      %1945 = vmatprep.mubr.f32.mxu0 0.0
      %1946 = vmatmul.mubr.f32.gmra.mrb[0].mxu0 %v1751
      %v1947 = vpop.f32.mrb[0].mxu0
      %v1948 = vadd.f32 0.0, %v1947
      %v1949 = vpop.f32.mrb[0].mxu0
      %1950 = vmatprep.mubr.f32.mxu0 0.0
      %1951 = vmatmul.mubr.f32.gmra.mrb[0].mxu0 %v1754
      %v1952 = vpop.f32.mrb[0].mxu0
      %v1953 = vadd.f32 0.0, %v1952
      %v1954 = vpop.f32.mrb[0].mxu0
      %1955 = vmatprep.mubr.f32.mxu0 0.0
      %1956 = vmatmul.mubr.f32.gmra.mrb[0].mxu0 %v1757
      %v1957 = vpop.f32.mrb[0].mxu0
      %v1958 = vadd.f32 0.0, %v1957
      %v1959 = vpop.f32.mrb[0].mxu0
      %1960 = vmatprep.mubr.f32.mxu0 0.0
      %1961 = vmatmul.mubr.f32.gmra.mrb[0].mxu0 %v1760
      %v1962 = vpop.f32.mrb[0].mxu0
      %v1963 = vadd.f32 0.0, %v1962
      %v1964 = vpop.f32.mrb[0].mxu0
      %1965 = vmatprep.mubr.f32.mxu0 0.0
      %1966 = vmatmul.mubr.f32.gmra.mrb[0].mxu0 %v1763
      %v1967 = vpop.f32.mrb[0].mxu0
      %v1968 = vadd.f32 0.0, %v1967
      %v1969 = vpop.f32.mrb[0].mxu0
      %1970 = vmatprep.mubr.f32.mxu0 0.0
      %1971 = vmatmul.mubr.f32.gmra.mrb[0].mxu0 %v1766
      %v1972 = vpop.f32.mrb[0].mxu0
      %v1973 = vadd.f32 0.0, %v1972
      %v1974 = vpop.f32.mrb[0].mxu0
      %1975 = vmatprep.mubr.f32.mxu0 0.0
      %1976 = vmatmul.mubr.f32.gmra.mrb[0].mxu0 %v1769
      %v1977 = vpop.f32.mrb[0].mxu0
      %v1978 = vadd.f32 0.0, %v1977
      %v1979 = vpop.f32.mrb[0].mxu0
      %1980 = vmatprep.mubr.f32.mxu0 0.0
      %1981 = vmatmul.mubr.f32.gmra.mrb[0].mxu0 %v1772
      %v1982 = vpop.f32.mrb[0].mxu0
      %v1983 = vadd.f32 0.0, %v1982
      %v1984 = vpop.f32.mrb[0].mxu0
      %1985 = vmatprep.mubr.f32.mxu0 0.0
      %1986 = vmatmul.mubr.f32.gmra.mrb[0].mxu0 %v1775
      %v1987 = vpop.f32.mrb[0].mxu0
      %v1988 = vadd.f32 0.0, %v1987
      %v1989 = vpop.f32.mrb[0].mxu0
      %1990 = vmatprep.mubr.f32.mxu0 0.0
      %1991 = vmatmul.mubr.f32.gmra.mrb[0].mxu0 %v1778
      %v1992 = vpop.f32.mrb[0].mxu0
      %v1993 = vadd.f32 0.0, %v1992
      %v1994 = vpop.f32.mrb[0].mxu0
      %1995 = vmatprep.mubr.f32.mxu0 0.0
      %1996 = vmatmul.mubr.f32.gmra.mrb[0].mxu0 %v1781
      %v1997 = vpop.f32.mrb[0].mxu0
      %v1998 = vadd.f32 0.0, %v1997
      %v1999 = vpop.f32.mrb[0].mxu0
      %2000 = vmatprep.mubr.f32.mxu0 0.0
      %2001 = vmatmul.mubr.f32.gmra.mrb[0].mxu0 %v1784
      %v2002 = vpop.f32.mrb[0].mxu0
      %v2003 = vadd.f32 0.0, %v2002
      %v2004 = vpop.f32.mrb[0].mxu0
      %2005 = vmatprep.mubr.f32.mxu0 0.0
      %2006 = vmatmul.mubr.f32.gmra.mrb[0].mxu0 %v1787
      %v2007 = vpop.f32.mrb[0].mxu0
      %v2008 = vadd.f32 0.0, %v2007
      %v2009 = vpop.f32.mrb[0].mxu0
      %2010 = vmatprep.mubr.f32.mxu0 0.0
      %2011 = vmatmul.mubr.f32.gmra.mrb[0].mxu0 %v1790
      %v2012 = vpop.f32.mrb[0].mxu0
      %v2013 = vadd.f32 0.0, %v2012
      %v2014 = vpop.f32.mrb[0].mxu0
      %2015 = vmatprep.mubr.f32.mxu0 0.0
      %2016 = vmatmul.mubr.f32.gmra.mrb[0].mxu0 %v1793
      %v2017 = vpop.f32.mrb[0].mxu0
      %v2018 = vadd.f32 0.0, %v2017
      %v2019 = vpop.f32.mrb[0].mxu0
      %2020 = vmatprep.mubr.f32.mxu0 0.0
      %2021 = vmatmul.mubr.f32.gmra.mrb[0].mxu0 %v1796
      %v2022 = vpop.f32.mrb[0].mxu0
      %v2023 = vadd.f32 0.0, %v2022
      %v2024 = vpop.f32.mrb[0].mxu0
      %2025 = vdwg.mxu0
      %v2026 = vadd.f32 %v1637, %v1868
      %v2027 = vadd.f32 %v1638, %v1873
      %v2028 = vadd.f32 %v1639, %v1878
      %v2029 = vadd.f32 %v1640, %v1883
      %v2030 = vadd.f32 %v1641, %v1888
      %v2031 = vadd.f32 %v1642, %v1893
      %v2032 = vadd.f32 %v1643, %v1898
      %v2033 = vadd.f32 %v1644, %v1903
      %v2034 = vadd.f32 %v1645, %v1908
      %v2035 = vadd.f32 %v1646, %v1913
      %v2036 = vadd.f32 %v1647, %v1918
      %v2037 = vadd.f32 %v1648, %v1923
      %v2038 = vadd.f32 %v1649, %v1928
      %v2039 = vadd.f32 %v1650, %v1933
      %v2040 = vadd.f32 %v1651, %v1938
      %v2041 = vadd.f32 %v1652, %v1943
      %v2042 = vadd.f32 %v1653, %v1948
      %v2043 = vadd.f32 %v1654, %v1953
      %v2044 = vadd.f32 %v1655, %v1958
      %v2045 = vadd.f32 %v1656, %v1963
      %v2046 = vadd.f32 %v1657, %v1968
      %v2047 = vadd.f32 %v1658, %v1973
      %v2048 = vadd.f32 %v1659, %v1978
      %v2049 = vadd.f32 %v1660, %v1983
      %v2050 = vadd.f32 %v1661, %v1988
      %v2051 = vadd.f32 %v1662, %v1993
      %v2052 = vadd.f32 %v1663, %v1998
      %v2053 = vadd.f32 %v1664, %v2003
      %v2054 = vadd.f32 %v1665, %v2008
      %v2055 = vadd.f32 %v1666, %v2013
      %v2056 = vadd.f32 %v1667, %v2018
      %v2057 = vadd.f32 %v1668, %v2023
      %v2058 = vld [vmem:[%s2] sm:$0x1]
      %v2060 = vlaneseq
      %v2061 = vshrl.u32 %v2060, 7
      %v2062 = vsub.s32 0, %v2061
      %v2063 = vrot.slane %v2058, %v2062
      %v2065 = vadd.f32 %v2026, %v2063
      %v2066 = vadd.f32 %v2027, %v2063
      %v2067 = vadd.f32 %v2028, %v2063
      %v2068 = vadd.f32 %v2029, %v2063
      %v2069 = vadd.f32 %v2030, %v2063
      %v2070 = vadd.f32 %v2031, %v2063
      %v2071 = vadd.f32 %v2032, %v2063
      %v2072 = vadd.f32 %v2033, %v2063
      %v2073 = vadd.f32 %v2034, %v2063
      %v2074 = vadd.f32 %v2035, %v2063
      %v2075 = vadd.f32 %v2036, %v2063
      %v2076 = vadd.f32 %v2037, %v2063
      %v2077 = vadd.f32 %v2038, %v2063
      %v2078 = vadd.f32 %v2039, %v2063
      %v2079 = vadd.f32 %v2040, %v2063
      %v2080 = vadd.f32 %v2041, %v2063
      %v2081 = vadd.f32 %v2042, %v2063
      %v2082 = vadd.f32 %v2043, %v2063
      %v2083 = vadd.f32 %v2044, %v2063
      %v2084 = vadd.f32 %v2045, %v2063
      %v2085 = vadd.f32 %v2046, %v2063
      %v2086 = vadd.f32 %v2047, %v2063
      %v2087 = vadd.f32 %v2048, %v2063
      %v2088 = vadd.f32 %v2049, %v2063
      %v2089 = vadd.f32 %v2050, %v2063
      %v2090 = vadd.f32 %v2051, %v2063
      %v2091 = vadd.f32 %v2052, %v2063
      %v2092 = vadd.f32 %v2053, %v2063
      %v2093 = vadd.f32 %v2054, %v2063
      %v2094 = vadd.f32 %v2055, %v2063
      %v2095 = vadd.f32 %v2056, %v2063
      %v2096 = vadd.f32 %v2057, %v2063
      %2097 = vst.msk [vmem:[%s175] sm:$0xff] %vm1315, %v2065
      %2098 = vst.msk [vmem:[%s175 + $0x8] sm:$0xff] %vm1315, %v2066
      %2099 = vst.msk [vmem:[%s175 + $0x10] sm:$0xff] %vm1315, %v2067
      %2100 = vst.msk [vmem:[%s175 + $0x18] sm:$0xff] %vm1315, %v2068
      %2101 = vst.msk [vmem:[%s175 + $0x20] sm:$0xff] %vm1315, %v2069
      %2102 = vst.msk [vmem:[%s175 + $0x28] sm:$0xff] %vm1315, %v2070
      %2103 = vst.msk [vmem:[%s175 + $0x30] sm:$0xff] %vm1315, %v2071
      %2104 = vst.msk [vmem:[%s175 + $0x38] sm:$0xff] %vm1315, %v2072
      %2105 = vst.msk [vmem:[%s175 + $0x40] sm:$0xff] %vm1315, %v2073
      %2106 = vst.msk [vmem:[%s175 + $0x48] sm:$0xff] %vm1315, %v2074
      %2107 = vst.msk [vmem:[%s175 + $0x50] sm:$0xff] %vm1315, %v2075
      %2108 = vst.msk [vmem:[%s175 + $0x58] sm:$0xff] %vm1315, %v2076
      %2109 = vst.msk [vmem:[%s175 + $0x60] sm:$0xff] %vm1315, %v2077
      %2110 = vst.msk [vmem:[%s175 + $0x68] sm:$0xff] %vm1315, %v2078
      %2111 = vst.msk [vmem:[%s175 + $0x70] sm:$0xff] %vm1315, %v2079
      %2112 = vst.msk [vmem:[%s175 + $0x78] sm:$0xff] %vm1315, %v2080
      %2113 = vst.msk [vmem:[%s175 + $0x80] sm:$0xff] %vm1315, %v2081
      %2114 = vst.msk [vmem:[%s175 + $0x88] sm:$0xff] %vm1315, %v2082
      %2115 = vst.msk [vmem:[%s175 + $0x90] sm:$0xff] %vm1315, %v2083
      %2116 = vst.msk [vmem:[%s175 + $0x98] sm:$0xff] %vm1315, %v2084
      %2117 = vst.msk [vmem:[%s175 + $0xa0] sm:$0xff] %vm1315, %v2085
      %2118 = vst.msk [vmem:[%s175 + $0xa8] sm:$0xff] %vm1315, %v2086
      %2119 = vst.msk [vmem:[%s175 + $0xb0] sm:$0xff] %vm1315, %v2087
      %2120 = vst.msk [vmem:[%s175 + $0xb8] sm:$0xff] %vm1315, %v2088
      %2121 = vst.msk [vmem:[%s175 + $0xc0] sm:$0xff] %vm1315, %v2089
      %2122 = vst.msk [vmem:[%s175 + $0xc8] sm:$0xff] %vm1315, %v2090
      %2123 = vst.msk [vmem:[%s175 + $0xd0] sm:$0xff] %vm1315, %v2091
      %2124 = vst.msk [vmem:[%s175 + $0xd8] sm:$0xff] %vm1315, %v2092
      %2125 = vst.msk [vmem:[%s175 + $0xe0] sm:$0xff] %vm1315, %v2093
      %2126 = vst.msk [vmem:[%s175 + $0xe8] sm:$0xff] %vm1315, %v2094
      %2127 = vst.msk [vmem:[%s175 + $0xf0] sm:$0xff] %vm1315, %v2095
      %2128 = vst.msk [vmem:[%s175 + $0xf8] sm:$0xff] %vm1315, %v2096
      %s2129 = smul.u32 32, %s14
      %p2130 = scmp.lt.s32.totalorder %s2129, 63
      %s2131 = scalar_select %p2130, %s2129, 63
      %s2132 = smul.addr %s2131, 8
      %s2133 = scalar_lea.vmem %s3, %s2132
      // Predicated region
      $region33: #{tpu_custom_call.1} parent=31 // pred_check
        %p2134 = pneg %p100
      $region34: #{tpu_custom_call.1} parent=31 // pred_check_branch
        %2136 = sbr.rel (%p2134) target = $region36
      $region35: #{tpu_custom_call.1} parent=31 // pred_region
        %s2137 = smul.u32 32, %s14
      $region36: #{tpu_custom_call.1} parent=31 // pred_fallthru
        _
    $region32: #{tpu_custom_call.1} parent=5 // pred_fallthru
      _
    %p2138 = scmp.le.s32.totalorder 2, %s9
    // Predicated region
    $region37: #{tpu_custom_call.1} parent=5 // pred_check
      %p2139 = pneg %p2138
    $region38: #{tpu_custom_call.1} parent=5 // pred_check_branch
      %2141 = sbr.rel (%p2139) target = $region40
    $region39: #{tpu_custom_call.1} parent=5 // pred_region
      %s2142 = ssub.s32 %s9, 2
      // Predicated region
      $region41: #{tpu_custom_call.1} parent=39 // pred_check
        %p2143 = pneg %p106
      $region42: #{tpu_custom_call.1} parent=39 // pred_check_branch
        %2145 = sbr.rel (%p2143) target = $region44
      $region43: #{tpu_custom_call.1} parent=39 // pred_region
        %s2146 = smul.u32 32, %s15
        %p2147 = scmp.lt.s32.totalorder %s2146, 63
        %s2148 = scalar_select %p2147, %s2146, 63
        %s2149 = smul.addr %s2148, 8
        %s2150 = scalar_lea.vmem %s3, %s2149
      $region44: #{tpu_custom_call.1} parent=39 // pred_fallthru
        _
    $region40: #{tpu_custom_call.1} parent=5 // pred_fallthru
      _
  $region6: #{tpu_custom_call.1} parent=0 // loop_footer
    %s13 = sadd.s32 1, %s9
  $region7: #{tpu_custom_call.1} parent=0 // loop_footer_branch
    %8 = sbr.rel target = $region3
  $region8: #{tpu_custom_call.1} parent=0 // loop_exit
    _

</llo_original>
